<compile_context>
chip_gen: v7x
topology: tpu7x:2x2x1
jax: 0.10.0
libtpu: 0.0.40
codegen_flags: <defaults>
</compile_context>

<pallas_src>
import functools
import math

import jax
import jax.numpy as jnp
import numpy as np
from jax.experimental import pallas as pl
from jax.experimental.pallas import tpu as pltpu


# -----------------------------------------------------------------------------
# Synthetic parameters (Linear weights stored as (in, out); biases/LN as (1, d))
# -----------------------------------------------------------------------------
def init_params(key, hidden, ffn_hidden):
    ks = jax.random.split(key, 16)

    def w(k, fan_in, fan_out):
        return (0.02 * jax.random.normal(k, (fan_in, fan_out))).astype(jnp.float32)

    def b(dim):
        return jnp.zeros((1, dim), jnp.float32)

    p = {}
    p["wq1"], p["bq1"] = w(ks[0], hidden, hidden), b(hidden)
    p["wk1"], p["bk1"] = w(ks[1], hidden, hidden), b(hidden)
    p["wv1"], p["bv1"] = w(ks[2], hidden, hidden), b(hidden)
    p["wo1"], p["bo1"] = w(ks[3], hidden, hidden), b(hidden)
    p["g1"], p["be1"] = jnp.ones((1, hidden), jnp.float32), jnp.zeros((1, hidden), jnp.float32)
    p["wq2"], p["bq2"] = w(ks[4], hidden, hidden), b(hidden)
    p["wk2"], p["bk2"] = w(ks[5], hidden, hidden), b(hidden)
    p["wv2"], p["bv2"] = w(ks[6], hidden, hidden), b(hidden)
    p["wo2"], p["bo2"] = w(ks[7], hidden, hidden), b(hidden)
    p["g2"], p["be2"] = jnp.ones((1, hidden), jnp.float32), jnp.zeros((1, hidden), jnp.float32)
    p["w_f1"], p["b_f1"] = w(ks[8], hidden, ffn_hidden), b(ffn_hidden)
    p["w_f2"], p["b_f2"] = w(ks[9], ffn_hidden, hidden), b(hidden)
    p["g3"], p["be3"] = jnp.ones((1, hidden), jnp.float32), jnp.zeros((1, hidden), jnp.float32)
    return p


# -----------------------------------------------------------------------------
# Pallas kernel: one decoder block for ONE batch element (grid=(B,), "parallel")
# -----------------------------------------------------------------------------
def _decoder_block_kernel(x_ref, enc_ref,
                          wq1, bq1, wkv1, bkv1, wo1, bo1, g1, be1,
                          wq2, bq2, wkv2, bkv2, wo2, bo2, g2, be2,
                          w_f1, b_f1, w_f2, b_f2, g3, be3,
                          out_ref, *, num_head, head_dim):
    f32 = jnp.float32
    bf16 = jnp.bfloat16

    x = x_ref[...]        # (T, H) f32 -- this batch element
    enc = enc_ref[...]    # (S, H) f32
    hidden = x.shape[-1]

    def layer_norm(z, g_r, b_r):
        mu = jnp.mean(z, axis=-1, keepdims=True)
        var = jnp.mean((z - mu) ** 2, axis=-1, keepdims=True)
        return (z - mu) * jax.lax.rsqrt(var + 1e-5) * g_r[...] + b_r[...]

    def mha(q_in, kv_in, wq, bq, wkv, bkv, wo, bo):
        # Full-width 2D projections (bf16 operands, f32 accumulation).
        # wq: (H, H) with 1/sqrt(hd) pre-folded; wkv: (H, 2H) fused K|V.
        q = jnp.dot(q_in.astype(bf16), wq[...],
                    preferred_element_type=f32) + bq[...]            # (Tq, H)
        kv = jnp.dot(kv_in.astype(bf16), wkv[...],
                     preferred_element_type=f32) + bkv[...]          # (Tk, 2H)
        k = kv[:, :hidden]
        v = kv[:, hidden:]

        q16 = q.astype(bf16)
        k16 = k.astype(bf16)
        v16 = v.astype(bf16)

        # Per-head attention: heads are static lane-block slices of the
        # full-width projections (no activation broadcast, no relayout).
        outs = []
        for h in range(num_head):
            sl = slice(h * head_dim, (h + 1) * head_dim)
            qh, kh, vh = q16[:, sl], k16[:, sl], v16[:, sl]
            # scores = qh @ kh^T (NT dot_general, no explicit transpose op)
            s = jax.lax.dot_general(qh, kh, (((1,), (1,)), ((), ())),
                                    preferred_element_type=f32)      # (Tq, Tk)
            m = jnp.max(s, axis=-1, keepdims=True)
            e = jnp.exp(s - m)
            p = e * pl.reciprocal(jnp.sum(e, axis=-1, keepdims=True), approx=True)
            outs.append(jnp.dot(p.astype(bf16), vh,
                                preferred_element_type=f32))          # (Tq, hd)

        # Head merge = lane concat -> single full-width output projection.
        o = jnp.concatenate(outs, axis=-1)                            # (Tq, H)
        return jnp.dot(o.astype(bf16), wo[...],
                       preferred_element_type=f32) + bo[...]          # (Tq, H)

    # 1) self-attention (key_value == x on the first decode step) + AddNorm
    x1 = mha(x, x, wq1, bq1, wkv1, bkv1, wo1, bo1)
    y = layer_norm(x1 + x, g1, be1)

    # 2) cross-attention with encoder output + AddNorm
    x2 = mha(y, enc, wq2, bq2, wkv2, bkv2, wo2, bo2)
    y1 = layer_norm(x2 + y, g2, be2)

    # 3) position-wise FFN (Linear -> ReLU -> Linear) + AddNorm
    h1 = jnp.maximum(
        jnp.dot(y1.astype(bf16), w_f1[...], preferred_element_type=f32) + b_f1[...], 0.0)
    x3 = jnp.dot(h1.astype(bf16), w_f2[...], preferred_element_type=f32) + b_f2[...]
    y2 = layer_norm(x3 + y1, g3, be3)

    out_ref[...] = y2        # lane-dense (T, H) store for this batch element


def transformer_decoder_block(x, encoder_output, params, num_head):
    """Pallas-fused eval-mode forward of TransformerDecoderBlock (first step)."""
    B, T, H = x.shape
    S = encoder_output.shape[1]
    nh = num_head
    hd = H // nh
    scale = 1.0 / math.sqrt(hd)
    bf16 = jnp.bfloat16

    p = params

    # Wrapper-side (free XLA) weight prep: fold the attention scale into the Q
    # projection, fuse K|V into one (H, 2H) matmul, cast matmul weights to bf16.
    def prep_attn(wq, bq, wk, bk, wv, bv, wo):
        wq_s = (wq * scale).astype(bf16)
        bq_s = bq * scale
        wkv = jnp.concatenate([wk, wv], axis=1).astype(bf16)      # (H, 2H)
        bkv = jnp.concatenate([bk, bv], axis=1)                   # (1, 2H) f32
        return wq_s, bq_s, wkv, bkv, wo.astype(bf16)

    wq1, bq1, wkv1, bkv1, wo1 = prep_attn(p["wq1"], p["bq1"], p["wk1"], p["bk1"],
                                          p["wv1"], p["bv1"], p["wo1"])
    wq2, bq2, wkv2, bkv2, wo2 = prep_attn(p["wq2"], p["bq2"], p["wk2"], p["bk2"],
                                          p["wv2"], p["bv2"], p["wo2"])

    param_list = [
        wq1, bq1, wkv1, bkv1, wo1, p["bo1"], p["g1"], p["be1"],
        wq2, bq2, wkv2, bkv2, wo2, p["bo2"], p["g2"], p["be2"],
        p["w_f1"].astype(bf16), p["b_f1"], p["w_f2"].astype(bf16), p["b_f2"],
        p["g3"], p["be3"],
    ]

    def full_spec(a):
        n = a.ndim
        return pl.BlockSpec(a.shape, lambda b, n=n: (0,) * n)

    in_specs = [
        pl.BlockSpec((None, T, H), lambda b: (b, 0, 0)),   # x: one batch element
        pl.BlockSpec((None, S, H), lambda b: (b, 0, 0)),   # encoder output
    ] + [full_spec(a) for a in param_list]                 # weights: resident

    kernel = functools.partial(_decoder_block_kernel, num_head=nh, head_dim=hd)

    y2 = pl.pallas_call(
        kernel,
        out_shape=jax.ShapeDtypeStruct((B, T, H), jnp.float32),
        grid=(B,),
        in_specs=in_specs,
        out_specs=pl.BlockSpec((None, T, H), lambda b: (b, 0, 0)),
        compiler_params=pltpu.CompilerParams(
            # Batch axis is independent -> shard across TCs on v7x megacore.
            dimension_semantics=("parallel",),
            # Toy sizes; safe on every generation.  Re-derive at production
            # shapes (v5e/v6e: raise toward ~96-112 MiB; v7x: cap ~48-56 MiB).
            vmem_limit_bytes=32 * 1024 * 1024,
        ),
    )(x, encoder_output, *param_list)

    # state update: state[2][i] becomes key_value (== x on the first step)
    new_state = (encoder_output, None, [x])
    return y2, new_state


# -----------------------------------------------------------------------------
# Pure-JAX f32 reference (same math) for a correctness check
# -----------------------------------------------------------------------------
def _reference(x, enc, p, num_head):
    def linear(z, w, b):
        return z @ w + b

    def layer_norm(z, g, b):
        mu = z.mean(-1, keepdims=True)
        var = ((z - mu) ** 2).mean(-1, keepdims=True)
        return (z - mu) / jnp.sqrt(var + 1e-5) * g + b

    def mha(q_in, kv_in, wq, bq, wk, bk, wv, bv, wo, bo):
        B, Tq, H = q_in.shape
        Tk = kv_in.shape[1]
        hd = H // num_head
        q = linear(q_in, wq, bq).reshape(B, Tq, num_head, hd).transpose(0, 2, 1, 3)
        k = linear(kv_in, wk, bk).reshape(B, Tk, num_head, hd).transpose(0, 2, 1, 3)
        v = linear(kv_in, wv, bv).reshape(B, Tk, num_head, hd).transpose(0, 2, 1, 3)
        s = jnp.einsum("bhqd,bhkd->bhqk", q, k) / math.sqrt(hd)
        a = jax.nn.softmax(s, axis=-1)
        o = jnp.einsum("bhqk,bhkd->bhqd", a, v).transpose(0, 2, 1, 3).reshape(B, Tq, H)
        return linear(o, wo, bo)

    x1 = mha(x, x, p["wq1"], p["bq1"], p["wk1"], p["bk1"], p["wv1"], p["bv1"], p["wo1"], p["bo1"])
    y = layer_norm(x1 + x, p["g1"], p["be1"])
    x2 = mha(y, enc, p["wq2"], p["bq2"], p["wk2"], p["bk2"], p["wv2"], p["bv2"], p["wo2"], p["bo2"])
    y1 = layer_norm(x2 + y, p["g2"], p["be2"])
    x3 = linear(jnp.maximum(linear(y1, p["w_f1"], p["b_f1"]), 0.0), p["w_f2"], p["b_f2"])
    return layer_norm(x3 + y1, p["g3"], p["be3"])


if __name__ == "__main__":
    hidden_size = 32
    ffn_hidden_size = 64
    num_head = 4
    B, T, S = 2, 8, 10

    key = jax.random.PRNGKey(0)
    k_x, k_enc, k_p = jax.random.split(key, 3)
    x = jax.random.normal(k_x, (B, T, hidden_size), dtype=jnp.float32)
    encoder_output = jax.random.normal(k_enc, (B, S, hidden_size), dtype=jnp.float32)
    params = init_params(k_p, hidden_size, ffn_hidden_size)

    y2, new_state = transformer_decoder_block(x, encoder_output, params, num_head)
    y2 = jax.block_until_ready(y2)

    ref = _reference(x, encoder_output, params, num_head)
    # Tolerance accounts for bf16 matmul inputs (f32 accumulation) and the EUP
    # approximate reciprocal in the softmax; structural errors would be O(0.1-1).
    np.testing.assert_allclose(np.asarray(y2), np.asarray(ref), rtol=2e-2, atol=2e-2)

    print("KERNEL_OK")
</pallas_src>

<mosaic_0001>
module attributes {stable_mosaic.version = 11 : i64} {
  func.func @_decoder_block_kernel(%arg0: i32, %arg1: memref<1x8x32xf32, #tpu.memory_space<vmem>>, %arg2: memref<1x10x32xf32, #tpu.memory_space<vmem>>, %arg3: memref<32x32xbf16, #tpu.memory_space<vmem>>, %arg4: memref<1x32xf32, #tpu.memory_space<vmem>>, %arg5: memref<32x64xbf16, #tpu.memory_space<vmem>>, %arg6: memref<1x64xf32, #tpu.memory_space<vmem>>, %arg7: memref<32x32xbf16, #tpu.memory_space<vmem>>, %arg8: memref<1x32xf32, #tpu.memory_space<vmem>>, %arg9: memref<1x32xf32, #tpu.memory_space<vmem>>, %arg10: memref<1x32xf32, #tpu.memory_space<vmem>>, %arg11: memref<32x32xbf16, #tpu.memory_space<vmem>>, %arg12: memref<1x32xf32, #tpu.memory_space<vmem>>, %arg13: memref<32x64xbf16, #tpu.memory_space<vmem>>, %arg14: memref<1x64xf32, #tpu.memory_space<vmem>>, %arg15: memref<32x32xbf16, #tpu.memory_space<vmem>>, %arg16: memref<1x32xf32, #tpu.memory_space<vmem>>, %arg17: memref<1x32xf32, #tpu.memory_space<vmem>>, %arg18: memref<1x32xf32, #tpu.memory_space<vmem>>, %arg19: memref<32x64xbf16, #tpu.memory_space<vmem>>, %arg20: memref<1x64xf32, #tpu.memory_space<vmem>>, %arg21: memref<64x32xbf16, #tpu.memory_space<vmem>>, %arg22: memref<1x32xf32, #tpu.memory_space<vmem>>, %arg23: memref<1x32xf32, #tpu.memory_space<vmem>>, %arg24: memref<1x32xf32, #tpu.memory_space<vmem>>, %arg25: memref<1x8x32xf32, #tpu.memory_space<vmem>>) attributes {dimension_semantics = [#tpu.dimension_semantics<parallel>], iteration_bounds = array<i64: 2>, scalar_prefetch = 0 : i64, scratch_operands = 0 : i64, tpu.core_type = #tpu.core_type<tc>, window_params = [{transform_indices = @transform_0, window_bounds = array<i64: 1, 8, 32>}, {transform_indices = @transform_1, window_bounds = array<i64: 1, 10, 32>}, {pipeline_mode = #tpu.pipeline_mode<synchronous>, transform_indices = @transform_2, window_bounds = array<i64: 32, 32>}, {pipeline_mode = #tpu.pipeline_mode<synchronous>, transform_indices = @transform_3, window_bounds = array<i64: 1, 32>}, {pipeline_mode = #tpu.pipeline_mode<synchronous>, transform_indices = @transform_4, window_bounds = array<i64: 32, 64>}, {pipeline_mode = #tpu.pipeline_mode<synchronous>, transform_indices = @transform_5, window_bounds = array<i64: 1, 64>}, {pipeline_mode = #tpu.pipeline_mode<synchronous>, transform_indices = @transform_6, window_bounds = array<i64: 32, 32>}, {pipeline_mode = #tpu.pipeline_mode<synchronous>, transform_indices = @transform_7, window_bounds = array<i64: 1, 32>}, {pipeline_mode = #tpu.pipeline_mode<synchronous>, transform_indices = @transform_8, window_bounds = array<i64: 1, 32>}, {pipeline_mode = #tpu.pipeline_mode<synchronous>, transform_indices = @transform_9, window_bounds = array<i64: 1, 32>}, {pipeline_mode = #tpu.pipeline_mode<synchronous>, transform_indices = @transform_10, window_bounds = array<i64: 32, 32>}, {pipeline_mode = #tpu.pipeline_mode<synchronous>, transform_indices = @transform_11, window_bounds = array<i64: 1, 32>}, {pipeline_mode = #tpu.pipeline_mode<synchronous>, transform_indices = @transform_12, window_bounds = array<i64: 32, 64>}, {pipeline_mode = #tpu.pipeline_mode<synchronous>, transform_indices = @transform_13, window_bounds = array<i64: 1, 64>}, {pipeline_mode = #tpu.pipeline_mode<synchronous>, transform_indices = @transform_14, window_bounds = array<i64: 32, 32>}, {pipeline_mode = #tpu.pipeline_mode<synchronous>, transform_indices = @transform_15, window_bounds = array<i64: 1, 32>}, {pipeline_mode = #tpu.pipeline_mode<synchronous>, transform_indices = @transform_16, window_bounds = array<i64: 1, 32>}, {pipeline_mode = #tpu.pipeline_mode<synchronous>, transform_indices = @transform_17, window_bounds = array<i64: 1, 32>}, {pipeline_mode = #tpu.pipeline_mode<synchronous>, transform_indices = @transform_18, window_bounds = array<i64: 32, 64>}, {pipeline_mode = #tpu.pipeline_mode<synchronous>, transform_indices = @transform_19, window_bounds = array<i64: 1, 64>}, {pipeline_mode = #tpu.pipeline_mode<synchronous>, transform_indices = @transform_20, window_bounds = array<i64: 64, 32>}, {pipeline_mode = #tpu.pipeline_mode<synchronous>, transform_indices = @transform_21, window_bounds = array<i64: 1, 32>}, {pipeline_mode = #tpu.pipeline_mode<synchronous>, transform_indices = @transform_22, window_bounds = array<i64: 1, 32>}, {pipeline_mode = #tpu.pipeline_mode<synchronous>, transform_indices = @transform_23, window_bounds = array<i64: 1, 32>}, {transform_indices = @transform_24, window_bounds = array<i64: 1, 8, 32>}]} {
    %c0 = arith.constant 0 : index
    %c0_0 = arith.constant 0 : index
    %c0_1 = arith.constant 0 : index
    %0 = vector.load %arg1[%c0, %c0_0, %c0_1] : memref<1x8x32xf32, #tpu.memory_space<vmem>>, vector<1x8x32xf32>
    %1 = vector.shape_cast %0 : vector<1x8x32xf32> to vector<8x32xf32>
    %c0_2 = arith.constant 0 : index
    %c0_3 = arith.constant 0 : index
    %c0_4 = arith.constant 0 : index
    %2 = vector.load %arg2[%c0_2, %c0_3, %c0_4] : memref<1x10x32xf32, #tpu.memory_space<vmem>>, vector<1x10x32xf32>
    %3 = vector.shape_cast %2 : vector<1x10x32xf32> to vector<10x32xf32>
    %4 = arith.truncf %1 : vector<8x32xf32> to vector<8x32xbf16>
    %c0_5 = arith.constant 0 : index
    %c0_6 = arith.constant 0 : index
    %5 = vector.load %arg3[%c0_5, %c0_6] : memref<32x32xbf16, #tpu.memory_space<vmem>>, vector<32x32xbf16>
    %cst = arith.constant dense<0.000000e+00> : vector<8x32xf32>
    %6 = tpu.matmul %4, %5, %cst {dimension_numbers = #tpu.dot_dimension_numbers<[1], [0], [0], [1], [0, 0, 1, 1], [], []>} : vector<8x32xbf16>, vector<32x32xbf16>, vector<8x32xf32> -> vector<8x32xf32>
    %c0_7 = arith.constant 0 : index
    %c0_8 = arith.constant 0 : index
    %7 = vector.load %arg4[%c0_7, %c0_8] : memref<1x32xf32, #tpu.memory_space<vmem>>, vector<1x32xf32>
    %8 = vector.broadcast %7 : vector<1x32xf32> to vector<8x32xf32>
    %9 = arith.addf %6, %8 : vector<8x32xf32>
    %10 = arith.truncf %1 : vector<8x32xf32> to vector<8x32xbf16>
    %c0_9 = arith.constant 0 : index
    %c0_10 = arith.constant 0 : index
    %11 = vector.load %arg5[%c0_9, %c0_10] : memref<32x64xbf16, #tpu.memory_space<vmem>>, vector<32x64xbf16>
    %cst_11 = arith.constant dense<0.000000e+00> : vector<8x64xf32>
    %12 = tpu.matmul %10, %11, %cst_11 {dimension_numbers = #tpu.dot_dimension_numbers<[1], [0], [0], [1], [0, 0, 1, 1], [], []>} : vector<8x32xbf16>, vector<32x64xbf16>, vector<8x64xf32> -> vector<8x64xf32>
    %c0_12 = arith.constant 0 : index
    %c0_13 = arith.constant 0 : index
    %13 = vector.load %arg6[%c0_12, %c0_13] : memref<1x64xf32, #tpu.memory_space<vmem>>, vector<1x64xf32>
    %14 = vector.broadcast %13 : vector<1x64xf32> to vector<8x64xf32>
    %15 = arith.addf %12, %14 : vector<8x64xf32>
    %16 = vector.extract_strided_slice %15 {offsets = [0, 0], sizes = [8, 32], strides = [1, 1]} : vector<8x64xf32> to vector<8x32xf32>
    %17 = vector.extract_strided_slice %15 {offsets = [0, 32], sizes = [8, 32], strides = [1, 1]} : vector<8x64xf32> to vector<8x32xf32>
    %18 = arith.truncf %9 : vector<8x32xf32> to vector<8x32xbf16>
    %19 = arith.truncf %16 : vector<8x32xf32> to vector<8x32xbf16>
    %20 = arith.truncf %17 : vector<8x32xf32> to vector<8x32xbf16>
    %21 = vector.extract_strided_slice %18 {offsets = [0, 0], sizes = [8, 8], strides = [1, 1]} : vector<8x32xbf16> to vector<8x8xbf16>
    %22 = vector.extract_strided_slice %19 {offsets = [0, 0], sizes = [8, 8], strides = [1, 1]} : vector<8x32xbf16> to vector<8x8xbf16>
    %23 = vector.extract_strided_slice %20 {offsets = [0, 0], sizes = [8, 8], strides = [1, 1]} : vector<8x32xbf16> to vector<8x8xbf16>
    %cst_14 = arith.constant dense<0.000000e+00> : vector<8x8xf32>
    %24 = tpu.matmul %21, %22, %cst_14 {dimension_numbers = #tpu.dot_dimension_numbers<[1], [1], [0], [0], [0, 0, 1, 0], [], []>} : vector<8x8xbf16>, vector<8x8xbf16>, vector<8x8xf32> -> vector<8x8xf32>
    %cst_15 = arith.constant dense<0xFF800000> : vector<8xf32>
    %25 = vector.multi_reduction <maximumf>, %24, %cst_15 [1] : vector<8x8xf32> to vector<8xf32>
    %26 = vector.shape_cast %25 : vector<8xf32> to vector<8x1xf32>
    %27 = vector.broadcast %26 : vector<8x1xf32> to vector<8x8xf32>
    %28 = arith.subf %24, %27 : vector<8x8xf32>
    %29 = math.exp %28 : vector<8x8xf32>
    %cst_16 = arith.constant dense<0.000000e+00> : vector<8xf32>
    %30 = vector.multi_reduction <add>, %29, %cst_16 [1] : vector<8x8xf32> to vector<8xf32>
    %31 = vector.shape_cast %30 : vector<8xf32> to vector<8x1xf32>
    %32 = tpu.reciprocal %31 {approx = true} : vector<8x1xf32> -> vector<8x1xf32>
    %33 = vector.broadcast %32 : vector<8x1xf32> to vector<8x8xf32>
    %34 = arith.mulf %29, %33 : vector<8x8xf32>
    %35 = arith.truncf %34 : vector<8x8xf32> to vector<8x8xbf16>
    %cst_17 = arith.constant dense<0.000000e+00> : vector<8x8xf32>
    %36 = tpu.matmul %35, %23, %cst_17 {dimension_numbers = #tpu.dot_dimension_numbers<[1], [0], [0], [1], [0, 0, 1, 1], [], []>} : vector<8x8xbf16>, vector<8x8xbf16>, vector<8x8xf32> -> vector<8x8xf32>
    %37 = vector.extract_strided_slice %18 {offsets = [0, 8], sizes = [8, 8], strides = [1, 1]} : vector<8x32xbf16> to vector<8x8xbf16>
    %38 = vector.extract_strided_slice %19 {offsets = [0, 8], sizes = [8, 8], strides = [1, 1]} : vector<8x32xbf16> to vector<8x8xbf16>
    %39 = vector.extract_strided_slice %20 {offsets = [0, 8], sizes = [8, 8], strides = [1, 1]} : vector<8x32xbf16> to vector<8x8xbf16>
    %cst_18 = arith.constant dense<0.000000e+00> : vector<8x8xf32>
    %40 = tpu.matmul %37, %38, %cst_18 {dimension_numbers = #tpu.dot_dimension_numbers<[1], [1], [0], [0], [0, 0, 1, 0], [], []>} : vector<8x8xbf16>, vector<8x8xbf16>, vector<8x8xf32> -> vector<8x8xf32>
    %cst_19 = arith.constant dense<0xFF800000> : vector<8xf32>
    %41 = vector.multi_reduction <maximumf>, %40, %cst_19 [1] : vector<8x8xf32> to vector<8xf32>
    %42 = vector.shape_cast %41 : vector<8xf32> to vector<8x1xf32>
    %43 = vector.broadcast %42 : vector<8x1xf32> to vector<8x8xf32>
    %44 = arith.subf %40, %43 : vector<8x8xf32>
    %45 = math.exp %44 : vector<8x8xf32>
    %cst_20 = arith.constant dense<0.000000e+00> : vector<8xf32>
    %46 = vector.multi_reduction <add>, %45, %cst_20 [1] : vector<8x8xf32> to vector<8xf32>
    %47 = vector.shape_cast %46 : vector<8xf32> to vector<8x1xf32>
    %48 = tpu.reciprocal %47 {approx = true} : vector<8x1xf32> -> vector<8x1xf32>
    %49 = vector.broadcast %48 : vector<8x1xf32> to vector<8x8xf32>
    %50 = arith.mulf %45, %49 : vector<8x8xf32>
    %51 = arith.truncf %50 : vector<8x8xf32> to vector<8x8xbf16>
    %cst_21 = arith.constant dense<0.000000e+00> : vector<8x8xf32>
    %52 = tpu.matmul %51, %39, %cst_21 {dimension_numbers = #tpu.dot_dimension_numbers<[1], [0], [0], [1], [0, 0, 1, 1], [], []>} : vector<8x8xbf16>, vector<8x8xbf16>, vector<8x8xf32> -> vector<8x8xf32>
    %53 = vector.extract_strided_slice %18 {offsets = [0, 16], sizes = [8, 8], strides = [1, 1]} : vector<8x32xbf16> to vector<8x8xbf16>
    %54 = vector.extract_strided_slice %19 {offsets = [0, 16], sizes = [8, 8], strides = [1, 1]} : vector<8x32xbf16> to vector<8x8xbf16>
    %55 = vector.extract_strided_slice %20 {offsets = [0, 16], sizes = [8, 8], strides = [1, 1]} : vector<8x32xbf16> to vector<8x8xbf16>
    %cst_22 = arith.constant dense<0.000000e+00> : vector<8x8xf32>
    %56 = tpu.matmul %53, %54, %cst_22 {dimension_numbers = #tpu.dot_dimension_numbers<[1], [1], [0], [0], [0, 0, 1, 0], [], []>} : vector<8x8xbf16>, vector<8x8xbf16>, vector<8x8xf32> -> vector<8x8xf32>
    %cst_23 = arith.constant dense<0xFF800000> : vector<8xf32>
    %57 = vector.multi_reduction <maximumf>, %56, %cst_23 [1] : vector<8x8xf32> to vector<8xf32>
    %58 = vector.shape_cast %57 : vector<8xf32> to vector<8x1xf32>
    %59 = vector.broadcast %58 : vector<8x1xf32> to vector<8x8xf32>
    %60 = arith.subf %56, %59 : vector<8x8xf32>
    %61 = math.exp %60 : vector<8x8xf32>
    %cst_24 = arith.constant dense<0.000000e+00> : vector<8xf32>
    %62 = vector.multi_reduction <add>, %61, %cst_24 [1] : vector<8x8xf32> to vector<8xf32>
    %63 = vector.shape_cast %62 : vector<8xf32> to vector<8x1xf32>
    %64 = tpu.reciprocal %63 {approx = true} : vector<8x1xf32> -> vector<8x1xf32>
    %65 = vector.broadcast %64 : vector<8x1xf32> to vector<8x8xf32>
    %66 = arith.mulf %61, %65 : vector<8x8xf32>
    %67 = arith.truncf %66 : vector<8x8xf32> to vector<8x8xbf16>
    %cst_25 = arith.constant dense<0.000000e+00> : vector<8x8xf32>
    %68 = tpu.matmul %67, %55, %cst_25 {dimension_numbers = #tpu.dot_dimension_numbers<[1], [0], [0], [1], [0, 0, 1, 1], [], []>} : vector<8x8xbf16>, vector<8x8xbf16>, vector<8x8xf32> -> vector<8x8xf32>
    %69 = vector.extract_strided_slice %18 {offsets = [0, 24], sizes = [8, 8], strides = [1, 1]} : vector<8x32xbf16> to vector<8x8xbf16>
    %70 = vector.extract_strided_slice %19 {offsets = [0, 24], sizes = [8, 8], strides = [1, 1]} : vector<8x32xbf16> to vector<8x8xbf16>
    %71 = vector.extract_strided_slice %20 {offsets = [0, 24], sizes = [8, 8], strides = [1, 1]} : vector<8x32xbf16> to vector<8x8xbf16>
    %cst_26 = arith.constant dense<0.000000e+00> : vector<8x8xf32>
    %72 = tpu.matmul %69, %70, %cst_26 {dimension_numbers = #tpu.dot_dimension_numbers<[1], [1], [0], [0], [0, 0, 1, 0], [], []>} : vector<8x8xbf16>, vector<8x8xbf16>, vector<8x8xf32> -> vector<8x8xf32>
    %cst_27 = arith.constant dense<0xFF800000> : vector<8xf32>
    %73 = vector.multi_reduction <maximumf>, %72, %cst_27 [1] : vector<8x8xf32> to vector<8xf32>
    %74 = vector.shape_cast %73 : vector<8xf32> to vector<8x1xf32>
    %75 = vector.broadcast %74 : vector<8x1xf32> to vector<8x8xf32>
    %76 = arith.subf %72, %75 : vector<8x8xf32>
    %77 = math.exp %76 : vector<8x8xf32>
    %cst_28 = arith.constant dense<0.000000e+00> : vector<8xf32>
    %78 = vector.multi_reduction <add>, %77, %cst_28 [1] : vector<8x8xf32> to vector<8xf32>
    %79 = vector.shape_cast %78 : vector<8xf32> to vector<8x1xf32>
    %80 = tpu.reciprocal %79 {approx = true} : vector<8x1xf32> -> vector<8x1xf32>
    %81 = vector.broadcast %80 : vector<8x1xf32> to vector<8x8xf32>
    %82 = arith.mulf %77, %81 : vector<8x8xf32>
    %83 = arith.truncf %82 : vector<8x8xf32> to vector<8x8xbf16>
    %cst_29 = arith.constant dense<0.000000e+00> : vector<8x8xf32>
    %84 = tpu.matmul %83, %71, %cst_29 {dimension_numbers = #tpu.dot_dimension_numbers<[1], [0], [0], [1], [0, 0, 1, 1], [], []>} : vector<8x8xbf16>, vector<8x8xbf16>, vector<8x8xf32> -> vector<8x8xf32>
    %85 = tpu.concatenate %36, %52, %68, %84 in 1 : vector<8x8xf32>, vector<8x8xf32>, vector<8x8xf32>, vector<8x8xf32> -> vector<8x32xf32>
    %86 = arith.truncf %85 : vector<8x32xf32> to vector<8x32xbf16>
    %c0_30 = arith.constant 0 : index
    %c0_31 = arith.constant 0 : index
    %87 = vector.load %arg7[%c0_30, %c0_31] : memref<32x32xbf16, #tpu.memory_space<vmem>>, vector<32x32xbf16>
    %cst_32 = arith.constant dense<0.000000e+00> : vector<8x32xf32>
    %88 = tpu.matmul %86, %87, %cst_32 {dimension_numbers = #tpu.dot_dimension_numbers<[1], [0], [0], [1], [0, 0, 1, 1], [], []>} : vector<8x32xbf16>, vector<32x32xbf16>, vector<8x32xf32> -> vector<8x32xf32>
    %c0_33 = arith.constant 0 : index
    %c0_34 = arith.constant 0 : index
    %89 = vector.load %arg8[%c0_33, %c0_34] : memref<1x32xf32, #tpu.memory_space<vmem>>, vector<1x32xf32>
    %90 = vector.broadcast %89 : vector<1x32xf32> to vector<8x32xf32>
    %91 = arith.addf %88, %90 : vector<8x32xf32>
    %92 = arith.addf %91, %1 : vector<8x32xf32>
    %cst_35 = arith.constant dense<0.000000e+00> : vector<8xf32>
    %93 = vector.multi_reduction <add>, %92, %cst_35 [1] : vector<8x32xf32> to vector<8xf32>
    %94 = vector.shape_cast %93 : vector<8xf32> to vector<8x1xf32>
    %cst_36 = arith.constant 3.200000e+01 : f32
    %95 = vector.broadcast %cst_36 : f32 to vector<8x1xf32>
    %96 = arith.divf %94, %95 : vector<8x1xf32>
    %97 = vector.broadcast %96 : vector<8x1xf32> to vector<8x32xf32>
    %98 = arith.subf %92, %97 : vector<8x32xf32>
    %99 = arith.mulf %98, %98 : vector<8x32xf32>
    %cst_37 = arith.constant dense<0.000000e+00> : vector<8xf32>
    %100 = vector.multi_reduction <add>, %99, %cst_37 [1] : vector<8x32xf32> to vector<8xf32>
    %101 = vector.shape_cast %100 : vector<8xf32> to vector<8x1xf32>
    %cst_38 = arith.constant 3.200000e+01 : f32
    %102 = vector.broadcast %cst_38 : f32 to vector<8x1xf32>
    %103 = arith.divf %101, %102 : vector<8x1xf32>
    %104 = vector.broadcast %96 : vector<8x1xf32> to vector<8x32xf32>
    %105 = arith.subf %92, %104 : vector<8x32xf32>
    %cst_39 = arith.constant 9.99999974E-6 : f32
    %106 = vector.broadcast %cst_39 : f32 to vector<8x1xf32>
    %107 = arith.addf %103, %106 : vector<8x1xf32>
    %108 = math.rsqrt %107 : vector<8x1xf32>
    %109 = vector.broadcast %108 : vector<8x1xf32> to vector<8x32xf32>
    %110 = arith.mulf %105, %109 : vector<8x32xf32>
    %c0_40 = arith.constant 0 : index
    %c0_41 = arith.constant 0 : index
    %111 = vector.load %arg9[%c0_40, %c0_41] : memref<1x32xf32, #tpu.memory_space<vmem>>, vector<1x32xf32>
    %112 = vector.broadcast %111 : vector<1x32xf32> to vector<8x32xf32>
    %113 = arith.mulf %110, %112 : vector<8x32xf32>
    %c0_42 = arith.constant 0 : index
    %c0_43 = arith.constant 0 : index
    %114 = vector.load %arg10[%c0_42, %c0_43] : memref<1x32xf32, #tpu.memory_space<vmem>>, vector<1x32xf32>
    %115 = vector.broadcast %114 : vector<1x32xf32> to vector<8x32xf32>
    %116 = arith.addf %113, %115 : vector<8x32xf32>
    %117 = arith.truncf %116 : vector<8x32xf32> to vector<8x32xbf16>
    %c0_44 = arith.constant 0 : index
    %c0_45 = arith.constant 0 : index
    %118 = vector.load %arg11[%c0_44, %c0_45] : memref<32x32xbf16, #tpu.memory_space<vmem>>, vector<32x32xbf16>
    %cst_46 = arith.constant dense<0.000000e+00> : vector<8x32xf32>
    %119 = tpu.matmul %117, %118, %cst_46 {dimension_numbers = #tpu.dot_dimension_numbers<[1], [0], [0], [1], [0, 0, 1, 1], [], []>} : vector<8x32xbf16>, vector<32x32xbf16>, vector<8x32xf32> -> vector<8x32xf32>
    %c0_47 = arith.constant 0 : index
    %c0_48 = arith.constant 0 : index
    %120 = vector.load %arg12[%c0_47, %c0_48] : memref<1x32xf32, #tpu.memory_space<vmem>>, vector<1x32xf32>
    %121 = vector.broadcast %120 : vector<1x32xf32> to vector<8x32xf32>
    %122 = arith.addf %119, %121 : vector<8x32xf32>
    %123 = arith.truncf %3 : vector<10x32xf32> to vector<10x32xbf16>
    %c0_49 = arith.constant 0 : index
    %c0_50 = arith.constant 0 : index
    %124 = vector.load %arg13[%c0_49, %c0_50] : memref<32x64xbf16, #tpu.memory_space<vmem>>, vector<32x64xbf16>
    %cst_51 = arith.constant dense<0.000000e+00> : vector<10x64xf32>
    %125 = tpu.matmul %123, %124, %cst_51 {dimension_numbers = #tpu.dot_dimension_numbers<[1], [0], [0], [1], [0, 0, 1, 1], [], []>} : vector<10x32xbf16>, vector<32x64xbf16>, vector<10x64xf32> -> vector<10x64xf32>
    %c0_52 = arith.constant 0 : index
    %c0_53 = arith.constant 0 : index
    %126 = vector.load %arg14[%c0_52, %c0_53] : memref<1x64xf32, #tpu.memory_space<vmem>>, vector<1x64xf32>
    %127 = vector.broadcast %126 : vector<1x64xf32> to vector<10x64xf32>
    %128 = arith.addf %125, %127 : vector<10x64xf32>
    %129 = vector.extract_strided_slice %128 {offsets = [0, 0], sizes = [10, 32], strides = [1, 1]} : vector<10x64xf32> to vector<10x32xf32>
    %130 = vector.extract_strided_slice %128 {offsets = [0, 32], sizes = [10, 32], strides = [1, 1]} : vector<10x64xf32> to vector<10x32xf32>
    %131 = arith.truncf %122 : vector<8x32xf32> to vector<8x32xbf16>
    %132 = arith.truncf %129 : vector<10x32xf32> to vector<10x32xbf16>
    %133 = arith.truncf %130 : vector<10x32xf32> to vector<10x32xbf16>
    %134 = vector.extract_strided_slice %131 {offsets = [0, 0], sizes = [8, 8], strides = [1, 1]} : vector<8x32xbf16> to vector<8x8xbf16>
    %135 = vector.extract_strided_slice %132 {offsets = [0, 0], sizes = [10, 8], strides = [1, 1]} : vector<10x32xbf16> to vector<10x8xbf16>
    %136 = vector.extract_strided_slice %133 {offsets = [0, 0], sizes = [10, 8], strides = [1, 1]} : vector<10x32xbf16> to vector<10x8xbf16>
    %cst_54 = arith.constant dense<0.000000e+00> : vector<8x10xf32>
    %137 = tpu.matmul %134, %135, %cst_54 {dimension_numbers = #tpu.dot_dimension_numbers<[1], [1], [0], [0], [0, 0, 1, 0], [], []>} : vector<8x8xbf16>, vector<10x8xbf16>, vector<8x10xf32> -> vector<8x10xf32>
    %cst_55 = arith.constant dense<0xFF800000> : vector<8xf32>
    %138 = vector.multi_reduction <maximumf>, %137, %cst_55 [1] : vector<8x10xf32> to vector<8xf32>
    %139 = vector.shape_cast %138 : vector<8xf32> to vector<8x1xf32>
    %140 = vector.broadcast %139 : vector<8x1xf32> to vector<8x10xf32>
    %141 = arith.subf %137, %140 : vector<8x10xf32>
    %142 = math.exp %141 : vector<8x10xf32>
    %cst_56 = arith.constant dense<0.000000e+00> : vector<8xf32>
    %143 = vector.multi_reduction <add>, %142, %cst_56 [1] : vector<8x10xf32> to vector<8xf32>
    %144 = vector.shape_cast %143 : vector<8xf32> to vector<8x1xf32>
    %145 = tpu.reciprocal %144 {approx = true} : vector<8x1xf32> -> vector<8x1xf32>
    %146 = vector.broadcast %145 : vector<8x1xf32> to vector<8x10xf32>
    %147 = arith.mulf %142, %146 : vector<8x10xf32>
    %148 = arith.truncf %147 : vector<8x10xf32> to vector<8x10xbf16>
    %cst_57 = arith.constant dense<0.000000e+00> : vector<8x8xf32>
    %149 = tpu.matmul %148, %136, %cst_57 {dimension_numbers = #tpu.dot_dimension_numbers<[1], [0], [0], [1], [0, 0, 1, 1], [], []>} : vector<8x10xbf16>, vector<10x8xbf16>, vector<8x8xf32> -> vector<8x8xf32>
    %150 = vector.extract_strided_slice %131 {offsets = [0, 8], sizes = [8, 8], strides = [1, 1]} : vector<8x32xbf16> to vector<8x8xbf16>
    %151 = vector.extract_strided_slice %132 {offsets = [0, 8], sizes = [10, 8], strides = [1, 1]} : vector<10x32xbf16> to vector<10x8xbf16>
    %152 = vector.extract_strided_slice %133 {offsets = [0, 8], sizes = [10, 8], strides = [1, 1]} : vector<10x32xbf16> to vector<10x8xbf16>
    %cst_58 = arith.constant dense<0.000000e+00> : vector<8x10xf32>
    %153 = tpu.matmul %150, %151, %cst_58 {dimension_numbers = #tpu.dot_dimension_numbers<[1], [1], [0], [0], [0, 0, 1, 0], [], []>} : vector<8x8xbf16>, vector<10x8xbf16>, vector<8x10xf32> -> vector<8x10xf32>
    %cst_59 = arith.constant dense<0xFF800000> : vector<8xf32>
    %154 = vector.multi_reduction <maximumf>, %153, %cst_59 [1] : vector<8x10xf32> to vector<8xf32>
    %155 = vector.shape_cast %154 : vector<8xf32> to vector<8x1xf32>
    %156 = vector.broadcast %155 : vector<8x1xf32> to vector<8x10xf32>
    %157 = arith.subf %153, %156 : vector<8x10xf32>
    %158 = math.exp %157 : vector<8x10xf32>
    %cst_60 = arith.constant dense<0.000000e+00> : vector<8xf32>
    %159 = vector.multi_reduction <add>, %158, %cst_60 [1] : vector<8x10xf32> to vector<8xf32>
    %160 = vector.shape_cast %159 : vector<8xf32> to vector<8x1xf32>
    %161 = tpu.reciprocal %160 {approx = true} : vector<8x1xf32> -> vector<8x1xf32>
    %162 = vector.broadcast %161 : vector<8x1xf32> to vector<8x10xf32>
    %163 = arith.mulf %158, %162 : vector<8x10xf32>
    %164 = arith.truncf %163 : vector<8x10xf32> to vector<8x10xbf16>
    %cst_61 = arith.constant dense<0.000000e+00> : vector<8x8xf32>
    %165 = tpu.matmul %164, %152, %cst_61 {dimension_numbers = #tpu.dot_dimension_numbers<[1], [0], [0], [1], [0, 0, 1, 1], [], []>} : vector<8x10xbf16>, vector<10x8xbf16>, vector<8x8xf32> -> vector<8x8xf32>
    %166 = vector.extract_strided_slice %131 {offsets = [0, 16], sizes = [8, 8], strides = [1, 1]} : vector<8x32xbf16> to vector<8x8xbf16>
    %167 = vector.extract_strided_slice %132 {offsets = [0, 16], sizes = [10, 8], strides = [1, 1]} : vector<10x32xbf16> to vector<10x8xbf16>
    %168 = vector.extract_strided_slice %133 {offsets = [0, 16], sizes = [10, 8], strides = [1, 1]} : vector<10x32xbf16> to vector<10x8xbf16>
    %cst_62 = arith.constant dense<0.000000e+00> : vector<8x10xf32>
    %169 = tpu.matmul %166, %167, %cst_62 {dimension_numbers = #tpu.dot_dimension_numbers<[1], [1], [0], [0], [0, 0, 1, 0], [], []>} : vector<8x8xbf16>, vector<10x8xbf16>, vector<8x10xf32> -> vector<8x10xf32>
    %cst_63 = arith.constant dense<0xFF800000> : vector<8xf32>
    %170 = vector.multi_reduction <maximumf>, %169, %cst_63 [1] : vector<8x10xf32> to vector<8xf32>
    %171 = vector.shape_cast %170 : vector<8xf32> to vector<8x1xf32>
    %172 = vector.broadcast %171 : vector<8x1xf32> to vector<8x10xf32>
    %173 = arith.subf %169, %172 : vector<8x10xf32>
    %174 = math.exp %173 : vector<8x10xf32>
    %cst_64 = arith.constant dense<0.000000e+00> : vector<8xf32>
    %175 = vector.multi_reduction <add>, %174, %cst_64 [1] : vector<8x10xf32> to vector<8xf32>
    %176 = vector.shape_cast %175 : vector<8xf32> to vector<8x1xf32>
    %177 = tpu.reciprocal %176 {approx = true} : vector<8x1xf32> -> vector<8x1xf32>
    %178 = vector.broadcast %177 : vector<8x1xf32> to vector<8x10xf32>
    %179 = arith.mulf %174, %178 : vector<8x10xf32>
    %180 = arith.truncf %179 : vector<8x10xf32> to vector<8x10xbf16>
    %cst_65 = arith.constant dense<0.000000e+00> : vector<8x8xf32>
    %181 = tpu.matmul %180, %168, %cst_65 {dimension_numbers = #tpu.dot_dimension_numbers<[1], [0], [0], [1], [0, 0, 1, 1], [], []>} : vector<8x10xbf16>, vector<10x8xbf16>, vector<8x8xf32> -> vector<8x8xf32>
    %182 = vector.extract_strided_slice %131 {offsets = [0, 24], sizes = [8, 8], strides = [1, 1]} : vector<8x32xbf16> to vector<8x8xbf16>
    %183 = vector.extract_strided_slice %132 {offsets = [0, 24], sizes = [10, 8], strides = [1, 1]} : vector<10x32xbf16> to vector<10x8xbf16>
    %184 = vector.extract_strided_slice %133 {offsets = [0, 24], sizes = [10, 8], strides = [1, 1]} : vector<10x32xbf16> to vector<10x8xbf16>
    %cst_66 = arith.constant dense<0.000000e+00> : vector<8x10xf32>
    %185 = tpu.matmul %182, %183, %cst_66 {dimension_numbers = #tpu.dot_dimension_numbers<[1], [1], [0], [0], [0, 0, 1, 0], [], []>} : vector<8x8xbf16>, vector<10x8xbf16>, vector<8x10xf32> -> vector<8x10xf32>
    %cst_67 = arith.constant dense<0xFF800000> : vector<8xf32>
    %186 = vector.multi_reduction <maximumf>, %185, %cst_67 [1] : vector<8x10xf32> to vector<8xf32>
    %187 = vector.shape_cast %186 : vector<8xf32> to vector<8x1xf32>
    %188 = vector.broadcast %187 : vector<8x1xf32> to vector<8x10xf32>
    %189 = arith.subf %185, %188 : vector<8x10xf32>
    %190 = math.exp %189 : vector<8x10xf32>
    %cst_68 = arith.constant dense<0.000000e+00> : vector<8xf32>
    %191 = vector.multi_reduction <add>, %190, %cst_68 [1] : vector<8x10xf32> to vector<8xf32>
    %192 = vector.shape_cast %191 : vector<8xf32> to vector<8x1xf32>
    %193 = tpu.reciprocal %192 {approx = true} : vector<8x1xf32> -> vector<8x1xf32>
    %194 = vector.broadcast %193 : vector<8x1xf32> to vector<8x10xf32>
    %195 = arith.mulf %190, %194 : vector<8x10xf32>
    %196 = arith.truncf %195 : vector<8x10xf32> to vector<8x10xbf16>
    %cst_69 = arith.constant dense<0.000000e+00> : vector<8x8xf32>
    %197 = tpu.matmul %196, %184, %cst_69 {dimension_numbers = #tpu.dot_dimension_numbers<[1], [0], [0], [1], [0, 0, 1, 1], [], []>} : vector<8x10xbf16>, vector<10x8xbf16>, vector<8x8xf32> -> vector<8x8xf32>
    %198 = tpu.concatenate %149, %165, %181, %197 in 1 : vector<8x8xf32>, vector<8x8xf32>, vector<8x8xf32>, vector<8x8xf32> -> vector<8x32xf32>
    %199 = arith.truncf %198 : vector<8x32xf32> to vector<8x32xbf16>
    %c0_70 = arith.constant 0 : index
    %c0_71 = arith.constant 0 : index
    %200 = vector.load %arg15[%c0_70, %c0_71] : memref<32x32xbf16, #tpu.memory_space<vmem>>, vector<32x32xbf16>
    %cst_72 = arith.constant dense<0.000000e+00> : vector<8x32xf32>
    %201 = tpu.matmul %199, %200, %cst_72 {dimension_numbers = #tpu.dot_dimension_numbers<[1], [0], [0], [1], [0, 0, 1, 1], [], []>} : vector<8x32xbf16>, vector<32x32xbf16>, vector<8x32xf32> -> vector<8x32xf32>
    %c0_73 = arith.constant 0 : index
    %c0_74 = arith.constant 0 : index
    %202 = vector.load %arg16[%c0_73, %c0_74] : memref<1x32xf32, #tpu.memory_space<vmem>>, vector<1x32xf32>
    %203 = vector.broadcast %202 : vector<1x32xf32> to vector<8x32xf32>
    %204 = arith.addf %201, %203 : vector<8x32xf32>
    %205 = arith.addf %204, %116 : vector<8x32xf32>
    %cst_75 = arith.constant dense<0.000000e+00> : vector<8xf32>
    %206 = vector.multi_reduction <add>, %205, %cst_75 [1] : vector<8x32xf32> to vector<8xf32>
    %207 = vector.shape_cast %206 : vector<8xf32> to vector<8x1xf32>
    %cst_76 = arith.constant 3.200000e+01 : f32
    %208 = vector.broadcast %cst_76 : f32 to vector<8x1xf32>
    %209 = arith.divf %207, %208 : vector<8x1xf32>
    %210 = vector.broadcast %209 : vector<8x1xf32> to vector<8x32xf32>
    %211 = arith.subf %205, %210 : vector<8x32xf32>
    %212 = arith.mulf %211, %211 : vector<8x32xf32>
    %cst_77 = arith.constant dense<0.000000e+00> : vector<8xf32>
    %213 = vector.multi_reduction <add>, %212, %cst_77 [1] : vector<8x32xf32> to vector<8xf32>
    %214 = vector.shape_cast %213 : vector<8xf32> to vector<8x1xf32>
    %cst_78 = arith.constant 3.200000e+01 : f32
    %215 = vector.broadcast %cst_78 : f32 to vector<8x1xf32>
    %216 = arith.divf %214, %215 : vector<8x1xf32>
    %217 = vector.broadcast %209 : vector<8x1xf32> to vector<8x32xf32>
    %218 = arith.subf %205, %217 : vector<8x32xf32>
    %cst_79 = arith.constant 9.99999974E-6 : f32
    %219 = vector.broadcast %cst_79 : f32 to vector<8x1xf32>
    %220 = arith.addf %216, %219 : vector<8x1xf32>
    %221 = math.rsqrt %220 : vector<8x1xf32>
    %222 = vector.broadcast %221 : vector<8x1xf32> to vector<8x32xf32>
    %223 = arith.mulf %218, %222 : vector<8x32xf32>
    %c0_80 = arith.constant 0 : index
    %c0_81 = arith.constant 0 : index
    %224 = vector.load %arg17[%c0_80, %c0_81] : memref<1x32xf32, #tpu.memory_space<vmem>>, vector<1x32xf32>
    %225 = vector.broadcast %224 : vector<1x32xf32> to vector<8x32xf32>
    %226 = arith.mulf %223, %225 : vector<8x32xf32>
    %c0_82 = arith.constant 0 : index
    %c0_83 = arith.constant 0 : index
    %227 = vector.load %arg18[%c0_82, %c0_83] : memref<1x32xf32, #tpu.memory_space<vmem>>, vector<1x32xf32>
    %228 = vector.broadcast %227 : vector<1x32xf32> to vector<8x32xf32>
    %229 = arith.addf %226, %228 : vector<8x32xf32>
    %230 = arith.truncf %229 : vector<8x32xf32> to vector<8x32xbf16>
    %c0_84 = arith.constant 0 : index
    %c0_85 = arith.constant 0 : index
    %231 = vector.load %arg19[%c0_84, %c0_85] : memref<32x64xbf16, #tpu.memory_space<vmem>>, vector<32x64xbf16>
    %cst_86 = arith.constant dense<0.000000e+00> : vector<8x64xf32>
    %232 = tpu.matmul %230, %231, %cst_86 {dimension_numbers = #tpu.dot_dimension_numbers<[1], [0], [0], [1], [0, 0, 1, 1], [], []>} : vector<8x32xbf16>, vector<32x64xbf16>, vector<8x64xf32> -> vector<8x64xf32>
    %c0_87 = arith.constant 0 : index
    %c0_88 = arith.constant 0 : index
    %233 = vector.load %arg20[%c0_87, %c0_88] : memref<1x64xf32, #tpu.memory_space<vmem>>, vector<1x64xf32>
    %234 = vector.broadcast %233 : vector<1x64xf32> to vector<8x64xf32>
    %235 = arith.addf %232, %234 : vector<8x64xf32>
    %cst_89 = arith.constant 0.000000e+00 : f32
    %236 = vector.broadcast %cst_89 : f32 to vector<8x64xf32>
    %237 = arith.maximumf %235, %236 : vector<8x64xf32>
    %238 = arith.truncf %237 : vector<8x64xf32> to vector<8x64xbf16>
    %c0_90 = arith.constant 0 : index
    %c0_91 = arith.constant 0 : index
    %239 = vector.load %arg21[%c0_90, %c0_91] : memref<64x32xbf16, #tpu.memory_space<vmem>>, vector<64x32xbf16>
    %cst_92 = arith.constant dense<0.000000e+00> : vector<8x32xf32>
    %240 = tpu.matmul %238, %239, %cst_92 {dimension_numbers = #tpu.dot_dimension_numbers<[1], [0], [0], [1], [0, 0, 1, 1], [], []>} : vector<8x64xbf16>, vector<64x32xbf16>, vector<8x32xf32> -> vector<8x32xf32>
    %c0_93 = arith.constant 0 : index
    %c0_94 = arith.constant 0 : index
    %241 = vector.load %arg22[%c0_93, %c0_94] : memref<1x32xf32, #tpu.memory_space<vmem>>, vector<1x32xf32>
    %242 = vector.broadcast %241 : vector<1x32xf32> to vector<8x32xf32>
    %243 = arith.addf %240, %242 : vector<8x32xf32>
    %244 = arith.addf %243, %229 : vector<8x32xf32>
    %cst_95 = arith.constant dense<0.000000e+00> : vector<8xf32>
    %245 = vector.multi_reduction <add>, %244, %cst_95 [1] : vector<8x32xf32> to vector<8xf32>
    %246 = vector.shape_cast %245 : vector<8xf32> to vector<8x1xf32>
    %cst_96 = arith.constant 3.200000e+01 : f32
    %247 = vector.broadcast %cst_96 : f32 to vector<8x1xf32>
    %248 = arith.divf %246, %247 : vector<8x1xf32>
    %249 = vector.broadcast %248 : vector<8x1xf32> to vector<8x32xf32>
    %250 = arith.subf %244, %249 : vector<8x32xf32>
    %251 = arith.mulf %250, %250 : vector<8x32xf32>
    %cst_97 = arith.constant dense<0.000000e+00> : vector<8xf32>
    %252 = vector.multi_reduction <add>, %251, %cst_97 [1] : vector<8x32xf32> to vector<8xf32>
    %253 = vector.shape_cast %252 : vector<8xf32> to vector<8x1xf32>
    %cst_98 = arith.constant 3.200000e+01 : f32
    %254 = vector.broadcast %cst_98 : f32 to vector<8x1xf32>
    %255 = arith.divf %253, %254 : vector<8x1xf32>
    %256 = vector.broadcast %248 : vector<8x1xf32> to vector<8x32xf32>
    %257 = arith.subf %244, %256 : vector<8x32xf32>
    %cst_99 = arith.constant 9.99999974E-6 : f32
    %258 = vector.broadcast %cst_99 : f32 to vector<8x1xf32>
    %259 = arith.addf %255, %258 : vector<8x1xf32>
    %260 = math.rsqrt %259 : vector<8x1xf32>
    %261 = vector.broadcast %260 : vector<8x1xf32> to vector<8x32xf32>
    %262 = arith.mulf %257, %261 : vector<8x32xf32>
    %c0_100 = arith.constant 0 : index
    %c0_101 = arith.constant 0 : index
    %263 = vector.load %arg23[%c0_100, %c0_101] : memref<1x32xf32, #tpu.memory_space<vmem>>, vector<1x32xf32>
    %264 = vector.broadcast %263 : vector<1x32xf32> to vector<8x32xf32>
    %265 = arith.mulf %262, %264 : vector<8x32xf32>
    %c0_102 = arith.constant 0 : index
    %c0_103 = arith.constant 0 : index
    %266 = vector.load %arg24[%c0_102, %c0_103] : memref<1x32xf32, #tpu.memory_space<vmem>>, vector<1x32xf32>
    %267 = vector.broadcast %266 : vector<1x32xf32> to vector<8x32xf32>
    %268 = arith.addf %265, %267 : vector<8x32xf32>
    %c0_104 = arith.constant 0 : index
    %c0_105 = arith.constant 0 : index
    %c0_106 = arith.constant 0 : index
    %269 = vector.load %arg25[%c0_104, %c0_105, %c0_106] : memref<1x8x32xf32, #tpu.memory_space<vmem>>, vector<1x8x32xf32>
    %270 = vector.shape_cast %269 : vector<1x8x32xf32> to vector<8x32xf32>
    %271 = vector.shape_cast %268 : vector<8x32xf32> to vector<1x8x32xf32>
    tpu.vector_store %arg25[%c0_104, %c0_105, %c0_106], %271 {strides = array<i32>} : memref<1x8x32xf32, #tpu.memory_space<vmem>>, vector<1x8x32xf32>,
    return
  }
  func.func @transform_0(%arg0: i32) -> (i32, i32, i32) {
    %c0_i32 = arith.constant 0 : i32
    %c0_i32_0 = arith.constant 0 : i32
    %c0_i32_1 = arith.constant 0 : i32
    return %arg0, %c0_i32, %c0_i32_0 : i32, i32, i32
  }
  func.func @transform_1(%arg0: i32) -> (i32, i32, i32) {
    %c0_i32 = arith.constant 0 : i32
    %c0_i32_0 = arith.constant 0 : i32
    %c0_i32_1 = arith.constant 0 : i32
    return %arg0, %c0_i32, %c0_i32_0 : i32, i32, i32
  }
  func.func @transform_2(%arg0: i32) -> (i32, i32) {
    %c0_i32 = arith.constant 0 : i32
    %c0_i32_0 = arith.constant 0 : i32
    %c0_i32_1 = arith.constant 0 : i32
    return %c0_i32, %c0_i32_0 : i32, i32
  }
  func.func @transform_3(%arg0: i32) -> (i32, i32) {
    %c0_i32 = arith.constant 0 : i32
    %c0_i32_0 = arith.constant 0 : i32
    %c0_i32_1 = arith.constant 0 : i32
    return %c0_i32, %c0_i32_0 : i32, i32
  }
  func.func @transform_4(%arg0: i32) -> (i32, i32) {
    %c0_i32 = arith.constant 0 : i32
    %c0_i32_0 = arith.constant 0 : i32
    %c0_i32_1 = arith.constant 0 : i32
    return %c0_i32, %c0_i32_0 : i32, i32
  }
  func.func @transform_5(%arg0: i32) -> (i32, i32) {
    %c0_i32 = arith.constant 0 : i32
    %c0_i32_0 = arith.constant 0 : i32
    %c0_i32_1 = arith.constant 0 : i32
    return %c0_i32, %c0_i32_0 : i32, i32
  }
  func.func @transform_6(%arg0: i32) -> (i32, i32) {
    %c0_i32 = arith.constant 0 : i32
    %c0_i32_0 = arith.constant 0 : i32
    %c0_i32_1 = arith.constant 0 : i32
    return %c0_i32, %c0_i32_0 : i32, i32
  }
  func.func @transform_7(%arg0: i32) -> (i32, i32) {
    %c0_i32 = arith.constant 0 : i32
    %c0_i32_0 = arith.constant 0 : i32
    %c0_i32_1 = arith.constant 0 : i32
    return %c0_i32, %c0_i32_0 : i32, i32
  }
  func.func @transform_8(%arg0: i32) -> (i32, i32) {
    %c0_i32 = arith.constant 0 : i32
    %c0_i32_0 = arith.constant 0 : i32
    %c0_i32_1 = arith.constant 0 : i32
    return %c0_i32, %c0_i32_0 : i32, i32
  }
  func.func @transform_9(%arg0: i32) -> (i32, i32) {
    %c0_i32 = arith.constant 0 : i32
    %c0_i32_0 = arith.constant 0 : i32
    %c0_i32_1 = arith.constant 0 : i32
    return %c0_i32, %c0_i32_0 : i32, i32
  }
  func.func @transform_10(%arg0: i32) -> (i32, i32) {
    %c0_i32 = arith.constant 0 : i32
    %c0_i32_0 = arith.constant 0 : i32
    %c0_i32_1 = arith.constant 0 : i32
    return %c0_i32, %c0_i32_0 : i32, i32
  }
  func.func @transform_11(%arg0: i32) -> (i32, i32) {
    %c0_i32 = arith.constant 0 : i32
    %c0_i32_0 = arith.constant 0 : i32
    %c0_i32_1 = arith.constant 0 : i32
    return %c0_i32, %c0_i32_0 : i32, i32
  }
  func.func @transform_12(%arg0: i32) -> (i32, i32) {
    %c0_i32 = arith.constant 0 : i32
    %c0_i32_0 = arith.constant 0 : i32
    %c0_i32_1 = arith.constant 0 : i32
    return %c0_i32, %c0_i32_0 : i32, i32
  }
  func.func @transform_13(%arg0: i32) -> (i32, i32) {
    %c0_i32 = arith.constant 0 : i32
    %c0_i32_0 = arith.constant 0 : i32
    %c0_i32_1 = arith.constant 0 : i32
    return %c0_i32, %c0_i32_0 : i32, i32
  }
  func.func @transform_14(%arg0: i32) -> (i32, i32) {
    %c0_i32 = arith.constant 0 : i32
    %c0_i32_0 = arith.constant 0 : i32
    %c0_i32_1 = arith.constant 0 : i32
    return %c0_i32, %c0_i32_0 : i32, i32
  }
  func.func @transform_15(%arg0: i32) -> (i32, i32) {
    %c0_i32 = arith.constant 0 : i32
    %c0_i32_0 = arith.constant 0 : i32
    %c0_i32_1 = arith.constant 0 : i32
    return %c0_i32, %c0_i32_0 : i32, i32
  }
  func.func @transform_16(%arg0: i32) -> (i32, i32) {
    %c0_i32 = arith.constant 0 : i32
    %c0_i32_0 = arith.constant 0 : i32
    %c0_i32_1 = arith.constant 0 : i32
    return %c0_i32, %c0_i32_0 : i32, i32
  }
  func.func @transform_17(%arg0: i32) -> (i32, i32) {
    %c0_i32 = arith.constant 0 : i32
    %c0_i32_0 = arith.constant 0 : i32
    %c0_i32_1 = arith.constant 0 : i32
    return %c0_i32, %c0_i32_0 : i32, i32
  }
  func.func @transform_18(%arg0: i32) -> (i32, i32) {
    %c0_i32 = arith.constant 0 : i32
    %c0_i32_0 = arith.constant 0 : i32
    %c0_i32_1 = arith.constant 0 : i32
    return %c0_i32, %c0_i32_0 : i32, i32
  }
  func.func @transform_19(%arg0: i32) -> (i32, i32) {
    %c0_i32 = arith.constant 0 : i32
    %c0_i32_0 = arith.constant 0 : i32
    %c0_i32_1 = arith.constant 0 : i32
    return %c0_i32, %c0_i32_0 : i32, i32
  }
  func.func @transform_20(%arg0: i32) -> (i32, i32) {
    %c0_i32 = arith.constant 0 : i32
    %c0_i32_0 = arith.constant 0 : i32
    %c0_i32_1 = arith.constant 0 : i32
    return %c0_i32, %c0_i32_0 : i32, i32
  }
  func.func @transform_21(%arg0: i32) -> (i32, i32) {
    %c0_i32 = arith.constant 0 : i32
    %c0_i32_0 = arith.constant 0 : i32
    %c0_i32_1 = arith.constant 0 : i32
    return %c0_i32, %c0_i32_0 : i32, i32
  }
  func.func @transform_22(%arg0: i32) -> (i32, i32) {
    %c0_i32 = arith.constant 0 : i32
    %c0_i32_0 = arith.constant 0 : i32
    %c0_i32_1 = arith.constant 0 : i32
    return %c0_i32, %c0_i32_0 : i32, i32
  }
  func.func @transform_23(%arg0: i32) -> (i32, i32) {
    %c0_i32 = arith.constant 0 : i32
    %c0_i32_0 = arith.constant 0 : i32
    %c0_i32_1 = arith.constant 0 : i32
    return %c0_i32, %c0_i32_0 : i32, i32
  }
  func.func @transform_24(%arg0: i32) -> (i32, i32, i32) {
    %c0_i32 = arith.constant 0 : i32
    %c0_i32_0 = arith.constant 0 : i32
    %c0_i32_1 = arith.constant 0 : i32
    return %arg0, %c0_i32, %c0_i32_0 : i32, i32, i32
  }
}

</mosaic_0001>

<llo_original>
// kernel: tpu_custom_call.1
$region0: #{tpu_custom_call.1}
  #allocation0 [shape = 'u32[]', space=smem, size = 0x4, offset = 0x4, fixed_abs, tag = 'smem constant byte address 0x4 - core index']
  #allocation1 [shape = 'u32[144,128]{1,0:T(1,128)}', space=vmem, size = 0x12000, scoped, tag = 'internal scratch']
  %s0 = inlined_call_operand.vmem [shape: f32[2,8,32], index: 0, kind: input, shape index: {}]
  %s1 = inlined_call_operand.vmem [shape: f32[2,10,32], index: 1, kind: input, shape index: {}]
  %s2 = inlined_call_operand.vmem [shape: bf16[32,32], index: 2, kind: input, shape index: {}]
  %s3 = inlined_call_operand.vmem [shape: f32[1,32], index: 3, kind: input, shape index: {}]
  %s4 = inlined_call_operand.vmem [shape: bf16[32,64], index: 4, kind: input, shape index: {}]
  %s5 = inlined_call_operand.hbm [shape: f32[1,64], index: 5, kind: input, shape index: {}]
  %s6 = inlined_call_operand.vmem [shape: bf16[32,32], index: 6, kind: input, shape index: {}]
  %s7 = inlined_call_operand.hbm [shape: f32[1,32], index: 7, kind: input, shape index: {}]
  %s8 = inlined_call_operand.hbm [shape: f32[1,32], index: 8, kind: input, shape index: {}]
  %s9 = inlined_call_operand.hbm [shape: f32[1,32], index: 9, kind: input, shape index: {}]
  %s10 = inlined_call_operand.vmem [shape: bf16[32,32], index: 10, kind: input, shape index: {}]
  %s11 = inlined_call_operand.hbm [shape: f32[1,32], index: 11, kind: input, shape index: {}]
  %s12 = inlined_call_operand.vmem [shape: bf16[32,64], index: 12, kind: input, shape index: {}]
  %s13 = inlined_call_operand.vmem [shape: f32[1,64], index: 13, kind: input, shape index: {}]
  %s14 = inlined_call_operand.vmem [shape: bf16[32,32], index: 14, kind: input, shape index: {}]
  %s15 = inlined_call_operand.vmem [shape: f32[1,32], index: 15, kind: input, shape index: {}]
  %s16 = inlined_call_operand.vmem [shape: f32[1,32], index: 16, kind: input, shape index: {}]
  %s17 = inlined_call_operand.vmem [shape: f32[1,32], index: 17, kind: input, shape index: {}]
  %s18 = inlined_call_operand.vmem [shape: bf16[32,64], index: 18, kind: input, shape index: {}]
  %s19 = inlined_call_operand.vmem [shape: f32[1,64], index: 19, kind: input, shape index: {}]
  %s20 = inlined_call_operand.vmem [shape: bf16[64,32], index: 20, kind: input, shape index: {}]
  %s21 = inlined_call_operand.vmem [shape: f32[1,32], index: 21, kind: input, shape index: {}]
  %s22 = inlined_call_operand.vmem [shape: f32[1,32], index: 22, kind: input, shape index: {}]
  %s23 = inlined_call_operand.vmem [shape: f32[1,32], index: 23, kind: input, shape index: {}]
  %s24 = inlined_call_operand.hbm [shape: f32[2,8,32], index: 24, kind: output, shape index: {}]
  %s25 = sld [smem:[#allocation0]]
  $region149: #{tpu_custom_call.1} parent=0
    _
  %s27 = ssub.s32 1, %s25
  %s28 = scalar_select 0, %s27, %s25
  $region1: #{tpu_custom_call.1} parent=0
    #allocation2 [shape = 'u8[512]{0}', space=vmem, size = 0x400, scoped, tag = 'input window, operand 5, single buffered']
    #allocation3 [shape = 's32[2]{0}', space=sflag, size = 0x8, scoped, tag = 'scoped memory for tpu_custom_call.1']
    #allocation4 [shape = 's32[2]{0}', space=sflag, size = 0x8, scoped, tag = 'scoped memory for tpu_custom_call.1']
    #allocation5 [shape = 'u8[512]{0}', space=vmem, size = 0x400, scoped, tag = 'input window, operand 7, single buffered']
    #allocation6 [shape = 's32[1]{0}', space=sflag, size = 0x4, scoped, tag = 'scoped memory for tpu_custom_call.1']
    #allocation7 [shape = 'u8[512]{0}', space=vmem, size = 0x400, scoped, tag = 'input window, operand 8, single buffered']
    #allocation8 [shape = 'u8[512]{0}', space=vmem, size = 0x400, scoped, tag = 'input window, operand 9, single buffered']
    #allocation9 [shape = 's32[1]{0}', space=sflag, size = 0x4, scoped, tag = 'scoped memory for tpu_custom_call.1']
    #allocation10 [shape = 'u8[512]{0}', space=vmem, size = 0x400, scoped, tag = 'input window, operand 11, single buffered']
    #allocation11 [shape = 'u8[8192]{0}', space=vmem, size = 0x2000, scoped, tag = 'output window, operand 0']
    %29 = vsyncpa [#allocation3], 0
    %30 = vsyncpa [#allocation6], 0
    %31 = vsyncpa [#allocation9], 0
    %32 = vsyncpa [#allocation4], 0
    %s33 = scalar_lea.sflag [#allocation4], 1
    %34 = vsyncpa %s33, 0
    loop: start=0, step=1, limit=4
    $region2: #{tpu_custom_call.1} parent=1 // loop_pre_header
      _
    $region3: #{tpu_custom_call.1} parent=1 // loop_header
      %s36 = sphi 0, %s40
      %p37 = scmp.ge.s32.totalorder %s36, 4
      %s46 = sphi 0, %s48
      %s49 = sphi 0, %s46
      %s50 = sphi 0, %s49
      %s66 = sphi 0, %s50
      %s72 = sphi 0, %s74
      %s75 = sphi 0, %s72
      %s76 = sphi 0, %s75
      %s92 = sphi 0, %s76
      %s96 = sphi 0, %s96
      %s98 = sphi 0, %s96
      %s99 = sphi 0, %s98
      %s113 = sphi 0, %s99
      %s117 = sphi 0, %s117
      %s119 = sphi 0, %s117
      %s120 = sphi 0, %s119
      %s134 = sphi 0, %s120
      %s138 = sphi 0, %s138
      %s140 = sphi 0, %s138
      %s141 = sphi 0, %s140
      %s155 = sphi 0, %s141
      %s159 = sphi 0, %s159
      %s161 = sphi 0, %s159
      %s162 = sphi 0, %s161
      %s176 = sphi 0, %s162
      %s180 = sphi 0, %s180
      %s182 = sphi 0, %s180
      %s183 = sphi 0, %s182
      %s197 = sphi 0, %s183
      %s201 = sphi 0, %s201
      %s203 = sphi 0, %s201
      %s204 = sphi 0, %s203
      %s218 = sphi 0, %s204
      %s222 = sphi 0, %s222
      %s224 = sphi 0, %s222
      %s225 = sphi 0, %s224
      %s239 = sphi 0, %s225
      %s243 = sphi 0, %s243
      %s245 = sphi 0, %s243
      %s246 = sphi 0, %s245
      %s260 = sphi 0, %s246
      %s264 = sphi 0, %s264
      %s266 = sphi 0, %s264
      %s267 = sphi 0, %s266
      %s281 = sphi 0, %s267
      %s285 = sphi 0, %s285
      %s287 = sphi 0, %s285
      %s288 = sphi 0, %s287
      %s302 = sphi 0, %s288
      %s306 = sphi 0, %s306
      %s308 = sphi 0, %s306
      %s309 = sphi 0, %s308
      %s323 = sphi 0, %s309
      %s327 = sphi 0, %s327
      %s329 = sphi 0, %s327
      %s330 = sphi 0, %s329
      %s344 = sphi 0, %s330
      %s348 = sphi 0, %s348
      %s350 = sphi 0, %s348
      %s351 = sphi 0, %s350
      %s365 = sphi 0, %s351
      %s369 = sphi 0, %s369
      %s371 = sphi 0, %s369
      %s372 = sphi 0, %s371
      %s386 = sphi 0, %s372
      %s390 = sphi 0, %s390
      %s392 = sphi 0, %s390
      %s393 = sphi 0, %s392
      %s407 = sphi 0, %s393
      %s411 = sphi 0, %s411
      %s413 = sphi 0, %s411
      %s414 = sphi 0, %s413
      %s428 = sphi 0, %s414
      %s432 = sphi 0, %s432
      %s434 = sphi 0, %s432
      %s435 = sphi 0, %s434
      %s449 = sphi 0, %s435
      %s453 = sphi 0, %s453
      %s455 = sphi 0, %s453
      %s456 = sphi 0, %s455
      %s470 = sphi 0, %s456
      %s474 = sphi 0, %s474
      %s476 = sphi 0, %s474
      %s477 = sphi 0, %s476
      %s491 = sphi 0, %s477
      %s495 = sphi 0, %s495
      %s497 = sphi 0, %s495
      %s498 = sphi 0, %s497
      %s512 = sphi 0, %s498
      %s516 = sphi 0, %s516
      %s518 = sphi 0, %s516
      %s519 = sphi 0, %s518
      %s533 = sphi 0, %s519
      %s537 = sphi 0, %s537
      %s539 = sphi 0, %s537
      %s540 = sphi 0, %s539
      %s554 = sphi 0, %s540
      %s560 = sphi 0, %s562
      %s563 = sphi 0, %s560
      %s564 = sphi 0, %s563
      %s580 = sphi 0, %s564
    $region4: #{tpu_custom_call.1} parent=1 // loop_header_branch
      %39 = sbr.rel (%p37) target = $region8
    $region5: #{tpu_custom_call.1} parent=1 // loop_body
      %s41 = ssub.s32 %s36, 1
      %s42 = ssub.s32 %s36, 2
      %s43 = sadd.s32 %s36, 1
      %s44 = ssub.s32 %s36, %s43
      %p45 = scmp.eq.s32.totalorder %s44, 0
      %s47 = sadd.s32 %s46, 1
      %s48 = scalar_select %p45, %s46, %s47
      %p51 = pneg %p45
      %p52 = scmp.eq.s32.totalorder %s36, 1
      %p53 = por %p51, %p52
      %p54 = scmp.ne.s32.totalorder %s46, %s49
      %p55 = scmp.eq.s32.totalorder %s36, 0
      %p56 = por %p54, %p55
      %p57 = scmp.ne.s32.totalorder %s46, %s49
      %p58 = scmp.eq.s32.totalorder %s41, 1
      %p59 = por %p57, %p58
      %p60 = scmp.ne.s32.totalorder %s49, %s50
      %p61 = scmp.eq.s32.totalorder %s41, 0
      %p62 = por %p60, %p61
      %p63 = scmp.ne.s32.totalorder %s49, %s50
      %p64 = scmp.eq.s32.totalorder %s42, 1
      %p65 = por %p63, %p64
      %p67 = scmp.ne.s32.totalorder %s50, %s66
      %p68 = scmp.eq.s32.totalorder %s42, 0
      %p69 = por %p67, %p68
      %s70 = ssub.s32 %s36, %s43
      %p71 = scmp.eq.s32.totalorder %s70, 0
      %s73 = sadd.s32 %s72, 1
      %s74 = scalar_select %p71, %s72, %s73
      %p77 = pneg %p71
      %p78 = scmp.eq.s32.totalorder %s36, 1
      %p79 = por %p77, %p78
      %p80 = scmp.ne.s32.totalorder %s72, %s75
      %p81 = scmp.eq.s32.totalorder %s36, 0
      %p82 = por %p80, %p81
      %p83 = scmp.ne.s32.totalorder %s72, %s75
      %p84 = scmp.eq.s32.totalorder %s41, 1
      %p85 = por %p83, %p84
      %p86 = scmp.ne.s32.totalorder %s75, %s76
      %p87 = scmp.eq.s32.totalorder %s41, 0
      %p88 = por %p86, %p87
      %p89 = scmp.ne.s32.totalorder %s75, %s76
      %p90 = scmp.eq.s32.totalorder %s42, 1
      %p91 = por %p89, %p90
      %p93 = scmp.ne.s32.totalorder %s76, %s92
      %p94 = scmp.eq.s32.totalorder %s42, 0
      %p95 = por %p93, %p94
      %s97 = sadd.s32 %s96, 1
      %p100 = scmp.eq.s32.totalorder %s36, 1
      %p101 = scmp.ne.s32.totalorder %s96, %s98
      %p102 = scmp.eq.s32.totalorder %s36, 0
      %p103 = por %p101, %p102
      %p104 = scmp.ne.s32.totalorder %s96, %s98
      %p105 = scmp.eq.s32.totalorder %s41, 1
      %p106 = por %p104, %p105
      %p107 = scmp.ne.s32.totalorder %s98, %s99
      %p108 = scmp.eq.s32.totalorder %s41, 0
      %p109 = por %p107, %p108
      %p110 = scmp.ne.s32.totalorder %s98, %s99
      %p111 = scmp.eq.s32.totalorder %s42, 1
      %p112 = por %p110, %p111
      %p114 = scmp.ne.s32.totalorder %s99, %s113
      %p115 = scmp.eq.s32.totalorder %s42, 0
      %p116 = por %p114, %p115
      %s118 = sadd.s32 %s117, 1
      %p121 = scmp.eq.s32.totalorder %s36, 1
      %p122 = scmp.ne.s32.totalorder %s117, %s119
      %p123 = scmp.eq.s32.totalorder %s36, 0
      %p124 = por %p122, %p123
      %p125 = scmp.ne.s32.totalorder %s117, %s119
      %p126 = scmp.eq.s32.totalorder %s41, 1
      %p127 = por %p125, %p126
      %p128 = scmp.ne.s32.totalorder %s119, %s120
      %p129 = scmp.eq.s32.totalorder %s41, 0
      %p130 = por %p128, %p129
      %p131 = scmp.ne.s32.totalorder %s119, %s120
      %p132 = scmp.eq.s32.totalorder %s42, 1
      %p133 = por %p131, %p132
      %p135 = scmp.ne.s32.totalorder %s120, %s134
      %p136 = scmp.eq.s32.totalorder %s42, 0
      %p137 = por %p135, %p136
      %s139 = sadd.s32 %s138, 1
      %p142 = scmp.eq.s32.totalorder %s36, 1
      %p143 = scmp.ne.s32.totalorder %s138, %s140
      %p144 = scmp.eq.s32.totalorder %s36, 0
      %p145 = por %p143, %p144
      %p146 = scmp.ne.s32.totalorder %s138, %s140
      %p147 = scmp.eq.s32.totalorder %s41, 1
      %p148 = por %p146, %p147
      %p149 = scmp.ne.s32.totalorder %s140, %s141
      %p150 = scmp.eq.s32.totalorder %s41, 0
      %p151 = por %p149, %p150
      %p152 = scmp.ne.s32.totalorder %s140, %s141
      %p153 = scmp.eq.s32.totalorder %s42, 1
      %p154 = por %p152, %p153
      %p156 = scmp.ne.s32.totalorder %s141, %s155
      %p157 = scmp.eq.s32.totalorder %s42, 0
      %p158 = por %p156, %p157
      %s160 = sadd.s32 %s159, 1
      %p163 = scmp.eq.s32.totalorder %s36, 1
      %p164 = scmp.ne.s32.totalorder %s159, %s161
      %p165 = scmp.eq.s32.totalorder %s36, 0
      %p166 = por %p164, %p165
      %p167 = scmp.ne.s32.totalorder %s159, %s161
      %p168 = scmp.eq.s32.totalorder %s41, 1
      %p169 = por %p167, %p168
      %p170 = scmp.ne.s32.totalorder %s161, %s162
      %p171 = scmp.eq.s32.totalorder %s41, 0
      %p172 = por %p170, %p171
      %p173 = scmp.ne.s32.totalorder %s161, %s162
      %p174 = scmp.eq.s32.totalorder %s42, 1
      %p175 = por %p173, %p174
      %p177 = scmp.ne.s32.totalorder %s162, %s176
      %p178 = scmp.eq.s32.totalorder %s42, 0
      %p179 = por %p177, %p178
      %s181 = sadd.s32 %s180, 1
      %p184 = scmp.eq.s32.totalorder %s36, 1
      %p185 = scmp.ne.s32.totalorder %s180, %s182
      %p186 = scmp.eq.s32.totalorder %s36, 0
      %p187 = por %p185, %p186
      %p188 = scmp.ne.s32.totalorder %s180, %s182
      %p189 = scmp.eq.s32.totalorder %s41, 1
      %p190 = por %p188, %p189
      %p191 = scmp.ne.s32.totalorder %s182, %s183
      %p192 = scmp.eq.s32.totalorder %s41, 0
      %p193 = por %p191, %p192
      %p194 = scmp.ne.s32.totalorder %s182, %s183
      %p195 = scmp.eq.s32.totalorder %s42, 1
      %p196 = por %p194, %p195
      %p198 = scmp.ne.s32.totalorder %s183, %s197
      %p199 = scmp.eq.s32.totalorder %s42, 0
      %p200 = por %p198, %p199
      %s202 = sadd.s32 %s201, 1
      %p205 = scmp.eq.s32.totalorder %s36, 1
      %p206 = scmp.ne.s32.totalorder %s201, %s203
      %p207 = scmp.eq.s32.totalorder %s36, 0
      %p208 = por %p206, %p207
      %p209 = scmp.ne.s32.totalorder %s201, %s203
      %p210 = scmp.eq.s32.totalorder %s41, 1
      %p211 = por %p209, %p210
      %p212 = scmp.ne.s32.totalorder %s203, %s204
      %p213 = scmp.eq.s32.totalorder %s41, 0
      %p214 = por %p212, %p213
      %p215 = scmp.ne.s32.totalorder %s203, %s204
      %p216 = scmp.eq.s32.totalorder %s42, 1
      %p217 = por %p215, %p216
      %p219 = scmp.ne.s32.totalorder %s204, %s218
      %p220 = scmp.eq.s32.totalorder %s42, 0
      %p221 = por %p219, %p220
      %s223 = sadd.s32 %s222, 1
      %p226 = scmp.eq.s32.totalorder %s36, 1
      %p227 = scmp.ne.s32.totalorder %s222, %s224
      %p228 = scmp.eq.s32.totalorder %s36, 0
      %p229 = por %p227, %p228
      %p230 = scmp.ne.s32.totalorder %s222, %s224
      %p231 = scmp.eq.s32.totalorder %s41, 1
      %p232 = por %p230, %p231
      %p233 = scmp.ne.s32.totalorder %s224, %s225
      %p234 = scmp.eq.s32.totalorder %s41, 0
      %p235 = por %p233, %p234
      %p236 = scmp.ne.s32.totalorder %s224, %s225
      %p237 = scmp.eq.s32.totalorder %s42, 1
      %p238 = por %p236, %p237
      %p240 = scmp.ne.s32.totalorder %s225, %s239
      %p241 = scmp.eq.s32.totalorder %s42, 0
      %p242 = por %p240, %p241
      %s244 = sadd.s32 %s243, 1
      %p247 = scmp.eq.s32.totalorder %s36, 1
      %p248 = scmp.ne.s32.totalorder %s243, %s245
      %p249 = scmp.eq.s32.totalorder %s36, 0
      %p250 = por %p248, %p249
      %p251 = scmp.ne.s32.totalorder %s243, %s245
      %p252 = scmp.eq.s32.totalorder %s41, 1
      %p253 = por %p251, %p252
      %p254 = scmp.ne.s32.totalorder %s245, %s246
      %p255 = scmp.eq.s32.totalorder %s41, 0
      %p256 = por %p254, %p255
      %p257 = scmp.ne.s32.totalorder %s245, %s246
      %p258 = scmp.eq.s32.totalorder %s42, 1
      %p259 = por %p257, %p258
      %p261 = scmp.ne.s32.totalorder %s246, %s260
      %p262 = scmp.eq.s32.totalorder %s42, 0
      %p263 = por %p261, %p262
      %s265 = sadd.s32 %s264, 1
      %p268 = scmp.eq.s32.totalorder %s36, 1
      %p269 = scmp.ne.s32.totalorder %s264, %s266
      %p270 = scmp.eq.s32.totalorder %s36, 0
      %p271 = por %p269, %p270
      %p272 = scmp.ne.s32.totalorder %s264, %s266
      %p273 = scmp.eq.s32.totalorder %s41, 1
      %p274 = por %p272, %p273
      %p275 = scmp.ne.s32.totalorder %s266, %s267
      %p276 = scmp.eq.s32.totalorder %s41, 0
      %p277 = por %p275, %p276
      %p278 = scmp.ne.s32.totalorder %s266, %s267
      %p279 = scmp.eq.s32.totalorder %s42, 1
      %p280 = por %p278, %p279
      %p282 = scmp.ne.s32.totalorder %s267, %s281
      %p283 = scmp.eq.s32.totalorder %s42, 0
      %p284 = por %p282, %p283
      %s286 = sadd.s32 %s285, 1
      %p289 = scmp.eq.s32.totalorder %s36, 1
      %p290 = scmp.ne.s32.totalorder %s285, %s287
      %p291 = scmp.eq.s32.totalorder %s36, 0
      %p292 = por %p290, %p291
      %p293 = scmp.ne.s32.totalorder %s285, %s287
      %p294 = scmp.eq.s32.totalorder %s41, 1
      %p295 = por %p293, %p294
      %p296 = scmp.ne.s32.totalorder %s287, %s288
      %p297 = scmp.eq.s32.totalorder %s41, 0
      %p298 = por %p296, %p297
      %p299 = scmp.ne.s32.totalorder %s287, %s288
      %p300 = scmp.eq.s32.totalorder %s42, 1
      %p301 = por %p299, %p300
      %p303 = scmp.ne.s32.totalorder %s288, %s302
      %p304 = scmp.eq.s32.totalorder %s42, 0
      %p305 = por %p303, %p304
      %s307 = sadd.s32 %s306, 1
      %p310 = scmp.eq.s32.totalorder %s36, 1
      %p311 = scmp.ne.s32.totalorder %s306, %s308
      %p312 = scmp.eq.s32.totalorder %s36, 0
      %p313 = por %p311, %p312
      %p314 = scmp.ne.s32.totalorder %s306, %s308
      %p315 = scmp.eq.s32.totalorder %s41, 1
      %p316 = por %p314, %p315
      %p317 = scmp.ne.s32.totalorder %s308, %s309
      %p318 = scmp.eq.s32.totalorder %s41, 0
      %p319 = por %p317, %p318
      %p320 = scmp.ne.s32.totalorder %s308, %s309
      %p321 = scmp.eq.s32.totalorder %s42, 1
      %p322 = por %p320, %p321
      %p324 = scmp.ne.s32.totalorder %s309, %s323
      %p325 = scmp.eq.s32.totalorder %s42, 0
      %p326 = por %p324, %p325
      %s328 = sadd.s32 %s327, 1
      %p331 = scmp.eq.s32.totalorder %s36, 1
      %p332 = scmp.ne.s32.totalorder %s327, %s329
      %p333 = scmp.eq.s32.totalorder %s36, 0
      %p334 = por %p332, %p333
      %p335 = scmp.ne.s32.totalorder %s327, %s329
      %p336 = scmp.eq.s32.totalorder %s41, 1
      %p337 = por %p335, %p336
      %p338 = scmp.ne.s32.totalorder %s329, %s330
      %p339 = scmp.eq.s32.totalorder %s41, 0
      %p340 = por %p338, %p339
      %p341 = scmp.ne.s32.totalorder %s329, %s330
      %p342 = scmp.eq.s32.totalorder %s42, 1
      %p343 = por %p341, %p342
      %p345 = scmp.ne.s32.totalorder %s330, %s344
      %p346 = scmp.eq.s32.totalorder %s42, 0
      %p347 = por %p345, %p346
      %s349 = sadd.s32 %s348, 1
      %p352 = scmp.eq.s32.totalorder %s36, 1
      %p353 = scmp.ne.s32.totalorder %s348, %s350
      %p354 = scmp.eq.s32.totalorder %s36, 0
      %p355 = por %p353, %p354
      %p356 = scmp.ne.s32.totalorder %s348, %s350
      %p357 = scmp.eq.s32.totalorder %s41, 1
      %p358 = por %p356, %p357
      %p359 = scmp.ne.s32.totalorder %s350, %s351
      %p360 = scmp.eq.s32.totalorder %s41, 0
      %p361 = por %p359, %p360
      %p362 = scmp.ne.s32.totalorder %s350, %s351
      %p363 = scmp.eq.s32.totalorder %s42, 1
      %p364 = por %p362, %p363
      %p366 = scmp.ne.s32.totalorder %s351, %s365
      %p367 = scmp.eq.s32.totalorder %s42, 0
      %p368 = por %p366, %p367
      %s370 = sadd.s32 %s369, 1
      %p373 = scmp.eq.s32.totalorder %s36, 1
      %p374 = scmp.ne.s32.totalorder %s369, %s371
      %p375 = scmp.eq.s32.totalorder %s36, 0
      %p376 = por %p374, %p375
      %p377 = scmp.ne.s32.totalorder %s369, %s371
      %p378 = scmp.eq.s32.totalorder %s41, 1
      %p379 = por %p377, %p378
      %p380 = scmp.ne.s32.totalorder %s371, %s372
      %p381 = scmp.eq.s32.totalorder %s41, 0
      %p382 = por %p380, %p381
      %p383 = scmp.ne.s32.totalorder %s371, %s372
      %p384 = scmp.eq.s32.totalorder %s42, 1
      %p385 = por %p383, %p384
      %p387 = scmp.ne.s32.totalorder %s372, %s386
      %p388 = scmp.eq.s32.totalorder %s42, 0
      %p389 = por %p387, %p388
      %s391 = sadd.s32 %s390, 1
      %p394 = scmp.eq.s32.totalorder %s36, 1
      %p395 = scmp.ne.s32.totalorder %s390, %s392
      %p396 = scmp.eq.s32.totalorder %s36, 0
      %p397 = por %p395, %p396
      %p398 = scmp.ne.s32.totalorder %s390, %s392
      %p399 = scmp.eq.s32.totalorder %s41, 1
      %p400 = por %p398, %p399
      %p401 = scmp.ne.s32.totalorder %s392, %s393
      %p402 = scmp.eq.s32.totalorder %s41, 0
      %p403 = por %p401, %p402
      %p404 = scmp.ne.s32.totalorder %s392, %s393
      %p405 = scmp.eq.s32.totalorder %s42, 1
      %p406 = por %p404, %p405
      %p408 = scmp.ne.s32.totalorder %s393, %s407
      %p409 = scmp.eq.s32.totalorder %s42, 0
      %p410 = por %p408, %p409
      %s412 = sadd.s32 %s411, 1
      %p415 = scmp.eq.s32.totalorder %s36, 1
      %p416 = scmp.ne.s32.totalorder %s411, %s413
      %p417 = scmp.eq.s32.totalorder %s36, 0
      %p418 = por %p416, %p417
      %p419 = scmp.ne.s32.totalorder %s411, %s413
      %p420 = scmp.eq.s32.totalorder %s41, 1
      %p421 = por %p419, %p420
      %p422 = scmp.ne.s32.totalorder %s413, %s414
      %p423 = scmp.eq.s32.totalorder %s41, 0
      %p424 = por %p422, %p423
      %p425 = scmp.ne.s32.totalorder %s413, %s414
      %p426 = scmp.eq.s32.totalorder %s42, 1
      %p427 = por %p425, %p426
      %p429 = scmp.ne.s32.totalorder %s414, %s428
      %p430 = scmp.eq.s32.totalorder %s42, 0
      %p431 = por %p429, %p430
      %s433 = sadd.s32 %s432, 1
      %p436 = scmp.eq.s32.totalorder %s36, 1
      %p437 = scmp.ne.s32.totalorder %s432, %s434
      %p438 = scmp.eq.s32.totalorder %s36, 0
      %p439 = por %p437, %p438
      %p440 = scmp.ne.s32.totalorder %s432, %s434
      %p441 = scmp.eq.s32.totalorder %s41, 1
      %p442 = por %p440, %p441
      %p443 = scmp.ne.s32.totalorder %s434, %s435
      %p444 = scmp.eq.s32.totalorder %s41, 0
      %p445 = por %p443, %p444
      %p446 = scmp.ne.s32.totalorder %s434, %s435
      %p447 = scmp.eq.s32.totalorder %s42, 1
      %p448 = por %p446, %p447
      %p450 = scmp.ne.s32.totalorder %s435, %s449
      %p451 = scmp.eq.s32.totalorder %s42, 0
      %p452 = por %p450, %p451
      %s454 = sadd.s32 %s453, 1
      %p457 = scmp.eq.s32.totalorder %s36, 1
      %p458 = scmp.ne.s32.totalorder %s453, %s455
      %p459 = scmp.eq.s32.totalorder %s36, 0
      %p460 = por %p458, %p459
      %p461 = scmp.ne.s32.totalorder %s453, %s455
      %p462 = scmp.eq.s32.totalorder %s41, 1
      %p463 = por %p461, %p462
      %p464 = scmp.ne.s32.totalorder %s455, %s456
      %p465 = scmp.eq.s32.totalorder %s41, 0
      %p466 = por %p464, %p465
      %p467 = scmp.ne.s32.totalorder %s455, %s456
      %p468 = scmp.eq.s32.totalorder %s42, 1
      %p469 = por %p467, %p468
      %p471 = scmp.ne.s32.totalorder %s456, %s470
      %p472 = scmp.eq.s32.totalorder %s42, 0
      %p473 = por %p471, %p472
      %s475 = sadd.s32 %s474, 1
      %p478 = scmp.eq.s32.totalorder %s36, 1
      %p479 = scmp.ne.s32.totalorder %s474, %s476
      %p480 = scmp.eq.s32.totalorder %s36, 0
      %p481 = por %p479, %p480
      %p482 = scmp.ne.s32.totalorder %s474, %s476
      %p483 = scmp.eq.s32.totalorder %s41, 1
      %p484 = por %p482, %p483
      %p485 = scmp.ne.s32.totalorder %s476, %s477
      %p486 = scmp.eq.s32.totalorder %s41, 0
      %p487 = por %p485, %p486
      %p488 = scmp.ne.s32.totalorder %s476, %s477
      %p489 = scmp.eq.s32.totalorder %s42, 1
      %p490 = por %p488, %p489
      %p492 = scmp.ne.s32.totalorder %s477, %s491
      %p493 = scmp.eq.s32.totalorder %s42, 0
      %p494 = por %p492, %p493
      %s496 = sadd.s32 %s495, 1
      %p499 = scmp.eq.s32.totalorder %s36, 1
      %p500 = scmp.ne.s32.totalorder %s495, %s497
      %p501 = scmp.eq.s32.totalorder %s36, 0
      %p502 = por %p500, %p501
      %p503 = scmp.ne.s32.totalorder %s495, %s497
      %p504 = scmp.eq.s32.totalorder %s41, 1
      %p505 = por %p503, %p504
      %p506 = scmp.ne.s32.totalorder %s497, %s498
      %p507 = scmp.eq.s32.totalorder %s41, 0
      %p508 = por %p506, %p507
      %p509 = scmp.ne.s32.totalorder %s497, %s498
      %p510 = scmp.eq.s32.totalorder %s42, 1
      %p511 = por %p509, %p510
      %p513 = scmp.ne.s32.totalorder %s498, %s512
      %p514 = scmp.eq.s32.totalorder %s42, 0
      %p515 = por %p513, %p514
      %s517 = sadd.s32 %s516, 1
      %p520 = scmp.eq.s32.totalorder %s36, 1
      %p521 = scmp.ne.s32.totalorder %s516, %s518
      %p522 = scmp.eq.s32.totalorder %s36, 0
      %p523 = por %p521, %p522
      %p524 = scmp.ne.s32.totalorder %s516, %s518
      %p525 = scmp.eq.s32.totalorder %s41, 1
      %p526 = por %p524, %p525
      %p527 = scmp.ne.s32.totalorder %s518, %s519
      %p528 = scmp.eq.s32.totalorder %s41, 0
      %p529 = por %p527, %p528
      %p530 = scmp.ne.s32.totalorder %s518, %s519
      %p531 = scmp.eq.s32.totalorder %s42, 1
      %p532 = por %p530, %p531
      %p534 = scmp.ne.s32.totalorder %s519, %s533
      %p535 = scmp.eq.s32.totalorder %s42, 0
      %p536 = por %p534, %p535
      %s538 = sadd.s32 %s537, 1
      %p541 = scmp.eq.s32.totalorder %s36, 1
      %p542 = scmp.ne.s32.totalorder %s537, %s539
      %p543 = scmp.eq.s32.totalorder %s36, 0
      %p544 = por %p542, %p543
      %p545 = scmp.ne.s32.totalorder %s537, %s539
      %p546 = scmp.eq.s32.totalorder %s41, 1
      %p547 = por %p545, %p546
      %p548 = scmp.ne.s32.totalorder %s539, %s540
      %p549 = scmp.eq.s32.totalorder %s41, 0
      %p550 = por %p548, %p549
      %p551 = scmp.ne.s32.totalorder %s539, %s540
      %p552 = scmp.eq.s32.totalorder %s42, 1
      %p553 = por %p551, %p552
      %p555 = scmp.ne.s32.totalorder %s540, %s554
      %p556 = scmp.eq.s32.totalorder %s42, 0
      %p557 = por %p555, %p556
      %s558 = ssub.s32 %s36, %s43
      %p559 = scmp.eq.s32.totalorder %s558, 0
      %s561 = sadd.s32 %s560, 1
      %s562 = scalar_select %p559, %s560, %s561
      %p565 = pneg %p559
      %p566 = scmp.eq.s32.totalorder %s36, 1
      %p567 = por %p565, %p566
      %p568 = scmp.ne.s32.totalorder %s560, %s563
      %p569 = scmp.eq.s32.totalorder %s36, 0
      %p570 = por %p568, %p569
      %p571 = scmp.ne.s32.totalorder %s560, %s563
      %p572 = scmp.eq.s32.totalorder %s41, 1
      %p573 = por %p571, %p572
      %p574 = scmp.ne.s32.totalorder %s563, %s564
      %p575 = scmp.eq.s32.totalorder %s41, 0
      %p576 = por %p574, %p575
      %p577 = scmp.ne.s32.totalorder %s563, %s564
      %p578 = scmp.eq.s32.totalorder %s42, 1
      %p579 = por %p577, %p578
      %p581 = scmp.ne.s32.totalorder %s564, %s580
      %p582 = scmp.eq.s32.totalorder %s42, 0
      %p583 = por %p581, %p582
      %p584 = scmp.le.s32.totalorder 1, %s36
      %p585 = scmp.lt.s32.totalorder %s36, 3
      %p586 = pnand %p584, %p585
      %p587 = pneg %p586
      // Predicated region
      $region9: #{tpu_custom_call.1} parent=5 // pred_check
        _
      $region10: #{tpu_custom_call.1} parent=5 // pred_check_branch
        %589 = sbr.rel (%p586) target = $region12
      $region11: #{tpu_custom_call.1} parent=5 // pred_region
        %s590 = ssub.s32 %s36, 1
        // Predicated region
        $region13: #{tpu_custom_call.1} parent=11 // pred_check
          %p591 = pneg %p109
        $region14: #{tpu_custom_call.1} parent=11 // pred_check_branch
          %593 = sbr.rel (%p591) target = $region16
        $region15: #{tpu_custom_call.1} parent=11 // pred_region
          _
        $region16: #{tpu_custom_call.1} parent=11 // pred_fallthru
          _
        // Predicated region
        $region17: #{tpu_custom_call.1} parent=11 // pred_check
          %p594 = pneg %p130
        $region18: #{tpu_custom_call.1} parent=11 // pred_check_branch
          %596 = sbr.rel (%p594) target = $region20
        $region19: #{tpu_custom_call.1} parent=11 // pred_region
          _
        $region20: #{tpu_custom_call.1} parent=11 // pred_fallthru
          _
        // Predicated region
        $region21: #{tpu_custom_call.1} parent=11 // pred_check
          %p597 = pneg %p151
        $region22: #{tpu_custom_call.1} parent=11 // pred_check_branch
          %599 = sbr.rel (%p597) target = $region24
        $region23: #{tpu_custom_call.1} parent=11 // pred_region
          _
        $region24: #{tpu_custom_call.1} parent=11 // pred_fallthru
          _
        // Predicated region
        $region25: #{tpu_custom_call.1} parent=11 // pred_check
          %p600 = pneg %p172
        $region26: #{tpu_custom_call.1} parent=11 // pred_check_branch
          %602 = sbr.rel (%p600) target = $region28
        $region27: #{tpu_custom_call.1} parent=11 // pred_region
          %s604 = ssub.s32 16, 16
          %605 = vsyncadd [#allocation3], %s604
          %s607 = sshll.u32 [#allocation2], 4
          %s608 = int_to_ptr.vmem [resolvable:$true] %s607
          %610 = dma.hbm_to_vmem [thread:$0]  %s5, 16, %s608, [#allocation3]
        $region28: #{tpu_custom_call.1} parent=11 // pred_fallthru
          _
        // Predicated region
        $region29: #{tpu_custom_call.1} parent=11 // pred_check
          %p611 = pneg %p193
        $region30: #{tpu_custom_call.1} parent=11 // pred_check_branch
          %613 = sbr.rel (%p611) target = $region32
        $region31: #{tpu_custom_call.1} parent=11 // pred_region
          _
        $region32: #{tpu_custom_call.1} parent=11 // pred_fallthru
          _
        // Predicated region
        $region33: #{tpu_custom_call.1} parent=11 // pred_check
          %p614 = pneg %p214
        $region34: #{tpu_custom_call.1} parent=11 // pred_check_branch
          %616 = sbr.rel (%p614) target = $region36
        $region35: #{tpu_custom_call.1} parent=11 // pred_region
          %s618 = ssub.s32 16, 16
          %619 = vsyncadd [#allocation6], %s618
          %s621 = sshll.u32 [#allocation5], 4
          %s622 = int_to_ptr.vmem [resolvable:$true] %s621
          %624 = dma.hbm_to_vmem [thread:$0]  %s7, 16, %s622, [#allocation6]
        $region36: #{tpu_custom_call.1} parent=11 // pred_fallthru
          _
        // Predicated region
        $region37: #{tpu_custom_call.1} parent=11 // pred_check
          %p625 = pneg %p235
        $region38: #{tpu_custom_call.1} parent=11 // pred_check_branch
          %627 = sbr.rel (%p625) target = $region40
        $region39: #{tpu_custom_call.1} parent=11 // pred_region
          %s629 = ssub.s32 16, 16
          %630 = vsyncadd [#allocation6], %s629
          %s632 = sshll.u32 [#allocation7], 4
          %s633 = int_to_ptr.vmem [resolvable:$true] %s632
          %635 = dma.hbm_to_vmem [thread:$0]  %s8, 16, %s633, [#allocation6]
        $region40: #{tpu_custom_call.1} parent=11 // pred_fallthru
          _
        // Predicated region
        $region41: #{tpu_custom_call.1} parent=11 // pred_check
          %p636 = pneg %p256
        $region42: #{tpu_custom_call.1} parent=11 // pred_check_branch
          %638 = sbr.rel (%p636) target = $region44
        $region43: #{tpu_custom_call.1} parent=11 // pred_region
          %s640 = ssub.s32 16, 16
          %641 = vsyncadd [#allocation9], %s640
          %s643 = sshll.u32 [#allocation8], 4
          %s644 = int_to_ptr.vmem [resolvable:$true] %s643
          %646 = dma.hbm_to_vmem [thread:$0]  %s9, 16, %s644, [#allocation9]
        $region44: #{tpu_custom_call.1} parent=11 // pred_fallthru
          _
        // Predicated region
        $region45: #{tpu_custom_call.1} parent=11 // pred_check
          %p647 = pneg %p277
        $region46: #{tpu_custom_call.1} parent=11 // pred_check_branch
          %649 = sbr.rel (%p647) target = $region48
        $region47: #{tpu_custom_call.1} parent=11 // pred_region
          _
        $region48: #{tpu_custom_call.1} parent=11 // pred_fallthru
          _
        // Predicated region
        $region49: #{tpu_custom_call.1} parent=11 // pred_check
          %p650 = pneg %p298
        $region50: #{tpu_custom_call.1} parent=11 // pred_check_branch
          %652 = sbr.rel (%p650) target = $region52
        $region51: #{tpu_custom_call.1} parent=11 // pred_region
          %s654 = ssub.s32 16, 16
          %655 = vsyncadd [#allocation9], %s654
          %s657 = sshll.u32 [#allocation10], 4
          %s658 = int_to_ptr.vmem [resolvable:$true] %s657
          %660 = dma.hbm_to_vmem [thread:$0]  %s11, 16, %s658, [#allocation9]
        $region52: #{tpu_custom_call.1} parent=11 // pred_fallthru
          _
        // Predicated region
        $region53: #{tpu_custom_call.1} parent=11 // pred_check
          %p661 = pneg %p319
        $region54: #{tpu_custom_call.1} parent=11 // pred_check_branch
          %663 = sbr.rel (%p661) target = $region56
        $region55: #{tpu_custom_call.1} parent=11 // pred_region
          _
        $region56: #{tpu_custom_call.1} parent=11 // pred_fallthru
          _
        // Predicated region
        $region57: #{tpu_custom_call.1} parent=11 // pred_check
          %p664 = pneg %p340
        $region58: #{tpu_custom_call.1} parent=11 // pred_check_branch
          %666 = sbr.rel (%p664) target = $region60
        $region59: #{tpu_custom_call.1} parent=11 // pred_region
          _
        $region60: #{tpu_custom_call.1} parent=11 // pred_fallthru
          _
        // Predicated region
        $region61: #{tpu_custom_call.1} parent=11 // pred_check
          %p667 = pneg %p361
        $region62: #{tpu_custom_call.1} parent=11 // pred_check_branch
          %669 = sbr.rel (%p667) target = $region64
        $region63: #{tpu_custom_call.1} parent=11 // pred_region
          _
        $region64: #{tpu_custom_call.1} parent=11 // pred_fallthru
          _
        // Predicated region
        $region65: #{tpu_custom_call.1} parent=11 // pred_check
          %p670 = pneg %p382
        $region66: #{tpu_custom_call.1} parent=11 // pred_check_branch
          %672 = sbr.rel (%p670) target = $region68
        $region67: #{tpu_custom_call.1} parent=11 // pred_region
          _
        $region68: #{tpu_custom_call.1} parent=11 // pred_fallthru
          _
        // Predicated region
        $region69: #{tpu_custom_call.1} parent=11 // pred_check
          %p673 = pneg %p403
        $region70: #{tpu_custom_call.1} parent=11 // pred_check_branch
          %675 = sbr.rel (%p673) target = $region72
        $region71: #{tpu_custom_call.1} parent=11 // pred_region
          _
        $region72: #{tpu_custom_call.1} parent=11 // pred_fallthru
          _
        // Predicated region
        $region73: #{tpu_custom_call.1} parent=11 // pred_check
          %p676 = pneg %p424
        $region74: #{tpu_custom_call.1} parent=11 // pred_check_branch
          %678 = sbr.rel (%p676) target = $region76
        $region75: #{tpu_custom_call.1} parent=11 // pred_region
          _
        $region76: #{tpu_custom_call.1} parent=11 // pred_fallthru
          _
        // Predicated region
        $region77: #{tpu_custom_call.1} parent=11 // pred_check
          %p679 = pneg %p445
        $region78: #{tpu_custom_call.1} parent=11 // pred_check_branch
          %681 = sbr.rel (%p679) target = $region80
        $region79: #{tpu_custom_call.1} parent=11 // pred_region
          _
        $region80: #{tpu_custom_call.1} parent=11 // pred_fallthru
          _
        // Predicated region
        $region81: #{tpu_custom_call.1} parent=11 // pred_check
          %p682 = pneg %p466
        $region82: #{tpu_custom_call.1} parent=11 // pred_check_branch
          %684 = sbr.rel (%p682) target = $region84
        $region83: #{tpu_custom_call.1} parent=11 // pred_region
          _
        $region84: #{tpu_custom_call.1} parent=11 // pred_fallthru
          _
        // Predicated region
        $region85: #{tpu_custom_call.1} parent=11 // pred_check
          %p685 = pneg %p487
        $region86: #{tpu_custom_call.1} parent=11 // pred_check_branch
          %687 = sbr.rel (%p685) target = $region88
        $region87: #{tpu_custom_call.1} parent=11 // pred_region
          _
        $region88: #{tpu_custom_call.1} parent=11 // pred_fallthru
          _
        // Predicated region
        $region89: #{tpu_custom_call.1} parent=11 // pred_check
          %p688 = pneg %p508
        $region90: #{tpu_custom_call.1} parent=11 // pred_check_branch
          %690 = sbr.rel (%p688) target = $region92
        $region91: #{tpu_custom_call.1} parent=11 // pred_region
          _
        $region92: #{tpu_custom_call.1} parent=11 // pred_fallthru
          _
        // Predicated region
        $region93: #{tpu_custom_call.1} parent=11 // pred_check
          %p691 = pneg %p529
        $region94: #{tpu_custom_call.1} parent=11 // pred_check_branch
          %693 = sbr.rel (%p691) target = $region96
        $region95: #{tpu_custom_call.1} parent=11 // pred_region
          _
        $region96: #{tpu_custom_call.1} parent=11 // pred_fallthru
          _
        // Predicated region
        $region97: #{tpu_custom_call.1} parent=11 // pred_check
          %p694 = pneg %p550
        $region98: #{tpu_custom_call.1} parent=11 // pred_check_branch
          %696 = sbr.rel (%p694) target = $region100
        $region99: #{tpu_custom_call.1} parent=11 // pred_region
          _
        $region100: #{tpu_custom_call.1} parent=11 // pred_fallthru
          _
      $region12: #{tpu_custom_call.1} parent=5 // pred_fallthru
        _
      %p697 = scmp.lt.s32.totalorder %s36, 2
      // Predicated region
      $region101: #{tpu_custom_call.1} parent=5 // pred_check
        %p698 = pneg %p697
      $region102: #{tpu_custom_call.1} parent=5 // pred_check_branch
        %700 = sbr.rel (%p698) target = $region104
      $region103: #{tpu_custom_call.1} parent=5 // pred_region
        // Predicated region
        $region105: #{tpu_custom_call.1} parent=103 // pred_check
          %p701 = pneg %p56
        $region106: #{tpu_custom_call.1} parent=103 // pred_check_branch
          %703 = sbr.rel (%p701) target = $region108
        $region107: #{tpu_custom_call.1} parent=103 // pred_region
          %p704 = scmp.lt.s32.totalorder %s36, 1
          %s705 = scalar_select %p704, %s36, 1
          %s706 = smul.addr %s705, 8
          %s707 = scalar_lea.vmem %s0, %s706
        $region108: #{tpu_custom_call.1} parent=103 // pred_fallthru
          _
        // Predicated region
        $region109: #{tpu_custom_call.1} parent=103 // pred_check
          %p708 = pneg %p82
        $region110: #{tpu_custom_call.1} parent=103 // pred_check_branch
          %710 = sbr.rel (%p708) target = $region112
        $region111: #{tpu_custom_call.1} parent=103 // pred_region
          %p711 = scmp.lt.s32.totalorder %s36, 1
          %s712 = scalar_select %p711, %s36, 1
          %s713 = smul.addr %s712, 2
          %s714 = smul.addr %s713, 8
          %s715 = scalar_lea.vmem %s1, %s714
        $region112: #{tpu_custom_call.1} parent=103 // pred_fallthru
          _
      $region104: #{tpu_custom_call.1} parent=5 // pred_fallthru
        _
      %p716 = scmp.le.s32.totalorder 1, %s36
      %p717 = scmp.lt.s32.totalorder %s36, 3
      %p718 = pnand %p716, %p717
      %p719 = pneg %p718
      // Predicated region
      $region113: #{tpu_custom_call.1} parent=5 // pred_check
        _
      $region114: #{tpu_custom_call.1} parent=5 // pred_check_branch
        %721 = sbr.rel (%p718) target = $region116
      $region115: #{tpu_custom_call.1} parent=5 // pred_region
        %s722 = ssub.s32 %s36, 1
        // Predicated region
        $region117: #{tpu_custom_call.1} parent=115 // pred_check
          %p723 = pneg %p172
        $region118: #{tpu_custom_call.1} parent=115 // pred_check_branch
          %725 = sbr.rel (%p723) target = $region120
        $region119: #{tpu_custom_call.1} parent=115 // pred_region
          %726 = dma.done [#allocation3], 16
        $region120: #{tpu_custom_call.1} parent=115 // pred_fallthru
          _
        // Predicated region
        $region121: #{tpu_custom_call.1} parent=115 // pred_check
          %p727 = pneg %p214
        $region122: #{tpu_custom_call.1} parent=115 // pred_check_branch
          %729 = sbr.rel (%p727) target = $region124
        $region123: #{tpu_custom_call.1} parent=115 // pred_region
          %730 = dma.done [#allocation6], 16
        $region124: #{tpu_custom_call.1} parent=115 // pred_fallthru
          _
        // Predicated region
        $region125: #{tpu_custom_call.1} parent=115 // pred_check
          %p731 = pneg %p235
        $region126: #{tpu_custom_call.1} parent=115 // pred_check_branch
          %733 = sbr.rel (%p731) target = $region128
        $region127: #{tpu_custom_call.1} parent=115 // pred_region
          %734 = dma.done [#allocation6], 16
        $region128: #{tpu_custom_call.1} parent=115 // pred_fallthru
          _
        // Predicated region
        $region129: #{tpu_custom_call.1} parent=115 // pred_check
          %p735 = pneg %p256
        $region130: #{tpu_custom_call.1} parent=115 // pred_check_branch
          %737 = sbr.rel (%p735) target = $region132
        $region131: #{tpu_custom_call.1} parent=115 // pred_region
          %738 = dma.done [#allocation9], 16
        $region132: #{tpu_custom_call.1} parent=115 // pred_fallthru
          _
        // Predicated region
        $region133: #{tpu_custom_call.1} parent=115 // pred_check
          %p739 = pneg %p298
        $region134: #{tpu_custom_call.1} parent=115 // pred_check_branch
          %741 = sbr.rel (%p739) target = $region136
        $region135: #{tpu_custom_call.1} parent=115 // pred_region
          %742 = dma.done [#allocation9], 16
        $region136: #{tpu_custom_call.1} parent=115 // pred_fallthru
          _
        %p743 = scmp.lt.s32.totalorder %s41, 1
        %s744 = scalar_select %p743, %s41, 1
        %s745 = smul.addr %s744, 8
        %s746 = scalar_lea.vmem %s0, %s745
        %p747 = pneg %p62
        %p748 = pneg %p59
        %p749 = scmp.lt.s32.totalorder %s41, 1
        %s750 = scalar_select %p749, %s41, 1
        %s751 = smul.addr %s750, 2
        %s752 = smul.addr %s751, 8
        %s753 = scalar_lea.vmem %s1, %s752
        %p754 = pneg %p88
        %p755 = pneg %p85
        %p756 = pneg %p109
        %p757 = pneg %p106
        %p758 = pneg %p130
        %p759 = pneg %p127
        %p760 = pneg %p151
        %p761 = pneg %p148
        %p762 = pneg %p172
        %p763 = pneg %p169
        %p764 = pneg %p193
        %p765 = pneg %p190
        %p766 = pneg %p214
        %p767 = pneg %p211
        %p768 = pneg %p235
        %p769 = pneg %p232
        %p770 = pneg %p256
        %p771 = pneg %p253
        %p772 = pneg %p277
        %p773 = pneg %p274
        %p774 = pneg %p298
        %p775 = pneg %p295
        %p776 = pneg %p319
        %p777 = pneg %p316
        %p778 = pneg %p340
        %p779 = pneg %p337
        %p780 = pneg %p361
        %p781 = pneg %p358
        %p782 = pneg %p382
        %p783 = pneg %p379
        %p784 = pneg %p403
        %p785 = pneg %p400
        %p786 = pneg %p424
        %p787 = pneg %p421
        %p788 = pneg %p445
        %p789 = pneg %p442
        %p790 = pneg %p466
        %p791 = pneg %p463
        %p792 = pneg %p487
        %p793 = pneg %p484
        %p794 = pneg %p508
        %p795 = pneg %p505
        %p796 = pneg %p529
        %p797 = pneg %p526
        %p798 = pneg %p550
        %p799 = pneg %p547
        %p800 = pneg %p576
        %p801 = pneg %p573
        %s802 = sand.u32 %s563, 1
        %s803 = scalar_lea.sflag [#allocation4], %s802
        %s804 = sand.u32 %s563, 1
        %s805 = smul.addr %s804, 8
        %s806 = scalar_lea.vmem [#allocation11], %s805
        %p807 = scmp.lt.s32.totalorder %s41, 1
        %s808 = scalar_select %p807, %s41, 1
        %s809 = smul.addr %s808, 8
        %s810 = scalar_lea.vmem %s0, %s809
        %p811 = scmp.lt.s32.totalorder %s41, 1
        %s812 = scalar_select %p811, %s41, 1
        %s813 = smul.addr %s812, 2
        %s814 = smul.addr %s813, 8
        %s815 = scalar_lea.vmem %s1, %s814
        %v817 = vld [vmem:[%s810] sm:$0xff]
        %v818 = vld [vmem:[%s815] sm:$0xff]
        %v819 = vld [vmem:[%s815 + $0x8] sm:$0x3]
        %v820 = vpack.c.bf16 %v817, %v817
        %v821 = vld [vmem:[%s2] sm:$0xf]
        %v822 = vld [vmem:[%s2 + $0x4] sm:$0xf]
        %v823 = vld [vmem:[%s2 + $0x8] sm:$0xf]
        %v824 = vld [vmem:[%s2 + $0xc] sm:$0xf]
        %v825 = vld [vmem:[%s3] sm:$0x1]
        %v827 = vlaneseq
        %v828 = vshrl.u32 %v827, 7
        %v829 = vsub.s32 0, %v828
        %v830 = vrot.slane %v825, %v829
        %v836 = vunpack.c.l.b16 %v821
        %v837 = vunpack.c.l.b16 %v822
        %v838 = vunpack.c.l.b16 %v823
        %v839 = vunpack.c.l.b16 %v824
        %v840 = vpack.c.b16 %v837, %v836
        %v841 = vpack.c.b16 %v839, %v838
        %vm844 = vcmask 261120
        %v846 = vsel %vm844, %v820, 0
        %848 = vmatprep.subr.bf16.mxu0 0
        %849 = vmatpush1.bf16.msra.mxu0 %v840
        %850 = vmatprep.subr.bf16.mxu0 0
        %851 = vmatpush1.bf16.msra.mxu0 %v841
        %852 = vmatprep.subr.bf16.mxu0 0
        %853 = vmatpush1.bf16.msra.mxu0 0
        %854 = vmatprep.subr.bf16.mxu0 0
        %855 = vmatpush1.bf16.msra.mxu0 0
        %856 = vmatprep.subr.bf16.mxu0 0
        %857 = vmatpush1.bf16.msra.mxu0 0
        %858 = vmatprep.subr.bf16.mxu0 0
        %859 = vmatpush1.bf16.msra.mxu0 0
        %860 = vmatprep.subr.bf16.mxu0 0
        %861 = vmatpush1.bf16.msra.mxu0 0
        %862 = vmatprep.subr.bf16.mxu0 0
        %863 = vmatpush1.bf16.msra.mxu0 0
        %864 = vmatprep.subr.bf16.mxu0 0
        %865 = vmatpush1.bf16.msra.mxu0 0
        %866 = vmatprep.subr.bf16.mxu0 0
        %867 = vmatpush1.bf16.msra.mxu0 0
        %868 = vmatprep.subr.bf16.mxu0 0
        %869 = vmatpush1.bf16.msra.mxu0 0
        %870 = vmatprep.subr.bf16.mxu0 0
        %871 = vmatpush1.bf16.msra.mxu0 0
        %872 = vmatprep.subr.bf16.mxu0 0
        %873 = vmatpush1.bf16.msra.mxu0 0
        %874 = vmatprep.subr.bf16.mxu0 0
        %875 = vmatpush1.bf16.msra.mxu0 0
        %876 = vmatprep.subr.bf16.mxu0 0
        %877 = vmatpush1.bf16.msra.mxu0 0
        %878 = vmatprep.subr.bf16.mxu0 0
        %879 = vmatpush1.bf16.msra.mxu0 0
        %880 = vmatprep.mubr.bf16.mxu0 0
        %881 = vmatmul.mubr.bf16.gmra.mrb[0].mxu0 %v846
        %v882 = vpop.f32.mrb[0].mxu0
        %v883 = vadd.f32 %v830, %v882
        %v884 = vpop.f32.mrb[0].mxu0
        %v885 = vpop.f32.mrb[0].mxu0
        %v886 = vpop.f32.mrb[0].mxu0
        %887 = vdwg.mxu0
        %v888 = vld [vmem:[%s4] sm:$0xf]
        %v889 = vld [vmem:[%s4 + $0x4] sm:$0xf]
        %v890 = vld [vmem:[%s4 + $0x8] sm:$0xf]
        %v891 = vld [vmem:[%s4 + $0xc] sm:$0xf]
        %v892 = vld [vmem:[#allocation2] sm:$0x1]
        %v894 = vlaneseq
        %v895 = vshrl.u32 %v894, 7
        %v896 = vsub.s32 0, %v895
        %v897 = vrot.slane %v892, %v896
        %v903 = vunpack.c.l.b16 %v888
        %v904 = vunpack.c.l.b16 %v889
        %v905 = vunpack.c.l.b16 %v890
        %v906 = vunpack.c.l.b16 %v891
        %v907 = vpack.c.b16 %v904, %v903
        %v908 = vpack.c.b16 %v906, %v905
        %911 = vmatprep.subr.bf16.mxu0 0
        %912 = vmatpush1.bf16.msra.mxu0 %v907
        %913 = vmatprep.subr.bf16.mxu0 0
        %914 = vmatpush1.bf16.msra.mxu0 %v908
        %915 = vmatprep.subr.bf16.mxu0 0
        %916 = vmatpush1.bf16.msra.mxu0 0
        %917 = vmatprep.subr.bf16.mxu0 0
        %918 = vmatpush1.bf16.msra.mxu0 0
        %919 = vmatprep.subr.bf16.mxu0 0
        %920 = vmatpush1.bf16.msra.mxu0 0
        %921 = vmatprep.subr.bf16.mxu0 0
        %922 = vmatpush1.bf16.msra.mxu0 0
        %923 = vmatprep.subr.bf16.mxu0 0
        %924 = vmatpush1.bf16.msra.mxu0 0
        %925 = vmatprep.subr.bf16.mxu0 0
        %926 = vmatpush1.bf16.msra.mxu0 0
        %927 = vmatprep.subr.bf16.mxu0 0
        %928 = vmatpush1.bf16.msra.mxu0 0
        %929 = vmatprep.subr.bf16.mxu0 0
        %930 = vmatpush1.bf16.msra.mxu0 0
        %931 = vmatprep.subr.bf16.mxu0 0
        %932 = vmatpush1.bf16.msra.mxu0 0
        %933 = vmatprep.subr.bf16.mxu0 0
        %934 = vmatpush1.bf16.msra.mxu0 0
        %935 = vmatprep.subr.bf16.mxu0 0
        %936 = vmatpush1.bf16.msra.mxu0 0
        %937 = vmatprep.subr.bf16.mxu0 0
        %938 = vmatpush1.bf16.msra.mxu0 0
        %939 = vmatprep.subr.bf16.mxu0 0
        %940 = vmatpush1.bf16.msra.mxu0 0
        %941 = vmatprep.subr.bf16.mxu0 0
        %942 = vmatpush1.bf16.msra.mxu0 0
        %943 = vmatprep.mubr.bf16.mxu0 0
        %944 = vmatmul.mubr.bf16.gmra.mrb[0].mxu0 %v846
        %v945 = vpop.f32.mrb[0].mxu0
        %v946 = vadd.f32 %v897, %v945
        %v947 = vpop.f32.mrb[0].mxu0
        %v948 = vpop.f32.mrb[0].mxu0
        %v949 = vpop.f32.mrb[0].mxu0
        %950 = vdwg.mxu0
        %v951 = vpack.c.bf16 %v883, %v883
        %v952 = vpack.c.bf16 %v946, %v946
        %vm953 = vcmask 64512
        %v955 = vsel %vm953, %v951, 0
        %v958 = vsel %vm953, %v952, 0
        %960 = vmatprep.subr.bf16.mxu0 0
        %961 = vmatpush1.bf16.xpose.msra.mxu0 %v958
        %962 = vmatprep.subr.bf16.mxu0 0
        %963 = vmatpush1.bf16.xpose.msra.mxu0 0
        %964 = vmatprep.subr.bf16.mxu0 0
        %965 = vmatpush1.bf16.xpose.msra.mxu0 0
        %966 = vmatprep.subr.bf16.mxu0 0
        %967 = vmatpush1.bf16.xpose.msra.mxu0 0
        %968 = vmatprep.subr.bf16.mxu0 0
        %969 = vmatpush1.bf16.xpose.msra.mxu0 0
        %970 = vmatprep.subr.bf16.mxu0 0
        %971 = vmatpush1.bf16.xpose.msra.mxu0 0
        %972 = vmatprep.subr.bf16.mxu0 0
        %973 = vmatpush1.bf16.xpose.msra.mxu0 0
        %974 = vmatprep.subr.bf16.mxu0 0
        %975 = vmatpush1.bf16.xpose.msra.mxu0 0
        %976 = vmatprep.subr.bf16.mxu0 0
        %977 = vmatpush1.bf16.xpose.msra.mxu0 0
        %978 = vmatprep.subr.bf16.mxu0 0
        %979 = vmatpush1.bf16.xpose.msra.mxu0 0
        %980 = vmatprep.subr.bf16.mxu0 0
        %981 = vmatpush1.bf16.xpose.msra.mxu0 0
        %982 = vmatprep.subr.bf16.mxu0 0
        %983 = vmatpush1.bf16.xpose.msra.mxu0 0
        %984 = vmatprep.subr.bf16.mxu0 0
        %985 = vmatpush1.bf16.xpose.msra.mxu0 0
        %986 = vmatprep.subr.bf16.mxu0 0
        %987 = vmatpush1.bf16.xpose.msra.mxu0 0
        %988 = vmatprep.subr.bf16.mxu0 0
        %989 = vmatpush1.bf16.xpose.msra.mxu0 0
        %990 = vmatprep.subr.bf16.mxu0 0
        %991 = vmatpush1.bf16.xpose.msra.mxu0 0
        %992 = vmatprep.mubr.bf16.mxu0 0
        %993 = vmatmul.mubr.bf16.gmra.mrb[0].mxu0 %v955
        %v994 = vpop.f32.mrb[0].mxu0
        %v995 = vadd.f32 0.0, %v994
        %v996 = vpop.f32.mrb[0].mxu0
        %v997 = vpop.f32.mrb[0].mxu0
        %v998 = vpop.f32.mrb[0].mxu0
        %999 = vdwg.mxu0
        %v1000 = vsel %vm953, %v995, -inf
        %1001 = vmax.xlane.f32.xlu0 %v1000
        %v1002 = vpop.xlane.xlu0 %1001
        %v1003 = vsub.f32 %v995, %v1002
        %v1004 = vmul.f32 %v1003, 1.442695
        %v1005 = vpow.pop %v1004
        %v1006 = vsel %vm953, %v1005, 0.0
        %1007 = vadd.xlane.f32.xlu0 %v1006
        %v1008 = vpop.xlane.xlu0 %1007
        %v1009 = vrcp.pop %v1008
        %v1010 = vmul.f32 %v1005, %v1009
        %v1011 = vpack.c.bf16 %v1010, %v1010
        %1013 = vrot.lane.b32.xlu0 %v952, 96
        %v1014 = vpop.permute.xlu0 %1013
        %v1016 = vsel %vm953, %v1011, 0
        %vm1018 = vcmask 1043456
        %v1020 = vsel %vm1018, %v1014, 0
        %1022 = vmatprep.subr.bf16.mxu0 0
        %1023 = vmatpush1.bf16.msra.mxu0 %v1020
        %1024 = vmatprep.subr.bf16.mxu0 0
        %1025 = vmatpush1.bf16.msra.mxu0 0
        %1026 = vmatprep.subr.bf16.mxu0 0
        %1027 = vmatpush1.bf16.msra.mxu0 0
        %1028 = vmatprep.subr.bf16.mxu0 0
        %1029 = vmatpush1.bf16.msra.mxu0 0
        %1030 = vmatprep.subr.bf16.mxu0 0
        %1031 = vmatpush1.bf16.msra.mxu0 0
        %1032 = vmatprep.subr.bf16.mxu0 0
        %1033 = vmatpush1.bf16.msra.mxu0 0
        %1034 = vmatprep.subr.bf16.mxu0 0
        %1035 = vmatpush1.bf16.msra.mxu0 0
        %1036 = vmatprep.subr.bf16.mxu0 0
        %1037 = vmatpush1.bf16.msra.mxu0 0
        %1038 = vmatprep.subr.bf16.mxu0 0
        %1039 = vmatpush1.bf16.msra.mxu0 0
        %1040 = vmatprep.subr.bf16.mxu0 0
        %1041 = vmatpush1.bf16.msra.mxu0 0
        %1042 = vmatprep.subr.bf16.mxu0 0
        %1043 = vmatpush1.bf16.msra.mxu0 0
        %1044 = vmatprep.subr.bf16.mxu0 0
        %1045 = vmatpush1.bf16.msra.mxu0 0
        %1046 = vmatprep.subr.bf16.mxu0 0
        %1047 = vmatpush1.bf16.msra.mxu0 0
        %1048 = vmatprep.subr.bf16.mxu0 0
        %1049 = vmatpush1.bf16.msra.mxu0 0
        %1050 = vmatprep.subr.bf16.mxu0 0
        %1051 = vmatpush1.bf16.msra.mxu0 0
        %1052 = vmatprep.subr.bf16.mxu0 0
        %1053 = vmatpush1.bf16.msra.mxu0 0
        %1054 = vmatprep.mubr.bf16.mxu0 0
        %1055 = vmatmul.mubr.bf16.gmra.mrb[0].mxu0 %v1016
        %v1056 = vpop.f32.mrb[0].mxu0
        %v1057 = vadd.f32 0.0, %v1056
        %v1058 = vpop.f32.mrb[0].mxu0
        %v1059 = vpop.f32.mrb[0].mxu0
        %v1060 = vpop.f32.mrb[0].mxu0
        %1061 = vdwg.mxu0
        %1063 = vrot.lane.b32.xlu0 %v951, 120
        %v1064 = vpop.permute.xlu0 %1063
        %1065 = vrot.lane.b32.xlu0 %v952, 120
        %v1066 = vpop.permute.xlu0 %1065
        %v1068 = vsel %vm953, %v1064, 0
        %v1071 = vsel %vm953, %v1066, 0
        %1073 = vmatprep.subr.bf16.mxu0 0
        %1074 = vmatpush1.bf16.xpose.msra.mxu0 %v1071
        %1075 = vmatprep.subr.bf16.mxu0 0
        %1076 = vmatpush1.bf16.xpose.msra.mxu0 0
        %1077 = vmatprep.subr.bf16.mxu0 0
        %1078 = vmatpush1.bf16.xpose.msra.mxu0 0
        %1079 = vmatprep.subr.bf16.mxu0 0
        %1080 = vmatpush1.bf16.xpose.msra.mxu0 0
        %1081 = vmatprep.subr.bf16.mxu0 0
        %1082 = vmatpush1.bf16.xpose.msra.mxu0 0
        %1083 = vmatprep.subr.bf16.mxu0 0
        %1084 = vmatpush1.bf16.xpose.msra.mxu0 0
        %1085 = vmatprep.subr.bf16.mxu0 0
        %1086 = vmatpush1.bf16.xpose.msra.mxu0 0
        %1087 = vmatprep.subr.bf16.mxu0 0
        %1088 = vmatpush1.bf16.xpose.msra.mxu0 0
        %1089 = vmatprep.subr.bf16.mxu0 0
        %1090 = vmatpush1.bf16.xpose.msra.mxu0 0
        %1091 = vmatprep.subr.bf16.mxu0 0
        %1092 = vmatpush1.bf16.xpose.msra.mxu0 0
        %1093 = vmatprep.subr.bf16.mxu0 0
        %1094 = vmatpush1.bf16.xpose.msra.mxu0 0
        %1095 = vmatprep.subr.bf16.mxu0 0
        %1096 = vmatpush1.bf16.xpose.msra.mxu0 0
        %1097 = vmatprep.subr.bf16.mxu0 0
        %1098 = vmatpush1.bf16.xpose.msra.mxu0 0
        %1099 = vmatprep.subr.bf16.mxu0 0
        %1100 = vmatpush1.bf16.xpose.msra.mxu0 0
        %1101 = vmatprep.subr.bf16.mxu0 0
        %1102 = vmatpush1.bf16.xpose.msra.mxu0 0
        %1103 = vmatprep.subr.bf16.mxu0 0
        %1104 = vmatpush1.bf16.xpose.msra.mxu0 0
        %1105 = vmatprep.mubr.bf16.mxu0 0
        %1106 = vmatmul.mubr.bf16.gmra.mrb[0].mxu0 %v1068
        %v1107 = vpop.f32.mrb[0].mxu0
        %v1108 = vadd.f32 0.0, %v1107
        %v1109 = vpop.f32.mrb[0].mxu0
        %v1110 = vpop.f32.mrb[0].mxu0
        %v1111 = vpop.f32.mrb[0].mxu0
        %1112 = vdwg.mxu0
        %v1113 = vsel %vm953, %v1108, -inf
        %1114 = vmax.xlane.f32.xlu0 %v1113
        %v1115 = vpop.xlane.xlu0 %1114
        %v1116 = vsub.f32 %v1108, %v1115
        %v1117 = vmul.f32 %v1116, 1.442695
        %v1118 = vpow.pop %v1117
        %v1119 = vsel %vm953, %v1118, 0.0
        %1120 = vadd.xlane.f32.xlu0 %v1119
        %v1121 = vpop.xlane.xlu0 %1120
        %v1122 = vrcp.pop %v1121
        %v1123 = vmul.f32 %v1118, %v1122
        %v1124 = vpack.c.bf16 %v1123, %v1123
        %1125 = vrot.lane.b32.xlu0 %v952, 88
        %v1126 = vpop.permute.xlu0 %1125
        %v1128 = vsel %vm953, %v1124, 0
        %v1131 = vsel %vm1018, %v1126, 0
        %1133 = vmatprep.subr.bf16.mxu0 0
        %1134 = vmatpush1.bf16.msra.mxu0 %v1131
        %1135 = vmatprep.subr.bf16.mxu0 0
        %1136 = vmatpush1.bf16.msra.mxu0 0
        %1137 = vmatprep.subr.bf16.mxu0 0
        %1138 = vmatpush1.bf16.msra.mxu0 0
        %1139 = vmatprep.subr.bf16.mxu0 0
        %1140 = vmatpush1.bf16.msra.mxu0 0
        %1141 = vmatprep.subr.bf16.mxu0 0
        %1142 = vmatpush1.bf16.msra.mxu0 0
        %1143 = vmatprep.subr.bf16.mxu0 0
        %1144 = vmatpush1.bf16.msra.mxu0 0
        %1145 = vmatprep.subr.bf16.mxu0 0
        %1146 = vmatpush1.bf16.msra.mxu0 0
        %1147 = vmatprep.subr.bf16.mxu0 0
        %1148 = vmatpush1.bf16.msra.mxu0 0
        %1149 = vmatprep.subr.bf16.mxu0 0
        %1150 = vmatpush1.bf16.msra.mxu0 0
        %1151 = vmatprep.subr.bf16.mxu0 0
        %1152 = vmatpush1.bf16.msra.mxu0 0
        %1153 = vmatprep.subr.bf16.mxu0 0
        %1154 = vmatpush1.bf16.msra.mxu0 0
        %1155 = vmatprep.subr.bf16.mxu0 0
        %1156 = vmatpush1.bf16.msra.mxu0 0
        %1157 = vmatprep.subr.bf16.mxu0 0
        %1158 = vmatpush1.bf16.msra.mxu0 0
        %1159 = vmatprep.subr.bf16.mxu0 0
        %1160 = vmatpush1.bf16.msra.mxu0 0
        %1161 = vmatprep.subr.bf16.mxu0 0
        %1162 = vmatpush1.bf16.msra.mxu0 0
        %1163 = vmatprep.subr.bf16.mxu0 0
        %1164 = vmatpush1.bf16.msra.mxu0 0
        %1165 = vmatprep.mubr.bf16.mxu0 0
        %1166 = vmatmul.mubr.bf16.gmra.mrb[0].mxu0 %v1128
        %v1167 = vpop.f32.mrb[0].mxu0
        %v1168 = vadd.f32 0.0, %v1167
        %v1169 = vpop.f32.mrb[0].mxu0
        %v1170 = vpop.f32.mrb[0].mxu0
        %v1171 = vpop.f32.mrb[0].mxu0
        %1172 = vdwg.mxu0
        %1173 = vrot.lane.b32.xlu0 %v951, 112
        %v1174 = vpop.permute.xlu0 %1173
        %1175 = vrot.lane.b32.xlu0 %v952, 112
        %v1176 = vpop.permute.xlu0 %1175
        %v1178 = vsel %vm953, %v1174, 0
        %v1181 = vsel %vm953, %v1176, 0
        %1183 = vmatprep.subr.bf16.mxu0 0
        %1184 = vmatpush1.bf16.xpose.msra.mxu0 %v1181
        %1185 = vmatprep.subr.bf16.mxu0 0
        %1186 = vmatpush1.bf16.xpose.msra.mxu0 0
        %1187 = vmatprep.subr.bf16.mxu0 0
        %1188 = vmatpush1.bf16.xpose.msra.mxu0 0
        %1189 = vmatprep.subr.bf16.mxu0 0
        %1190 = vmatpush1.bf16.xpose.msra.mxu0 0
        %1191 = vmatprep.subr.bf16.mxu0 0
        %1192 = vmatpush1.bf16.xpose.msra.mxu0 0
        %1193 = vmatprep.subr.bf16.mxu0 0
        %1194 = vmatpush1.bf16.xpose.msra.mxu0 0
        %1195 = vmatprep.subr.bf16.mxu0 0
        %1196 = vmatpush1.bf16.xpose.msra.mxu0 0
        %1197 = vmatprep.subr.bf16.mxu0 0
        %1198 = vmatpush1.bf16.xpose.msra.mxu0 0
        %1199 = vmatprep.subr.bf16.mxu0 0
        %1200 = vmatpush1.bf16.xpose.msra.mxu0 0
        %1201 = vmatprep.subr.bf16.mxu0 0
        %1202 = vmatpush1.bf16.xpose.msra.mxu0 0
        %1203 = vmatprep.subr.bf16.mxu0 0
        %1204 = vmatpush1.bf16.xpose.msra.mxu0 0
        %1205 = vmatprep.subr.bf16.mxu0 0
        %1206 = vmatpush1.bf16.xpose.msra.mxu0 0
        %1207 = vmatprep.subr.bf16.mxu0 0
        %1208 = vmatpush1.bf16.xpose.msra.mxu0 0
        %1209 = vmatprep.subr.bf16.mxu0 0
        %1210 = vmatpush1.bf16.xpose.msra.mxu0 0
        %1211 = vmatprep.subr.bf16.mxu0 0
        %1212 = vmatpush1.bf16.xpose.msra.mxu0 0
        %1213 = vmatprep.subr.bf16.mxu0 0
        %1214 = vmatpush1.bf16.xpose.msra.mxu0 0
        %1215 = vmatprep.mubr.bf16.mxu0 0
        %1216 = vmatmul.mubr.bf16.gmra.mrb[0].mxu0 %v1178
        %v1217 = vpop.f32.mrb[0].mxu0
        %v1218 = vadd.f32 0.0, %v1217
        %v1219 = vpop.f32.mrb[0].mxu0
        %v1220 = vpop.f32.mrb[0].mxu0
        %v1221 = vpop.f32.mrb[0].mxu0
        %1222 = vdwg.mxu0
        %v1223 = vsel %vm953, %v1218, -inf
        %1224 = vmax.xlane.f32.xlu0 %v1223
        %v1225 = vpop.xlane.xlu0 %1224
        %v1226 = vsub.f32 %v1218, %v1225
        %v1227 = vmul.f32 %v1226, 1.442695
        %v1228 = vpow.pop %v1227
        %v1229 = vsel %vm953, %v1228, 0.0
        %1230 = vadd.xlane.f32.xlu0 %v1229
        %v1231 = vpop.xlane.xlu0 %1230
        %v1232 = vrcp.pop %v1231
        %v1233 = vmul.f32 %v1228, %v1232
        %v1234 = vpack.c.bf16 %v1233, %v1233
        %1235 = vrot.lane.b32.xlu0 %v952, 80
        %v1236 = vpop.permute.xlu0 %1235
        %v1238 = vsel %vm953, %v1234, 0
        %v1241 = vsel %vm1018, %v1236, 0
        %1243 = vmatprep.subr.bf16.mxu0 0
        %1244 = vmatpush1.bf16.msra.mxu0 %v1241
        %1245 = vmatprep.subr.bf16.mxu0 0
        %1246 = vmatpush1.bf16.msra.mxu0 0
        %1247 = vmatprep.subr.bf16.mxu0 0
        %1248 = vmatpush1.bf16.msra.mxu0 0
        %1249 = vmatprep.subr.bf16.mxu0 0
        %1250 = vmatpush1.bf16.msra.mxu0 0
        %1251 = vmatprep.subr.bf16.mxu0 0
        %1252 = vmatpush1.bf16.msra.mxu0 0
        %1253 = vmatprep.subr.bf16.mxu0 0
        %1254 = vmatpush1.bf16.msra.mxu0 0
        %1255 = vmatprep.subr.bf16.mxu0 0
        %1256 = vmatpush1.bf16.msra.mxu0 0
        %1257 = vmatprep.subr.bf16.mxu0 0
        %1258 = vmatpush1.bf16.msra.mxu0 0
        %1259 = vmatprep.subr.bf16.mxu0 0
        %1260 = vmatpush1.bf16.msra.mxu0 0
        %1261 = vmatprep.subr.bf16.mxu0 0
        %1262 = vmatpush1.bf16.msra.mxu0 0
        %1263 = vmatprep.subr.bf16.mxu0 0
        %1264 = vmatpush1.bf16.msra.mxu0 0
        %1265 = vmatprep.subr.bf16.mxu0 0
        %1266 = vmatpush1.bf16.msra.mxu0 0
        %1267 = vmatprep.subr.bf16.mxu0 0
        %1268 = vmatpush1.bf16.msra.mxu0 0
        %1269 = vmatprep.subr.bf16.mxu0 0
        %1270 = vmatpush1.bf16.msra.mxu0 0
        %1271 = vmatprep.subr.bf16.mxu0 0
        %1272 = vmatpush1.bf16.msra.mxu0 0
        %1273 = vmatprep.subr.bf16.mxu0 0
        %1274 = vmatpush1.bf16.msra.mxu0 0
        %1275 = vmatprep.mubr.bf16.mxu0 0
        %1276 = vmatmul.mubr.bf16.gmra.mrb[0].mxu0 %v1238
        %v1277 = vpop.f32.mrb[0].mxu0
        %v1278 = vadd.f32 0.0, %v1277
        %v1279 = vpop.f32.mrb[0].mxu0
        %v1280 = vpop.f32.mrb[0].mxu0
        %v1281 = vpop.f32.mrb[0].mxu0
        %1282 = vdwg.mxu0
        %1283 = vrot.lane.b32.xlu0 %v951, 104
        %v1284 = vpop.permute.xlu0 %1283
        %1285 = vrot.lane.b32.xlu0 %v952, 104
        %v1286 = vpop.permute.xlu0 %1285
        %v1288 = vsel %vm953, %v1284, 0
        %v1291 = vsel %vm953, %v1286, 0
        %1293 = vmatprep.subr.bf16.mxu0 0
        %1294 = vmatpush1.bf16.xpose.msra.mxu0 %v1291
        %1295 = vmatprep.subr.bf16.mxu0 0
        %1296 = vmatpush1.bf16.xpose.msra.mxu0 0
        %1297 = vmatprep.subr.bf16.mxu0 0
        %1298 = vmatpush1.bf16.xpose.msra.mxu0 0
        %1299 = vmatprep.subr.bf16.mxu0 0
        %1300 = vmatpush1.bf16.xpose.msra.mxu0 0
        %1301 = vmatprep.subr.bf16.mxu0 0
        %1302 = vmatpush1.bf16.xpose.msra.mxu0 0
        %1303 = vmatprep.subr.bf16.mxu0 0
        %1304 = vmatpush1.bf16.xpose.msra.mxu0 0
        %1305 = vmatprep.subr.bf16.mxu0 0
        %1306 = vmatpush1.bf16.xpose.msra.mxu0 0
        %1307 = vmatprep.subr.bf16.mxu0 0
        %1308 = vmatpush1.bf16.xpose.msra.mxu0 0
        %1309 = vmatprep.subr.bf16.mxu0 0
        %1310 = vmatpush1.bf16.xpose.msra.mxu0 0
        %1311 = vmatprep.subr.bf16.mxu0 0
        %1312 = vmatpush1.bf16.xpose.msra.mxu0 0
        %1313 = vmatprep.subr.bf16.mxu0 0
        %1314 = vmatpush1.bf16.xpose.msra.mxu0 0
        %1315 = vmatprep.subr.bf16.mxu0 0
        %1316 = vmatpush1.bf16.xpose.msra.mxu0 0
        %1317 = vmatprep.subr.bf16.mxu0 0
        %1318 = vmatpush1.bf16.xpose.msra.mxu0 0
        %1319 = vmatprep.subr.bf16.mxu0 0
        %1320 = vmatpush1.bf16.xpose.msra.mxu0 0
        %1321 = vmatprep.subr.bf16.mxu0 0
        %1322 = vmatpush1.bf16.xpose.msra.mxu0 0
        %1323 = vmatprep.subr.bf16.mxu0 0
        %1324 = vmatpush1.bf16.xpose.msra.mxu0 0
        %1325 = vmatprep.mubr.bf16.mxu0 0
        %1326 = vmatmul.mubr.bf16.gmra.mrb[0].mxu0 %v1288
        %v1327 = vpop.f32.mrb[0].mxu0
        %v1328 = vadd.f32 0.0, %v1327
        %v1329 = vpop.f32.mrb[0].mxu0
        %v1330 = vpop.f32.mrb[0].mxu0
        %v1331 = vpop.f32.mrb[0].mxu0
        %1332 = vdwg.mxu0
        %v1333 = vsel %vm953, %v1328, -inf
        %1334 = vmax.xlane.f32.xlu0 %v1333
        %v1335 = vpop.xlane.xlu0 %1334
        %v1336 = vsub.f32 %v1328, %v1335
        %v1337 = vmul.f32 %v1336, 1.442695
        %v1338 = vpow.pop %v1337
        %v1339 = vsel %vm953, %v1338, 0.0
        %1340 = vadd.xlane.f32.xlu0 %v1339
        %v1341 = vpop.xlane.xlu0 %1340
        %v1342 = vrcp.pop %v1341
        %v1343 = vmul.f32 %v1338, %v1342
        %v1344 = vpack.c.bf16 %v1343, %v1343
        %1345 = vrot.lane.b32.xlu0 %v952, 72
        %v1346 = vpop.permute.xlu0 %1345
        %v1348 = vsel %vm953, %v1344, 0
        %v1351 = vsel %vm1018, %v1346, 0
        %1353 = vmatprep.subr.bf16.mxu0 0
        %1354 = vmatpush1.bf16.msra.mxu0 %v1351
        %1355 = vmatprep.subr.bf16.mxu0 0
        %1356 = vmatpush1.bf16.msra.mxu0 0
        %1357 = vmatprep.subr.bf16.mxu0 0
        %1358 = vmatpush1.bf16.msra.mxu0 0
        %1359 = vmatprep.subr.bf16.mxu0 0
        %1360 = vmatpush1.bf16.msra.mxu0 0
        %1361 = vmatprep.subr.bf16.mxu0 0
        %1362 = vmatpush1.bf16.msra.mxu0 0
        %1363 = vmatprep.subr.bf16.mxu0 0
        %1364 = vmatpush1.bf16.msra.mxu0 0
        %1365 = vmatprep.subr.bf16.mxu0 0
        %1366 = vmatpush1.bf16.msra.mxu0 0
        %1367 = vmatprep.subr.bf16.mxu0 0
        %1368 = vmatpush1.bf16.msra.mxu0 0
        %1369 = vmatprep.subr.bf16.mxu0 0
        %1370 = vmatpush1.bf16.msra.mxu0 0
        %1371 = vmatprep.subr.bf16.mxu0 0
        %1372 = vmatpush1.bf16.msra.mxu0 0
        %1373 = vmatprep.subr.bf16.mxu0 0
        %1374 = vmatpush1.bf16.msra.mxu0 0
        %1375 = vmatprep.subr.bf16.mxu0 0
        %1376 = vmatpush1.bf16.msra.mxu0 0
        %1377 = vmatprep.subr.bf16.mxu0 0
        %1378 = vmatpush1.bf16.msra.mxu0 0
        %1379 = vmatprep.subr.bf16.mxu0 0
        %1380 = vmatpush1.bf16.msra.mxu0 0
        %1381 = vmatprep.subr.bf16.mxu0 0
        %1382 = vmatpush1.bf16.msra.mxu0 0
        %1383 = vmatprep.subr.bf16.mxu0 0
        %1384 = vmatpush1.bf16.msra.mxu0 0
        %1385 = vmatprep.mubr.bf16.mxu0 0
        %1386 = vmatmul.mubr.bf16.gmra.mrb[0].mxu0 %v1348
        %v1387 = vpop.f32.mrb[0].mxu0
        %v1388 = vadd.f32 0.0, %v1387
        %v1389 = vpop.f32.mrb[0].mxu0
        %v1390 = vpop.f32.mrb[0].mxu0
        %v1391 = vpop.f32.mrb[0].mxu0
        %1392 = vdwg.mxu0
        %1394 = vrot.lane.b32.xlu0 %v1168, 8
        %v1395 = vpop.permute.xlu0 %1394
        %1398 = vrot.lane.b32.xlu0 %v1278, 16
        %v1399 = vpop.permute.xlu0 %1398
        %1402 = vrot.lane.b32.xlu0 %v1388, 24
        %v1403 = vpop.permute.xlu0 %1402
        %v1405 = vsel %vm953, %v1057, %v1395
        %vm1406 = vcmask 130048
        %v1407 = vsel %vm1406, %v1405, %v1399
        %vm1408 = vcmask 195584
        %v1409 = vsel %vm1408, %v1407, %v1403
        %v1410 = vpack.c.bf16 %v1409, %v1409
        %v1411 = vld [vmem:[%s6] sm:$0xf]
        %v1412 = vld [vmem:[%s6 + $0x4] sm:$0xf]
        %v1413 = vld [vmem:[%s6 + $0x8] sm:$0xf]
        %v1414 = vld [vmem:[%s6 + $0xc] sm:$0xf]
        %v1415 = vld [vmem:[#allocation5] sm:$0x1]
        %v1417 = vlaneseq
        %v1418 = vshrl.u32 %v1417, 7
        %v1419 = vsub.s32 0, %v1418
        %v1420 = vrot.slane %v1415, %v1419
        %v1426 = vunpack.c.l.b16 %v1411
        %v1427 = vunpack.c.l.b16 %v1412
        %v1428 = vunpack.c.l.b16 %v1413
        %v1429 = vunpack.c.l.b16 %v1414
        %v1430 = vpack.c.b16 %v1427, %v1426
        %v1431 = vpack.c.b16 %v1429, %v1428
        %v1435 = vsel %vm844, %v1410, 0
        %1437 = vmatprep.subr.bf16.mxu0 0
        %1438 = vmatpush1.bf16.msra.mxu0 %v1430
        %1439 = vmatprep.subr.bf16.mxu0 0
        %1440 = vmatpush1.bf16.msra.mxu0 %v1431
        %1441 = vmatprep.subr.bf16.mxu0 0
        %1442 = vmatpush1.bf16.msra.mxu0 0
        %1443 = vmatprep.subr.bf16.mxu0 0
        %1444 = vmatpush1.bf16.msra.mxu0 0
        %1445 = vmatprep.subr.bf16.mxu0 0
        %1446 = vmatpush1.bf16.msra.mxu0 0
        %1447 = vmatprep.subr.bf16.mxu0 0
        %1448 = vmatpush1.bf16.msra.mxu0 0
        %1449 = vmatprep.subr.bf16.mxu0 0
        %1450 = vmatpush1.bf16.msra.mxu0 0
        %1451 = vmatprep.subr.bf16.mxu0 0
        %1452 = vmatpush1.bf16.msra.mxu0 0
        %1453 = vmatprep.subr.bf16.mxu0 0
        %1454 = vmatpush1.bf16.msra.mxu0 0
        %1455 = vmatprep.subr.bf16.mxu0 0
        %1456 = vmatpush1.bf16.msra.mxu0 0
        %1457 = vmatprep.subr.bf16.mxu0 0
        %1458 = vmatpush1.bf16.msra.mxu0 0
        %1459 = vmatprep.subr.bf16.mxu0 0
        %1460 = vmatpush1.bf16.msra.mxu0 0
        %1461 = vmatprep.subr.bf16.mxu0 0
        %1462 = vmatpush1.bf16.msra.mxu0 0
        %1463 = vmatprep.subr.bf16.mxu0 0
        %1464 = vmatpush1.bf16.msra.mxu0 0
        %1465 = vmatprep.subr.bf16.mxu0 0
        %1466 = vmatpush1.bf16.msra.mxu0 0
        %1467 = vmatprep.subr.bf16.mxu0 0
        %1468 = vmatpush1.bf16.msra.mxu0 0
        %1469 = vmatprep.mubr.bf16.mxu0 0
        %1470 = vmatmul.mubr.bf16.gmra.mrb[0].mxu0 %v1435
        %v1471 = vpop.f32.mrb[0].mxu0
        %v1472 = vadd.f32 %v1420, %v1471
        %v1473 = vpop.f32.mrb[0].mxu0
        %v1474 = vpop.f32.mrb[0].mxu0
        %v1475 = vpop.f32.mrb[0].mxu0
        %1476 = vdwg.mxu0
        %v1477 = vadd.f32 %v1472, %v817
        %v1478 = vsel %vm844, %v1477, 0.0
        %1479 = vadd.xlane.f32.xlu0 %v1478
        %v1480 = vpop.xlane.xlu0 %1479
        %v1481 = vrcp.pop 32.0
        %v1482 = vmul.f32 %v1480, %v1481
        %v1483 = vsub.f32 %v1477, %v1482
        %v1484 = vmul.f32 %v1483, %v1483
        %v1485 = vsel %vm844, %v1484, 0.0
        %1486 = vadd.xlane.f32.xlu0 %v1485
        %v1487 = vpop.xlane.xlu0 %1486
        %v1488 = vmul.f32 %v1487, %v1481
        %v1489 = vadd.f32 %v1488, 1e-05
        %v1490 = vrsqrt.pop %v1489
        %v1491 = vmul.f32 %v1483, %v1490
        %v1492 = vld [vmem:[#allocation7] sm:$0x1]
        %v1494 = vlaneseq
        %v1495 = vshrl.u32 %v1494, 7
        %v1496 = vsub.s32 0, %v1495
        %v1497 = vrot.slane %v1492, %v1496
        %v1499 = vmul.f32 %v1491, %v1497
        %v1500 = vld [vmem:[#allocation8] sm:$0x1]
        %v1502 = vlaneseq
        %v1503 = vshrl.u32 %v1502, 7
        %v1504 = vsub.s32 0, %v1503
        %v1505 = vrot.slane %v1500, %v1504
        %v1507 = vadd.f32 %v1499, %v1505
        %v1508 = vpack.c.bf16 %v1507, %v1507
        %v1509 = vld [vmem:[%s10] sm:$0xf]
        %v1510 = vld [vmem:[%s10 + $0x4] sm:$0xf]
        %v1511 = vld [vmem:[%s10 + $0x8] sm:$0xf]
        %v1512 = vld [vmem:[%s10 + $0xc] sm:$0xf]
        %v1513 = vld [vmem:[#allocation10] sm:$0x1]
        %v1515 = vlaneseq
        %v1516 = vshrl.u32 %v1515, 7
        %v1517 = vsub.s32 0, %v1516
        %v1518 = vrot.slane %v1513, %v1517
        %v1524 = vunpack.c.l.b16 %v1509
        %v1525 = vunpack.c.l.b16 %v1510
        %v1526 = vunpack.c.l.b16 %v1511
        %v1527 = vunpack.c.l.b16 %v1512
        %v1528 = vpack.c.b16 %v1525, %v1524
        %v1529 = vpack.c.b16 %v1527, %v1526
        %v1533 = vsel %vm844, %v1508, 0
        %1535 = vmatprep.subr.bf16.mxu0 0
        %1536 = vmatpush1.bf16.msra.mxu0 %v1528
        %1537 = vmatprep.subr.bf16.mxu0 0
        %1538 = vmatpush1.bf16.msra.mxu0 %v1529
        %1539 = vmatprep.subr.bf16.mxu0 0
        %1540 = vmatpush1.bf16.msra.mxu0 0
        %1541 = vmatprep.subr.bf16.mxu0 0
        %1542 = vmatpush1.bf16.msra.mxu0 0
        %1543 = vmatprep.subr.bf16.mxu0 0
        %1544 = vmatpush1.bf16.msra.mxu0 0
        %1545 = vmatprep.subr.bf16.mxu0 0
        %1546 = vmatpush1.bf16.msra.mxu0 0
        %1547 = vmatprep.subr.bf16.mxu0 0
        %1548 = vmatpush1.bf16.msra.mxu0 0
        %1549 = vmatprep.subr.bf16.mxu0 0
        %1550 = vmatpush1.bf16.msra.mxu0 0
        %1551 = vmatprep.subr.bf16.mxu0 0
        %1552 = vmatpush1.bf16.msra.mxu0 0
        %1553 = vmatprep.subr.bf16.mxu0 0
        %1554 = vmatpush1.bf16.msra.mxu0 0
        %1555 = vmatprep.subr.bf16.mxu0 0
        %1556 = vmatpush1.bf16.msra.mxu0 0
        %1557 = vmatprep.subr.bf16.mxu0 0
        %1558 = vmatpush1.bf16.msra.mxu0 0
        %1559 = vmatprep.subr.bf16.mxu0 0
        %1560 = vmatpush1.bf16.msra.mxu0 0
        %1561 = vmatprep.subr.bf16.mxu0 0
        %1562 = vmatpush1.bf16.msra.mxu0 0
        %1563 = vmatprep.subr.bf16.mxu0 0
        %1564 = vmatpush1.bf16.msra.mxu0 0
        %1565 = vmatprep.subr.bf16.mxu0 0
        %1566 = vmatpush1.bf16.msra.mxu0 0
        %1567 = vmatprep.mubr.bf16.mxu0 0
        %1568 = vmatmul.mubr.bf16.gmra.mrb[0].mxu0 %v1533
        %v1569 = vpop.f32.mrb[0].mxu0
        %v1570 = vadd.f32 %v1518, %v1569
        %v1571 = vpop.f32.mrb[0].mxu0
        %v1572 = vpop.f32.mrb[0].mxu0
        %v1573 = vpop.f32.mrb[0].mxu0
        %1574 = vdwg.mxu0
        %v1575 = vpack.c.bf16 %v819, %v818
        %v1576 = vld [vmem:[%s12] sm:$0xf]
        %v1577 = vld [vmem:[%s12 + $0x4] sm:$0xf]
        %v1578 = vld [vmem:[%s12 + $0x8] sm:$0xf]
        %v1579 = vld [vmem:[%s12 + $0xc] sm:$0xf]
        %v1580 = vld [vmem:[%s13] sm:$0x1]
        %v1582 = vlaneseq
        %v1583 = vshrl.u32 %v1582, 7
        %v1584 = vsub.s32 0, %v1583
        %v1585 = vrot.slane %v1580, %v1584
        %v1591 = vunpack.c.l.b16 %v1576
        %v1592 = vunpack.c.l.b16 %v1577
        %v1593 = vunpack.c.l.b16 %v1578
        %v1594 = vunpack.c.l.b16 %v1579
        %v1595 = vpack.c.b16 %v1592, %v1591
        %v1596 = vpack.c.b16 %v1594, %v1593
        %v1600 = vsel %vm844, %v1575, 0
        %1602 = vmatprep.subr.bf16.mxu0 0
        %1603 = vmatpush1.bf16.msra.mxu0 %v1595
        %1604 = vmatprep.subr.bf16.mxu0 0
        %1605 = vmatpush1.bf16.msra.mxu0 %v1596
        %1606 = vmatprep.subr.bf16.mxu0 0
        %1607 = vmatpush1.bf16.msra.mxu0 0
        %1608 = vmatprep.subr.bf16.mxu0 0
        %1609 = vmatpush1.bf16.msra.mxu0 0
        %1610 = vmatprep.subr.bf16.mxu0 0
        %1611 = vmatpush1.bf16.msra.mxu0 0
        %1612 = vmatprep.subr.bf16.mxu0 0
        %1613 = vmatpush1.bf16.msra.mxu0 0
        %1614 = vmatprep.subr.bf16.mxu0 0
        %1615 = vmatpush1.bf16.msra.mxu0 0
        %1616 = vmatprep.subr.bf16.mxu0 0
        %1617 = vmatpush1.bf16.msra.mxu0 0
        %1618 = vmatprep.subr.bf16.mxu0 0
        %1619 = vmatpush1.bf16.msra.mxu0 0
        %1620 = vmatprep.subr.bf16.mxu0 0
        %1621 = vmatpush1.bf16.msra.mxu0 0
        %1622 = vmatprep.subr.bf16.mxu0 0
        %1623 = vmatpush1.bf16.msra.mxu0 0
        %1624 = vmatprep.subr.bf16.mxu0 0
        %1625 = vmatpush1.bf16.msra.mxu0 0
        %1626 = vmatprep.subr.bf16.mxu0 0
        %1627 = vmatpush1.bf16.msra.mxu0 0
        %1628 = vmatprep.subr.bf16.mxu0 0
        %1629 = vmatpush1.bf16.msra.mxu0 0
        %1630 = vmatprep.subr.bf16.mxu0 0
        %1631 = vmatpush1.bf16.msra.mxu0 0
        %1632 = vmatprep.subr.bf16.mxu0 0
        %1633 = vmatpush1.bf16.msra.mxu0 0
        %1634 = vmatprep.mubr.bf16.mxu0 0
        %1635 = vmatmul.mubr.bf16.gmra.mrb[0].mxu0 %v1600
        %v1636 = vpop.f32.mrb[0].mxu0
        %v1637 = vadd.f32 %v1585, %v1636
        %v1638 = vpop.f32.mrb[0].mxu0
        %v1639 = vpop.f32.mrb[0].mxu0
        %v1640 = vadd.f32 %v1585, %v1639
        %v1641 = vpop.f32.mrb[0].mxu0
        %1642 = vdwg.mxu0
        %v1643 = vpack.c.bf16 %v1570, %v1570
        %v1644 = vpack.c.bf16 %v1640, %v1637
        %v1646 = vsel %vm953, %v1643, 0
        %v1649 = vsel %vm953, %v1644, 0
        %1651 = vmatprep.subr.bf16.mxu0 0
        %1652 = vmatpush1.bf16.xpose.msra.mxu0 %v1649
        %1653 = vmatprep.subr.bf16.mxu0 0
        %1654 = vmatpush1.bf16.xpose.msra.mxu0 0
        %1655 = vmatprep.subr.bf16.mxu0 0
        %1656 = vmatpush1.bf16.xpose.msra.mxu0 0
        %1657 = vmatprep.subr.bf16.mxu0 0
        %1658 = vmatpush1.bf16.xpose.msra.mxu0 0
        %1659 = vmatprep.subr.bf16.mxu0 0
        %1660 = vmatpush1.bf16.xpose.msra.mxu0 0
        %1661 = vmatprep.subr.bf16.mxu0 0
        %1662 = vmatpush1.bf16.xpose.msra.mxu0 0
        %1663 = vmatprep.subr.bf16.mxu0 0
        %1664 = vmatpush1.bf16.xpose.msra.mxu0 0
        %1665 = vmatprep.subr.bf16.mxu0 0
        %1666 = vmatpush1.bf16.xpose.msra.mxu0 0
        %1667 = vmatprep.subr.bf16.mxu0 0
        %1668 = vmatpush1.bf16.xpose.msra.mxu0 0
        %1669 = vmatprep.subr.bf16.mxu0 0
        %1670 = vmatpush1.bf16.xpose.msra.mxu0 0
        %1671 = vmatprep.subr.bf16.mxu0 0
        %1672 = vmatpush1.bf16.xpose.msra.mxu0 0
        %1673 = vmatprep.subr.bf16.mxu0 0
        %1674 = vmatpush1.bf16.xpose.msra.mxu0 0
        %1675 = vmatprep.subr.bf16.mxu0 0
        %1676 = vmatpush1.bf16.xpose.msra.mxu0 0
        %1677 = vmatprep.subr.bf16.mxu0 0
        %1678 = vmatpush1.bf16.xpose.msra.mxu0 0
        %1679 = vmatprep.subr.bf16.mxu0 0
        %1680 = vmatpush1.bf16.xpose.msra.mxu0 0
        %1681 = vmatprep.subr.bf16.mxu0 0
        %1682 = vmatpush1.bf16.xpose.msra.mxu0 0
        %1683 = vmatprep.mubr.bf16.mxu0 0
        %1684 = vmatmul.mubr.bf16.gmra.mrb[0].mxu0 %v1646
        %v1685 = vpop.f32.mrb[0].mxu0
        %v1686 = vadd.f32 0.0, %v1685
        %v1687 = vpop.f32.mrb[0].mxu0
        %v1688 = vpop.f32.mrb[0].mxu0
        %v1689 = vpop.f32.mrb[0].mxu0
        %1690 = vdwg.mxu0
        %vm1691 = vcmask 80896
        %v1692 = vsel %vm1691, %v1686, -inf
        %1693 = vmax.xlane.f32.xlu0 %v1692
        %v1694 = vpop.xlane.xlu0 %1693
        %v1695 = vsub.f32 %v1686, %v1694
        %v1696 = vmul.f32 %v1695, 1.442695
        %v1697 = vpow.pop %v1696
        %v1698 = vsel %vm1691, %v1697, 0.0
        %1699 = vadd.xlane.f32.xlu0 %v1698
        %v1700 = vpop.xlane.xlu0 %1699
        %v1701 = vrcp.pop %v1700
        %v1702 = vmul.f32 %v1697, %v1701
        %v1703 = vpack.c.bf16 %v1702, %v1702
        %1705 = vrot.lane.b32.xlu0 %v1644, 96
        %v1706 = vpop.permute.xlu0 %1705
        %v1708 = vsel %vm1691, %v1703, 0
        %vm1710 = vcmask 1044480
        %v1712 = vsel %vm1710, %v1706, 0
        %1714 = vmatprep.subr.bf16.mxu0 0
        %1715 = vmatpush1.bf16.msra.mxu0 %v1712
        %1716 = vmatprep.subr.bf16.mxu0 0
        %1717 = vmatpush1.bf16.msra.mxu0 0
        %1718 = vmatprep.subr.bf16.mxu0 0
        %1719 = vmatpush1.bf16.msra.mxu0 0
        %1720 = vmatprep.subr.bf16.mxu0 0
        %1721 = vmatpush1.bf16.msra.mxu0 0
        %1722 = vmatprep.subr.bf16.mxu0 0
        %1723 = vmatpush1.bf16.msra.mxu0 0
        %1724 = vmatprep.subr.bf16.mxu0 0
        %1725 = vmatpush1.bf16.msra.mxu0 0
        %1726 = vmatprep.subr.bf16.mxu0 0
        %1727 = vmatpush1.bf16.msra.mxu0 0
        %1728 = vmatprep.subr.bf16.mxu0 0
        %1729 = vmatpush1.bf16.msra.mxu0 0
        %1730 = vmatprep.subr.bf16.mxu0 0
        %1731 = vmatpush1.bf16.msra.mxu0 0
        %1732 = vmatprep.subr.bf16.mxu0 0
        %1733 = vmatpush1.bf16.msra.mxu0 0
        %1734 = vmatprep.subr.bf16.mxu0 0
        %1735 = vmatpush1.bf16.msra.mxu0 0
        %1736 = vmatprep.subr.bf16.mxu0 0
        %1737 = vmatpush1.bf16.msra.mxu0 0
        %1738 = vmatprep.subr.bf16.mxu0 0
        %1739 = vmatpush1.bf16.msra.mxu0 0
        %1740 = vmatprep.subr.bf16.mxu0 0
        %1741 = vmatpush1.bf16.msra.mxu0 0
        %1742 = vmatprep.subr.bf16.mxu0 0
        %1743 = vmatpush1.bf16.msra.mxu0 0
        %1744 = vmatprep.subr.bf16.mxu0 0
        %1745 = vmatpush1.bf16.msra.mxu0 0
        %1746 = vmatprep.mubr.bf16.mxu0 0
        %1747 = vmatmul.mubr.bf16.gmra.mrb[0].mxu0 %v1708
        %v1748 = vpop.f32.mrb[0].mxu0
        %v1749 = vadd.f32 0.0, %v1748
        %v1750 = vpop.f32.mrb[0].mxu0
        %v1751 = vpop.f32.mrb[0].mxu0
        %v1752 = vpop.f32.mrb[0].mxu0
        %1753 = vdwg.mxu0
        %1755 = vrot.lane.b32.xlu0 %v1643, 120
        %v1756 = vpop.permute.xlu0 %1755
        %1757 = vrot.lane.b32.xlu0 %v1644, 120
        %v1758 = vpop.permute.xlu0 %1757
        %v1760 = vsel %vm953, %v1756, 0
        %v1763 = vsel %vm953, %v1758, 0
        %1765 = vmatprep.subr.bf16.mxu0 0
        %1766 = vmatpush1.bf16.xpose.msra.mxu0 %v1763
        %1767 = vmatprep.subr.bf16.mxu0 0
        %1768 = vmatpush1.bf16.xpose.msra.mxu0 0
        %1769 = vmatprep.subr.bf16.mxu0 0
        %1770 = vmatpush1.bf16.xpose.msra.mxu0 0
        %1771 = vmatprep.subr.bf16.mxu0 0
        %1772 = vmatpush1.bf16.xpose.msra.mxu0 0
        %1773 = vmatprep.subr.bf16.mxu0 0
        %1774 = vmatpush1.bf16.xpose.msra.mxu0 0
        %1775 = vmatprep.subr.bf16.mxu0 0
        %1776 = vmatpush1.bf16.xpose.msra.mxu0 0
        %1777 = vmatprep.subr.bf16.mxu0 0
        %1778 = vmatpush1.bf16.xpose.msra.mxu0 0
        %1779 = vmatprep.subr.bf16.mxu0 0
        %1780 = vmatpush1.bf16.xpose.msra.mxu0 0
        %1781 = vmatprep.subr.bf16.mxu0 0
        %1782 = vmatpush1.bf16.xpose.msra.mxu0 0
        %1783 = vmatprep.subr.bf16.mxu0 0
        %1784 = vmatpush1.bf16.xpose.msra.mxu0 0
        %1785 = vmatprep.subr.bf16.mxu0 0
        %1786 = vmatpush1.bf16.xpose.msra.mxu0 0
        %1787 = vmatprep.subr.bf16.mxu0 0
        %1788 = vmatpush1.bf16.xpose.msra.mxu0 0
        %1789 = vmatprep.subr.bf16.mxu0 0
        %1790 = vmatpush1.bf16.xpose.msra.mxu0 0
        %1791 = vmatprep.subr.bf16.mxu0 0
        %1792 = vmatpush1.bf16.xpose.msra.mxu0 0
        %1793 = vmatprep.subr.bf16.mxu0 0
        %1794 = vmatpush1.bf16.xpose.msra.mxu0 0
        %1795 = vmatprep.subr.bf16.mxu0 0
        %1796 = vmatpush1.bf16.xpose.msra.mxu0 0
        %1797 = vmatprep.mubr.bf16.mxu0 0
        %1798 = vmatmul.mubr.bf16.gmra.mrb[0].mxu0 %v1760
        %v1799 = vpop.f32.mrb[0].mxu0
        %v1800 = vadd.f32 0.0, %v1799
        %v1801 = vpop.f32.mrb[0].mxu0
        %v1802 = vpop.f32.mrb[0].mxu0
        %v1803 = vpop.f32.mrb[0].mxu0
        %1804 = vdwg.mxu0
        %v1805 = vsel %vm1691, %v1800, -inf
        %1806 = vmax.xlane.f32.xlu0 %v1805
        %v1807 = vpop.xlane.xlu0 %1806
        %v1808 = vsub.f32 %v1800, %v1807
        %v1809 = vmul.f32 %v1808, 1.442695
        %v1810 = vpow.pop %v1809
        %v1811 = vsel %vm1691, %v1810, 0.0
        %1812 = vadd.xlane.f32.xlu0 %v1811
        %v1813 = vpop.xlane.xlu0 %1812
        %v1814 = vrcp.pop %v1813
        %v1815 = vmul.f32 %v1810, %v1814
        %v1816 = vpack.c.bf16 %v1815, %v1815
        %1817 = vrot.lane.b32.xlu0 %v1644, 88
        %v1818 = vpop.permute.xlu0 %1817
        %v1820 = vsel %vm1691, %v1816, 0
        %v1823 = vsel %vm1710, %v1818, 0
        %1825 = vmatprep.subr.bf16.mxu0 0
        %1826 = vmatpush1.bf16.msra.mxu0 %v1823
        %1827 = vmatprep.subr.bf16.mxu0 0
        %1828 = vmatpush1.bf16.msra.mxu0 0
        %1829 = vmatprep.subr.bf16.mxu0 0
        %1830 = vmatpush1.bf16.msra.mxu0 0
        %1831 = vmatprep.subr.bf16.mxu0 0
        %1832 = vmatpush1.bf16.msra.mxu0 0
        %1833 = vmatprep.subr.bf16.mxu0 0
        %1834 = vmatpush1.bf16.msra.mxu0 0
        %1835 = vmatprep.subr.bf16.mxu0 0
        %1836 = vmatpush1.bf16.msra.mxu0 0
        %1837 = vmatprep.subr.bf16.mxu0 0
        %1838 = vmatpush1.bf16.msra.mxu0 0
        %1839 = vmatprep.subr.bf16.mxu0 0
        %1840 = vmatpush1.bf16.msra.mxu0 0
        %1841 = vmatprep.subr.bf16.mxu0 0
        %1842 = vmatpush1.bf16.msra.mxu0 0
        %1843 = vmatprep.subr.bf16.mxu0 0
        %1844 = vmatpush1.bf16.msra.mxu0 0
        %1845 = vmatprep.subr.bf16.mxu0 0
        %1846 = vmatpush1.bf16.msra.mxu0 0
        %1847 = vmatprep.subr.bf16.mxu0 0
        %1848 = vmatpush1.bf16.msra.mxu0 0
        %1849 = vmatprep.subr.bf16.mxu0 0
        %1850 = vmatpush1.bf16.msra.mxu0 0
        %1851 = vmatprep.subr.bf16.mxu0 0
        %1852 = vmatpush1.bf16.msra.mxu0 0
        %1853 = vmatprep.subr.bf16.mxu0 0
        %1854 = vmatpush1.bf16.msra.mxu0 0
        %1855 = vmatprep.subr.bf16.mxu0 0
        %1856 = vmatpush1.bf16.msra.mxu0 0
        %1857 = vmatprep.mubr.bf16.mxu0 0
        %1858 = vmatmul.mubr.bf16.gmra.mrb[0].mxu0 %v1820
        %v1859 = vpop.f32.mrb[0].mxu0
        %v1860 = vadd.f32 0.0, %v1859
        %v1861 = vpop.f32.mrb[0].mxu0
        %v1862 = vpop.f32.mrb[0].mxu0
        %v1863 = vpop.f32.mrb[0].mxu0
        %1864 = vdwg.mxu0
        %1865 = vrot.lane.b32.xlu0 %v1643, 112
        %v1866 = vpop.permute.xlu0 %1865
        %1867 = vrot.lane.b32.xlu0 %v1644, 112
        %v1868 = vpop.permute.xlu0 %1867
        %v1870 = vsel %vm953, %v1866, 0
        %v1873 = vsel %vm953, %v1868, 0
        %1875 = vmatprep.subr.bf16.mxu0 0
        %1876 = vmatpush1.bf16.xpose.msra.mxu0 %v1873
        %1877 = vmatprep.subr.bf16.mxu0 0
        %1878 = vmatpush1.bf16.xpose.msra.mxu0 0
        %1879 = vmatprep.subr.bf16.mxu0 0
        %1880 = vmatpush1.bf16.xpose.msra.mxu0 0
        %1881 = vmatprep.subr.bf16.mxu0 0
        %1882 = vmatpush1.bf16.xpose.msra.mxu0 0
        %1883 = vmatprep.subr.bf16.mxu0 0
        %1884 = vmatpush1.bf16.xpose.msra.mxu0 0
        %1885 = vmatprep.subr.bf16.mxu0 0
        %1886 = vmatpush1.bf16.xpose.msra.mxu0 0
        %1887 = vmatprep.subr.bf16.mxu0 0
        %1888 = vmatpush1.bf16.xpose.msra.mxu0 0
        %1889 = vmatprep.subr.bf16.mxu0 0
        %1890 = vmatpush1.bf16.xpose.msra.mxu0 0
        %1891 = vmatprep.subr.bf16.mxu0 0
        %1892 = vmatpush1.bf16.xpose.msra.mxu0 0
        %1893 = vmatprep.subr.bf16.mxu0 0
        %1894 = vmatpush1.bf16.xpose.msra.mxu0 0
        %1895 = vmatprep.subr.bf16.mxu0 0
        %1896 = vmatpush1.bf16.xpose.msra.mxu0 0
        %1897 = vmatprep.subr.bf16.mxu0 0
        %1898 = vmatpush1.bf16.xpose.msra.mxu0 0
        %1899 = vmatprep.subr.bf16.mxu0 0
        %1900 = vmatpush1.bf16.xpose.msra.mxu0 0
        %1901 = vmatprep.subr.bf16.mxu0 0
        %1902 = vmatpush1.bf16.xpose.msra.mxu0 0
        %1903 = vmatprep.subr.bf16.mxu0 0
        %1904 = vmatpush1.bf16.xpose.msra.mxu0 0
        %1905 = vmatprep.subr.bf16.mxu0 0
        %1906 = vmatpush1.bf16.xpose.msra.mxu0 0
        %1907 = vmatprep.mubr.bf16.mxu0 0
        %1908 = vmatmul.mubr.bf16.gmra.mrb[0].mxu0 %v1870
        %v1909 = vpop.f32.mrb[0].mxu0
        %v1910 = vadd.f32 0.0, %v1909
        %v1911 = vpop.f32.mrb[0].mxu0
        %v1912 = vpop.f32.mrb[0].mxu0
        %v1913 = vpop.f32.mrb[0].mxu0
        %1914 = vdwg.mxu0
        %v1915 = vsel %vm1691, %v1910, -inf
        %1916 = vmax.xlane.f32.xlu0 %v1915
        %v1917 = vpop.xlane.xlu0 %1916
        %v1918 = vsub.f32 %v1910, %v1917
        %v1919 = vmul.f32 %v1918, 1.442695
        %v1920 = vpow.pop %v1919
        %v1921 = vsel %vm1691, %v1920, 0.0
        %1922 = vadd.xlane.f32.xlu0 %v1921
        %v1923 = vpop.xlane.xlu0 %1922
        %v1924 = vrcp.pop %v1923
        %v1925 = vmul.f32 %v1920, %v1924
        %v1926 = vpack.c.bf16 %v1925, %v1925
        %1927 = vrot.lane.b32.xlu0 %v1644, 80
        %v1928 = vpop.permute.xlu0 %1927
        %v1930 = vsel %vm1691, %v1926, 0
        %v1933 = vsel %vm1710, %v1928, 0
        %1935 = vmatprep.subr.bf16.mxu0 0
        %1936 = vmatpush1.bf16.msra.mxu0 %v1933
        %1937 = vmatprep.subr.bf16.mxu0 0
        %1938 = vmatpush1.bf16.msra.mxu0 0
        %1939 = vmatprep.subr.bf16.mxu0 0
        %1940 = vmatpush1.bf16.msra.mxu0 0
        %1941 = vmatprep.subr.bf16.mxu0 0
        %1942 = vmatpush1.bf16.msra.mxu0 0
        %1943 = vmatprep.subr.bf16.mxu0 0
        %1944 = vmatpush1.bf16.msra.mxu0 0
        %1945 = vmatprep.subr.bf16.mxu0 0
        %1946 = vmatpush1.bf16.msra.mxu0 0
        %1947 = vmatprep.subr.bf16.mxu0 0
        %1948 = vmatpush1.bf16.msra.mxu0 0
        %1949 = vmatprep.subr.bf16.mxu0 0
        %1950 = vmatpush1.bf16.msra.mxu0 0
        %1951 = vmatprep.subr.bf16.mxu0 0
        %1952 = vmatpush1.bf16.msra.mxu0 0
        %1953 = vmatprep.subr.bf16.mxu0 0
        %1954 = vmatpush1.bf16.msra.mxu0 0
        %1955 = vmatprep.subr.bf16.mxu0 0
        %1956 = vmatpush1.bf16.msra.mxu0 0
        %1957 = vmatprep.subr.bf16.mxu0 0
        %1958 = vmatpush1.bf16.msra.mxu0 0
        %1959 = vmatprep.subr.bf16.mxu0 0
        %1960 = vmatpush1.bf16.msra.mxu0 0
        %1961 = vmatprep.subr.bf16.mxu0 0
        %1962 = vmatpush1.bf16.msra.mxu0 0
        %1963 = vmatprep.subr.bf16.mxu0 0
        %1964 = vmatpush1.bf16.msra.mxu0 0
        %1965 = vmatprep.subr.bf16.mxu0 0
        %1966 = vmatpush1.bf16.msra.mxu0 0
        %1967 = vmatprep.mubr.bf16.mxu0 0
        %1968 = vmatmul.mubr.bf16.gmra.mrb[0].mxu0 %v1930
        %v1969 = vpop.f32.mrb[0].mxu0
        %v1970 = vadd.f32 0.0, %v1969
        %v1971 = vpop.f32.mrb[0].mxu0
        %v1972 = vpop.f32.mrb[0].mxu0
        %v1973 = vpop.f32.mrb[0].mxu0
        %1974 = vdwg.mxu0
        %1975 = vrot.lane.b32.xlu0 %v1643, 104
        %v1976 = vpop.permute.xlu0 %1975
        %1977 = vrot.lane.b32.xlu0 %v1644, 104
        %v1978 = vpop.permute.xlu0 %1977
        %v1980 = vsel %vm953, %v1976, 0
        %v1983 = vsel %vm953, %v1978, 0
        %1985 = vmatprep.subr.bf16.mxu0 0
        %1986 = vmatpush1.bf16.xpose.msra.mxu0 %v1983
        %1987 = vmatprep.subr.bf16.mxu0 0
        %1988 = vmatpush1.bf16.xpose.msra.mxu0 0
        %1989 = vmatprep.subr.bf16.mxu0 0
        %1990 = vmatpush1.bf16.xpose.msra.mxu0 0
        %1991 = vmatprep.subr.bf16.mxu0 0
        %1992 = vmatpush1.bf16.xpose.msra.mxu0 0
        %1993 = vmatprep.subr.bf16.mxu0 0
        %1994 = vmatpush1.bf16.xpose.msra.mxu0 0
        %1995 = vmatprep.subr.bf16.mxu0 0
        %1996 = vmatpush1.bf16.xpose.msra.mxu0 0
        %1997 = vmatprep.subr.bf16.mxu0 0
        %1998 = vmatpush1.bf16.xpose.msra.mxu0 0
        %1999 = vmatprep.subr.bf16.mxu0 0
        %2000 = vmatpush1.bf16.xpose.msra.mxu0 0
        %2001 = vmatprep.subr.bf16.mxu0 0
        %2002 = vmatpush1.bf16.xpose.msra.mxu0 0
        %2003 = vmatprep.subr.bf16.mxu0 0
        %2004 = vmatpush1.bf16.xpose.msra.mxu0 0
        %2005 = vmatprep.subr.bf16.mxu0 0
        %2006 = vmatpush1.bf16.xpose.msra.mxu0 0
        %2007 = vmatprep.subr.bf16.mxu0 0
        %2008 = vmatpush1.bf16.xpose.msra.mxu0 0
        %2009 = vmatprep.subr.bf16.mxu0 0
        %2010 = vmatpush1.bf16.xpose.msra.mxu0 0
        %2011 = vmatprep.subr.bf16.mxu0 0
        %2012 = vmatpush1.bf16.xpose.msra.mxu0 0
        %2013 = vmatprep.subr.bf16.mxu0 0
        %2014 = vmatpush1.bf16.xpose.msra.mxu0 0
        %2015 = vmatprep.subr.bf16.mxu0 0
        %2016 = vmatpush1.bf16.xpose.msra.mxu0 0
        %2017 = vmatprep.mubr.bf16.mxu0 0
        %2018 = vmatmul.mubr.bf16.gmra.mrb[0].mxu0 %v1980
        %v2019 = vpop.f32.mrb[0].mxu0
        %v2020 = vadd.f32 0.0, %v2019
        %v2021 = vpop.f32.mrb[0].mxu0
        %v2022 = vpop.f32.mrb[0].mxu0
        %v2023 = vpop.f32.mrb[0].mxu0
        %2024 = vdwg.mxu0
        %v2025 = vsel %vm1691, %v2020, -inf
        %2026 = vmax.xlane.f32.xlu0 %v2025
        %v2027 = vpop.xlane.xlu0 %2026
        %v2028 = vsub.f32 %v2020, %v2027
        %v2029 = vmul.f32 %v2028, 1.442695
        %v2030 = vpow.pop %v2029
        %v2031 = vsel %vm1691, %v2030, 0.0
        %2032 = vadd.xlane.f32.xlu0 %v2031
        %v2033 = vpop.xlane.xlu0 %2032
        %v2034 = vrcp.pop %v2033
        %v2035 = vmul.f32 %v2030, %v2034
        %v2036 = vpack.c.bf16 %v2035, %v2035
        %2037 = vrot.lane.b32.xlu0 %v1644, 72
        %v2038 = vpop.permute.xlu0 %2037
        %v2040 = vsel %vm1691, %v2036, 0
        %v2043 = vsel %vm1710, %v2038, 0
        %2045 = vmatprep.subr.bf16.mxu0 0
        %2046 = vmatpush1.bf16.msra.mxu0 %v2043
        %2047 = vmatprep.subr.bf16.mxu0 0
        %2048 = vmatpush1.bf16.msra.mxu0 0
        %2049 = vmatprep.subr.bf16.mxu0 0
        %2050 = vmatpush1.bf16.msra.mxu0 0
        %2051 = vmatprep.subr.bf16.mxu0 0
        %2052 = vmatpush1.bf16.msra.mxu0 0
        %2053 = vmatprep.subr.bf16.mxu0 0
        %2054 = vmatpush1.bf16.msra.mxu0 0
        %2055 = vmatprep.subr.bf16.mxu0 0
        %2056 = vmatpush1.bf16.msra.mxu0 0
        %2057 = vmatprep.subr.bf16.mxu0 0
        %2058 = vmatpush1.bf16.msra.mxu0 0
        %2059 = vmatprep.subr.bf16.mxu0 0
        %2060 = vmatpush1.bf16.msra.mxu0 0
        %2061 = vmatprep.subr.bf16.mxu0 0
        %2062 = vmatpush1.bf16.msra.mxu0 0
        %2063 = vmatprep.subr.bf16.mxu0 0
        %2064 = vmatpush1.bf16.msra.mxu0 0
        %2065 = vmatprep.subr.bf16.mxu0 0
        %2066 = vmatpush1.bf16.msra.mxu0 0
        %2067 = vmatprep.subr.bf16.mxu0 0
        %2068 = vmatpush1.bf16.msra.mxu0 0
        %2069 = vmatprep.subr.bf16.mxu0 0
        %2070 = vmatpush1.bf16.msra.mxu0 0
        %2071 = vmatprep.subr.bf16.mxu0 0
        %2072 = vmatpush1.bf16.msra.mxu0 0
        %2073 = vmatprep.subr.bf16.mxu0 0
        %2074 = vmatpush1.bf16.msra.mxu0 0
        %2075 = vmatprep.subr.bf16.mxu0 0
        %2076 = vmatpush1.bf16.msra.mxu0 0
        %2077 = vmatprep.mubr.bf16.mxu0 0
        %2078 = vmatmul.mubr.bf16.gmra.mrb[0].mxu0 %v2040
        %v2079 = vpop.f32.mrb[0].mxu0
        %v2080 = vadd.f32 0.0, %v2079
        %v2081 = vpop.f32.mrb[0].mxu0
        %v2082 = vpop.f32.mrb[0].mxu0
        %v2083 = vpop.f32.mrb[0].mxu0
        %2084 = vdwg.mxu0
        %2086 = vrot.lane.b32.xlu0 %v1860, 8
        %v2087 = vpop.permute.xlu0 %2086
        %2090 = vrot.lane.b32.xlu0 %v1970, 16
        %v2091 = vpop.permute.xlu0 %2090
        %2094 = vrot.lane.b32.xlu0 %v2080, 24
        %v2095 = vpop.permute.xlu0 %2094
        %v2097 = vsel %vm953, %v1749, %v2087
        %v2098 = vsel %vm1406, %v2097, %v2091
        %v2099 = vsel %vm1408, %v2098, %v2095
        %v2100 = vpack.c.bf16 %v2099, %v2099
        %v2101 = vld [vmem:[%s14] sm:$0xf]
        %v2102 = vld [vmem:[%s14 + $0x4] sm:$0xf]
        %v2103 = vld [vmem:[%s14 + $0x8] sm:$0xf]
        %v2104 = vld [vmem:[%s14 + $0xc] sm:$0xf]
        %v2105 = vld [vmem:[%s15] sm:$0x1]
        %v2107 = vlaneseq
        %v2108 = vshrl.u32 %v2107, 7
        %v2109 = vsub.s32 0, %v2108
        %v2110 = vrot.slane %v2105, %v2109
        %v2116 = vunpack.c.l.b16 %v2101
        %v2117 = vunpack.c.l.b16 %v2102
        %v2118 = vunpack.c.l.b16 %v2103
        %v2119 = vunpack.c.l.b16 %v2104
        %v2120 = vpack.c.b16 %v2117, %v2116
        %v2121 = vpack.c.b16 %v2119, %v2118
        %v2125 = vsel %vm844, %v2100, 0
        %2127 = vmatprep.subr.bf16.mxu0 0
        %2128 = vmatpush1.bf16.msra.mxu0 %v2120
        %2129 = vmatprep.subr.bf16.mxu0 0
        %2130 = vmatpush1.bf16.msra.mxu0 %v2121
        %2131 = vmatprep.subr.bf16.mxu0 0
        %2132 = vmatpush1.bf16.msra.mxu0 0
        %2133 = vmatprep.subr.bf16.mxu0 0
        %2134 = vmatpush1.bf16.msra.mxu0 0
        %2135 = vmatprep.subr.bf16.mxu0 0
        %2136 = vmatpush1.bf16.msra.mxu0 0
        %2137 = vmatprep.subr.bf16.mxu0 0
        %2138 = vmatpush1.bf16.msra.mxu0 0
        %2139 = vmatprep.subr.bf16.mxu0 0
        %2140 = vmatpush1.bf16.msra.mxu0 0
        %2141 = vmatprep.subr.bf16.mxu0 0
        %2142 = vmatpush1.bf16.msra.mxu0 0
        %2143 = vmatprep.subr.bf16.mxu0 0
        %2144 = vmatpush1.bf16.msra.mxu0 0
        %2145 = vmatprep.subr.bf16.mxu0 0
        %2146 = vmatpush1.bf16.msra.mxu0 0
        %2147 = vmatprep.subr.bf16.mxu0 0
        %2148 = vmatpush1.bf16.msra.mxu0 0
        %2149 = vmatprep.subr.bf16.mxu0 0
        %2150 = vmatpush1.bf16.msra.mxu0 0
        %2151 = vmatprep.subr.bf16.mxu0 0
        %2152 = vmatpush1.bf16.msra.mxu0 0
        %2153 = vmatprep.subr.bf16.mxu0 0
        %2154 = vmatpush1.bf16.msra.mxu0 0
        %2155 = vmatprep.subr.bf16.mxu0 0
        %2156 = vmatpush1.bf16.msra.mxu0 0
        %2157 = vmatprep.subr.bf16.mxu0 0
        %2158 = vmatpush1.bf16.msra.mxu0 0
        %2159 = vmatprep.mubr.bf16.mxu0 0
        %2160 = vmatmul.mubr.bf16.gmra.mrb[0].mxu0 %v2125
        %v2161 = vpop.f32.mrb[0].mxu0
        %v2162 = vadd.f32 %v2110, %v2161
        %v2163 = vpop.f32.mrb[0].mxu0
        %v2164 = vpop.f32.mrb[0].mxu0
        %v2165 = vpop.f32.mrb[0].mxu0
        %2166 = vdwg.mxu0
        %v2167 = vadd.f32 %v2162, %v1507
        %v2168 = vsel %vm844, %v2167, 0.0
        %2169 = vadd.xlane.f32.xlu0 %v2168
        %v2170 = vpop.xlane.xlu0 %2169
        %v2171 = vmul.f32 %v2170, %v1481
        %v2172 = vsub.f32 %v2167, %v2171
        %v2173 = vmul.f32 %v2172, %v2172
        %v2174 = vsel %vm844, %v2173, 0.0
        %2175 = vadd.xlane.f32.xlu0 %v2174
        %v2176 = vpop.xlane.xlu0 %2175
        %v2177 = vmul.f32 %v2176, %v1481
        %v2178 = vadd.f32 %v2177, 1e-05
        %v2179 = vrsqrt.pop %v2178
        %v2180 = vmul.f32 %v2172, %v2179
        %v2181 = vld [vmem:[%s16] sm:$0x1]
        %v2183 = vlaneseq
        %v2184 = vshrl.u32 %v2183, 7
        %v2185 = vsub.s32 0, %v2184
        %v2186 = vrot.slane %v2181, %v2185
        %v2188 = vmul.f32 %v2180, %v2186
        %v2189 = vld [vmem:[%s17] sm:$0x1]
        %v2191 = vlaneseq
        %v2192 = vshrl.u32 %v2191, 7
        %v2193 = vsub.s32 0, %v2192
        %v2194 = vrot.slane %v2189, %v2193
        %v2196 = vadd.f32 %v2188, %v2194
        %v2197 = vpack.c.bf16 %v2196, %v2196
        %v2198 = vld [vmem:[%s18] sm:$0xf]
        %v2199 = vld [vmem:[%s18 + $0x4] sm:$0xf]
        %v2200 = vld [vmem:[%s18 + $0x8] sm:$0xf]
        %v2201 = vld [vmem:[%s18 + $0xc] sm:$0xf]
        %v2202 = vld [vmem:[%s19] sm:$0x1]
        %v2204 = vlaneseq
        %v2205 = vshrl.u32 %v2204, 7
        %v2206 = vsub.s32 0, %v2205
        %v2207 = vrot.slane %v2202, %v2206
        %v2213 = vunpack.c.l.b16 %v2198
        %v2214 = vunpack.c.l.b16 %v2199
        %v2215 = vunpack.c.l.b16 %v2200
        %v2216 = vunpack.c.l.b16 %v2201
        %v2217 = vpack.c.b16 %v2214, %v2213
        %v2218 = vpack.c.b16 %v2216, %v2215
        %v2222 = vsel %vm844, %v2197, 0
        %2224 = vmatprep.subr.bf16.mxu0 0
        %2225 = vmatpush1.bf16.msra.mxu0 %v2217
        %2226 = vmatprep.subr.bf16.mxu0 0
        %2227 = vmatpush1.bf16.msra.mxu0 %v2218
        %2228 = vmatprep.subr.bf16.mxu0 0
        %2229 = vmatpush1.bf16.msra.mxu0 0
        %2230 = vmatprep.subr.bf16.mxu0 0
        %2231 = vmatpush1.bf16.msra.mxu0 0
        %2232 = vmatprep.subr.bf16.mxu0 0
        %2233 = vmatpush1.bf16.msra.mxu0 0
        %2234 = vmatprep.subr.bf16.mxu0 0
        %2235 = vmatpush1.bf16.msra.mxu0 0
        %2236 = vmatprep.subr.bf16.mxu0 0
        %2237 = vmatpush1.bf16.msra.mxu0 0
        %2238 = vmatprep.subr.bf16.mxu0 0
        %2239 = vmatpush1.bf16.msra.mxu0 0
        %2240 = vmatprep.subr.bf16.mxu0 0
        %2241 = vmatpush1.bf16.msra.mxu0 0
        %2242 = vmatprep.subr.bf16.mxu0 0
        %2243 = vmatpush1.bf16.msra.mxu0 0
        %2244 = vmatprep.subr.bf16.mxu0 0
        %2245 = vmatpush1.bf16.msra.mxu0 0
        %2246 = vmatprep.subr.bf16.mxu0 0
        %2247 = vmatpush1.bf16.msra.mxu0 0
        %2248 = vmatprep.subr.bf16.mxu0 0
        %2249 = vmatpush1.bf16.msra.mxu0 0
        %2250 = vmatprep.subr.bf16.mxu0 0
        %2251 = vmatpush1.bf16.msra.mxu0 0
        %2252 = vmatprep.subr.bf16.mxu0 0
        %2253 = vmatpush1.bf16.msra.mxu0 0
        %2254 = vmatprep.subr.bf16.mxu0 0
        %2255 = vmatpush1.bf16.msra.mxu0 0
        %2256 = vmatprep.mubr.bf16.mxu0 0
        %2257 = vmatmul.mubr.bf16.gmra.mrb[0].mxu0 %v2222
        %v2258 = vpop.f32.mrb[0].mxu0
        %v2259 = vadd.f32 %v2207, %v2258
        %v2260 = vpop.f32.mrb[0].mxu0
        %v2261 = vpop.f32.mrb[0].mxu0
        %v2262 = vpop.f32.mrb[0].mxu0
        %2263 = vdwg.mxu0
        %v2264 = vmax.f32 %v2259, 0.0
        %v2265 = vpack.c.bf16 %v2264, %v2264
        %v2266 = vld [vmem:[%s20] sm:$0xf]
        %v2267 = vld [vmem:[%s20 + $0x4] sm:$0xf]
        %v2268 = vld [vmem:[%s20 + $0x8] sm:$0xf]
        %v2269 = vld [vmem:[%s20 + $0xc] sm:$0xf]
        %v2270 = vld [vmem:[%s20 + $0x10] sm:$0xf]
        %v2271 = vld [vmem:[%s20 + $0x14] sm:$0xf]
        %v2272 = vld [vmem:[%s20 + $0x18] sm:$0xf]
        %v2273 = vld [vmem:[%s20 + $0x1c] sm:$0xf]
        %v2274 = vld [vmem:[%s21] sm:$0x1]
        %v2276 = vlaneseq
        %v2277 = vshrl.u32 %v2276, 7
        %v2278 = vsub.s32 0, %v2277
        %v2279 = vrot.slane %v2274, %v2278
        %v2289 = vunpack.c.l.b16 %v2266
        %v2290 = vunpack.c.l.b16 %v2267
        %v2291 = vunpack.c.l.b16 %v2268
        %v2292 = vunpack.c.l.b16 %v2269
        %v2293 = vunpack.c.l.b16 %v2270
        %v2294 = vunpack.c.l.b16 %v2271
        %v2295 = vunpack.c.l.b16 %v2272
        %v2296 = vunpack.c.l.b16 %v2273
        %v2297 = vpack.c.b16 %v2290, %v2289
        %v2298 = vpack.c.b16 %v2292, %v2291
        %v2299 = vpack.c.b16 %v2294, %v2293
        %v2300 = vpack.c.b16 %v2296, %v2295
        %vm2305 = vcmask 523264
        %v2307 = vsel %vm2305, %v2265, 0
        %2309 = vmatprep.subr.bf16.mxu0 0
        %2310 = vmatpush1.bf16.msra.mxu0 %v2297
        %2311 = vmatprep.subr.bf16.mxu0 0
        %2312 = vmatpush1.bf16.msra.mxu0 %v2298
        %2313 = vmatprep.subr.bf16.mxu0 0
        %2314 = vmatpush1.bf16.msra.mxu0 %v2299
        %2315 = vmatprep.subr.bf16.mxu0 0
        %2316 = vmatpush1.bf16.msra.mxu0 %v2300
        %2317 = vmatprep.subr.bf16.mxu0 0
        %2318 = vmatpush1.bf16.msra.mxu0 0
        %2319 = vmatprep.subr.bf16.mxu0 0
        %2320 = vmatpush1.bf16.msra.mxu0 0
        %2321 = vmatprep.subr.bf16.mxu0 0
        %2322 = vmatpush1.bf16.msra.mxu0 0
        %2323 = vmatprep.subr.bf16.mxu0 0
        %2324 = vmatpush1.bf16.msra.mxu0 0
        %2325 = vmatprep.subr.bf16.mxu0 0
        %2326 = vmatpush1.bf16.msra.mxu0 0
        %2327 = vmatprep.subr.bf16.mxu0 0
        %2328 = vmatpush1.bf16.msra.mxu0 0
        %2329 = vmatprep.subr.bf16.mxu0 0
        %2330 = vmatpush1.bf16.msra.mxu0 0
        %2331 = vmatprep.subr.bf16.mxu0 0
        %2332 = vmatpush1.bf16.msra.mxu0 0
        %2333 = vmatprep.subr.bf16.mxu0 0
        %2334 = vmatpush1.bf16.msra.mxu0 0
        %2335 = vmatprep.subr.bf16.mxu0 0
        %2336 = vmatpush1.bf16.msra.mxu0 0
        %2337 = vmatprep.subr.bf16.mxu0 0
        %2338 = vmatpush1.bf16.msra.mxu0 0
        %2339 = vmatprep.subr.bf16.mxu0 0
        %2340 = vmatpush1.bf16.msra.mxu0 0
        %2341 = vmatprep.mubr.bf16.mxu0 0
        %2342 = vmatmul.mubr.bf16.gmra.mrb[0].mxu0 %v2307
        %v2343 = vpop.f32.mrb[0].mxu0
        %v2344 = vadd.f32 %v2279, %v2343
        %v2345 = vpop.f32.mrb[0].mxu0
        %v2346 = vpop.f32.mrb[0].mxu0
        %v2347 = vpop.f32.mrb[0].mxu0
        %2348 = vdwg.mxu0
        %v2349 = vadd.f32 %v2344, %v2196
        %v2350 = vsel %vm844, %v2349, 0.0
        %2351 = vadd.xlane.f32.xlu0 %v2350
        %v2352 = vpop.xlane.xlu0 %2351
        %v2353 = vmul.f32 %v2352, %v1481
        %v2354 = vsub.f32 %v2349, %v2353
        %v2355 = vmul.f32 %v2354, %v2354
        %v2356 = vsel %vm844, %v2355, 0.0
        %2357 = vadd.xlane.f32.xlu0 %v2356
        %v2358 = vpop.xlane.xlu0 %2357
        %v2359 = vmul.f32 %v2358, %v1481
        %v2360 = vadd.f32 %v2359, 1e-05
        %v2361 = vrsqrt.pop %v2360
        %v2362 = vmul.f32 %v2354, %v2361
        %v2363 = vld [vmem:[%s22] sm:$0x1]
        %v2365 = vlaneseq
        %v2366 = vshrl.u32 %v2365, 7
        %v2367 = vsub.s32 0, %v2366
        %v2368 = vrot.slane %v2363, %v2367
        %v2370 = vmul.f32 %v2362, %v2368
        %v2371 = vld [vmem:[%s23] sm:$0x1]
        %v2373 = vlaneseq
        %v2374 = vshrl.u32 %v2373, 7
        %v2375 = vsub.s32 0, %v2374
        %v2376 = vrot.slane %v2371, %v2375
        %v2378 = vadd.f32 %v2370, %v2376
        %2379 = vst.msk [vmem:[%s806] sm:$0xff] %vm844, %v2378
        %s2380 = sand.u32 %s563, 1
        %s2381 = scalar_lea.sflag [#allocation4], %s2380
        %s2382 = sand.u32 %s563, 1
        %s2383 = smul.addr %s2382, 8
        %s2384 = scalar_lea.vmem [#allocation11], %s2383
        // Predicated region
        $region137: #{tpu_custom_call.1} parent=115 // pred_check
          %p2385 = pneg %p573
        $region138: #{tpu_custom_call.1} parent=115 // pred_check_branch
          %2387 = sbr.rel (%p2385) target = $region140
        $region139: #{tpu_custom_call.1} parent=115 // pred_region
          %s2389 = ssub.s32 128, 128
          %2390 = vsyncadd %s2381, %s2389
          %s2391 = smul.addr %s41, 128
          %s2392 = scalar_lea.hbm %s24, %s2391
          %s2394 = sshll.u32 %s2384, 4
          %s2395 = int_to_ptr.vmem [resolvable:$true] %s2394
          %2397 = dma.vmem_to_hbm [thread:$0]  %s2395, 128, %s2392, %s2381
        $region140: #{tpu_custom_call.1} parent=115 // pred_fallthru
          _
      $region116: #{tpu_custom_call.1} parent=5 // pred_fallthru
        _
      %p2398 = scmp.le.s32.totalorder 2, %s36
      // Predicated region
      $region141: #{tpu_custom_call.1} parent=5 // pred_check
        %p2399 = pneg %p2398
      $region142: #{tpu_custom_call.1} parent=5 // pred_check_branch
        %2401 = sbr.rel (%p2399) target = $region144
      $region143: #{tpu_custom_call.1} parent=5 // pred_region
        %s2402 = ssub.s32 %s36, 2
        // Predicated region
        $region145: #{tpu_custom_call.1} parent=143 // pred_check
          %p2403 = pneg %p579
        $region146: #{tpu_custom_call.1} parent=143 // pred_check_branch
          %2405 = sbr.rel (%p2403) target = $region148
        $region147: #{tpu_custom_call.1} parent=143 // pred_region
          %s2406 = sand.u32 %s564, 1
          %s2407 = scalar_lea.sflag [#allocation4], %s2406
          %s2408 = sand.u32 %s564, 1
          %s2409 = smul.addr %s2408, 8
          %s2410 = scalar_lea.vmem [#allocation11], %s2409
          %2411 = dma.done %s2407, 128
        $region148: #{tpu_custom_call.1} parent=143 // pred_fallthru
          _
      $region144: #{tpu_custom_call.1} parent=5 // pred_fallthru
        _
    $region6: #{tpu_custom_call.1} parent=1 // loop_footer
      %s40 = sadd.s32 1, %s36
    $region7: #{tpu_custom_call.1} parent=1 // loop_footer_branch
      %35 = sbr.rel target = $region3
    $region8: #{tpu_custom_call.1} parent=1 // loop_exit
      _
    %2412 = vsyncpa [#allocation3], 1
    %s2413 = scalar_lea.sflag [#allocation3], 1
    %2414 = vsyncpa %s2413, 1
    %2415 = vsyncpa [#allocation6], 1
    %2416 = vsyncpa [#allocation9], 1
    %2417 = vsyncpa [#allocation4], 1
    %s2418 = scalar_lea.sflag [#allocation4], 1
    %2419 = vsyncpa %s2418, 1

</llo_original>
